<compile_context>
chip_gen: v6e
topology: v6e:2x2x1
jax: 0.10.0
libtpu: 0.0.40
codegen_flags: <defaults>
</compile_context>

<pallas_src>
import functools

import jax
import jax.numpy as jnp
from jax.experimental import pallas as pl
from jax.experimental.pallas import tpu as pltpu

_ROW_ALIGN = 8      # f32 sublane granularity
_LANES = 128        # lane width


def _round_up(x, m):
    return (x + m - 1) // m * m


# ---------------------------------------------------------------------------
# Fused kernel: backbone -> encoder linear -> embedding -> decoder head.
# Single grid step; everything resident in VMEM.
# ---------------------------------------------------------------------------
def _fused_captioning_kernel(x_ref, cap_ref, w_bb_ref, b_bb_ref, w_enc_ref,
                             b_enc_ref, embed_ref, w1_ref, b1_ref, w2_ref,
                             b2_ref, o_ref, *, bt, vocab):
    # Backbone stand-in: x @ w_bb + b_bb, ReLU.  x arrives pre-cast to bf16.
    feats = jnp.dot(x_ref[...], w_bb_ref[...],
                    preferred_element_type=jnp.float32)
    feats = jnp.maximum(feats + b_bb_ref[...], 0.0)

    # EncoderCNN.linear.
    features = jnp.dot(feats.astype(jnp.bfloat16), w_enc_ref[...],
                       preferred_element_type=jnp.float32) + b_enc_ref[...]

    # DecoderRNN.embed as a one-hot matmul (tiny vocab -> MXU friendly; keeps
    # the lookup fused instead of an HBM gather + concat between kernels).
    cap = cap_ref[...]                                           # [BT, 1]
    iota_v = jax.lax.broadcasted_iota(jnp.int32, (bt, vocab), 1)
    onehot = (cap == iota_v).astype(jnp.bfloat16)                # [BT, V]
    emb = jnp.dot(onehot, embed_ref[...],
                  preferred_element_type=jnp.float32)            # [BT, E]

    # torch.cat((features.unsqueeze(1), embeddings), 1) flattened over (B, T):
    # row layout is [features rows (t=0) ; embedding rows (t=1..T)].
    seq = jnp.concatenate([features, emb], axis=0)               # [B_pad+BT, E]

    # DecoderRNN.linear -> linear2 (no nonlinearity, per the module).
    h = jnp.dot(seq.astype(jnp.bfloat16), w1_ref[...],
                preferred_element_type=jnp.float32) + b1_ref[...]
    out = jnp.dot(h.astype(jnp.bfloat16), w2_ref[...],
                  preferred_element_type=jnp.float32) + b2_ref[...]
    o_ref[...] = out.astype(o_ref.dtype)                         # lane-dense


# ---------------------------------------------------------------------------
# Wrapper
# ---------------------------------------------------------------------------
@jax.jit
def image_captioning_forward(images, captions, kp):
    """images: [B, C, H, W] f32 (NCHW), captions: [B, T] int -> [B, T+1, V]."""
    B = images.shape[0]
    T = captions.shape[1]
    chw, feat_dim = kp["w_bb"].shape
    E = kp["w_enc"].shape[1]
    H = kp["w1"].shape[1]
    V = kp["embed"].shape[0]
    V_pad = kp["w2"].shape[1]

    B_pad = _round_up(max(B, _ROW_ALIGN), _ROW_ALIGN)
    BT = B_pad * T
    out_rows = B_pad + BT

    # Flatten + zero-pad batch rows to sublane granularity (sliced out below);
    # cast x to bf16 here so the kernel never re-casts a resident block.
    x = images.reshape(B, -1).astype(jnp.bfloat16)
    x = jnp.pad(x, ((0, B_pad - B), (0, 0)))
    cap = jnp.pad(captions.astype(jnp.int32), ((0, B_pad - B), (0, 0)))
    cap = cap.reshape(BT, 1)

    kernel = functools.partial(_fused_captioning_kernel, bt=BT, vocab=V)

    flops = 2 * (B_pad * chw * feat_dim        # backbone projection
                 + B_pad * feat_dim * E        # encoder linear
                 + BT * V * E                  # one-hot embedding matmul
                 + out_rows * E * H            # decoder linear
                 + out_rows * H * V_pad)       # decoder linear2
    bytes_accessed = (
        x.size * 2 + cap.size * 4
        + sum(int(a.size) * a.dtype.itemsize for a in kp.values())
        + out_rows * V_pad * 4)

    out = pl.pallas_call(
        kernel,
        out_shape=jax.ShapeDtypeStruct((out_rows, V_pad), jnp.float32),
        grid=(1,),
        in_specs=[
            pl.BlockSpec((B_pad, chw), lambda n: (0, 0)),     # x (bf16)
            pl.BlockSpec((BT, 1), lambda n: (0, 0)),          # captions
            pl.BlockSpec((chw, feat_dim), lambda n: (0, 0)),  # w_bb (resident)
            pl.BlockSpec((1, feat_dim), lambda n: (0, 0)),    # b_bb
            pl.BlockSpec((feat_dim, E), lambda n: (0, 0)),    # w_enc
            pl.BlockSpec((1, E), lambda n: (0, 0)),           # b_enc
            pl.BlockSpec((V, E), lambda n: (0, 0)),           # embed
            pl.BlockSpec((E, H), lambda n: (0, 0)),           # w1
            pl.BlockSpec((1, H), lambda n: (0, 0)),           # b1
            pl.BlockSpec((H, V_pad), lambda n: (0, 0)),       # w2 (V padded)
            pl.BlockSpec((1, V_pad), lambda n: (0, 0)),       # b2 (V padded)
        ],
        out_specs=pl.BlockSpec((out_rows, V_pad), lambda n: (0, 0)),
        compiler_params=pltpu.CompilerParams(
            dimension_semantics=("arbitrary",),
            vmem_limit_bytes=32 * 1024 * 1024),
        cost_estimate=pl.CostEstimate(flops=flops, transcendentals=0,
                                      bytes_accessed=bytes_accessed),
    )(x, cap, kp["w_bb"], kp["b_bb"], kp["w_enc"], kp["b_enc"],
      kp["embed"], kp["w1"], kp["b1"], kp["w2"], kp["b2"])

    feat_logits = out[:B, :V]                                       # t = 0
    cap_logits = out[B_pad:B_pad + B * T, :V].reshape(B, T, V)      # t = 1..T
    return jnp.concatenate([feat_logits[:, None, :], cap_logits], axis=1)


def prepare_params(params):
    """Cast weights to bf16 for the HBM/MXU path; pad vocab dim to 128 lanes.

    Single source of the padding invariant: padded w2/b2 columns are zero so
    padded logits are exactly 0 and sliced off in the wrapper.
    """
    V = params["w2"].shape[1]
    pv = _round_up(V, _LANES) - V
    return {
        "w_bb": params["w_bb"].astype(jnp.bfloat16),
        "b_bb": params["b_bb"].astype(jnp.float32),
        "w_enc": params["w_enc"].astype(jnp.bfloat16),
        "b_enc": params["b_enc"].astype(jnp.float32),
        "embed": params["embed"].astype(jnp.bfloat16),
        "w1": params["w1"].astype(jnp.bfloat16),
        "b1": params["b1"].astype(jnp.float32),
        "w2": jnp.pad(params["w2"], ((0, 0), (0, pv))).astype(jnp.bfloat16),
        "b2": jnp.pad(params["b2"], ((0, 0), (0, pv))).astype(jnp.float32),
    }


# Pure-JAX reference replicating the kernel math (same bf16 roundings).
def _reference_forward(images, captions, kp):
    B = images.shape[0]
    V = kp["embed"].shape[0]

    def bdot(a, b):
        return jnp.dot(a.astype(jnp.bfloat16), b.astype(jnp.bfloat16),
                       preferred_element_type=jnp.float32)

    x = images.reshape(B, -1).astype(jnp.float32)
    feats = jnp.maximum(bdot(x, kp["w_bb"]) + kp["b_bb"], 0.0)
    features = bdot(feats, kp["w_enc"]) + kp["b_enc"]
    emb = jnp.take(kp["embed"], captions, axis=0).astype(jnp.float32)
    seq = jnp.concatenate([features[:, None, :], emb], axis=1)
    flat = seq.reshape(-1, seq.shape[-1])
    h = bdot(flat, kp["w1"]) + kp["b1"]
    out = bdot(h, kp["w2"]) + kp["b2"]
    return out.reshape(B, seq.shape[1], -1)[..., :V]


if __name__ == "__main__":
    B, T = 2, 8
    embed_size, hidden_size, vocab_size = 32, 32, 64
    C, Himg, Wimg = 3, 16, 16
    feat_dim = 2048  # resnet50 fc.in_features

    key = jax.random.PRNGKey(0)
    k = jax.random.split(key, 10)

    images = jax.random.normal(k[0], (B, C, Himg, Wimg), jnp.float32)   # NCHW
    captions = jax.random.randint(k[1], (B, T), 0, vocab_size, jnp.int32)

    # Deterministic parameters (weights stored as [in, out]).
    params = {
        "w_bb": jax.random.normal(k[2], (C * Himg * Wimg, feat_dim),
                                  jnp.float32) * 0.02,
        "b_bb": jnp.zeros((1, feat_dim), jnp.float32),
        "w_enc": jax.random.normal(k[3], (feat_dim, embed_size),
                                   jnp.float32) * (feat_dim ** -0.5),
        "b_enc": jax.random.normal(k[4], (1, embed_size), jnp.float32) * 0.01,
        "embed": jax.random.normal(k[5], (vocab_size, embed_size),
                                   jnp.float32),
        "w1": jax.random.normal(k[6], (embed_size, hidden_size),
                                jnp.float32) * (embed_size ** -0.5),
        "b1": jax.random.normal(k[7], (1, hidden_size), jnp.float32) * 0.01,
        "w2": jax.random.normal(k[8], (hidden_size, vocab_size),
                                jnp.float32) * (hidden_size ** -0.5),
        "b2": jax.random.normal(k[9], (1, vocab_size), jnp.float32) * 0.01,
    }
    kparams = prepare_params(params)

    out = jax.block_until_ready(
        image_captioning_forward(images, captions, kparams))
    assert out.shape == (B, T + 1, vocab_size), out.shape

    ref = _reference_forward(images, captions, kparams)
    assert jnp.allclose(out, ref, atol=1e-2, rtol=1e-2), (
        "mismatch vs reference, max abs err = "
        f"{float(jnp.max(jnp.abs(out - ref)))}")

    print("KERNEL_OK")
</pallas_src>

<mosaic_0001>
module attributes {stable_mosaic.version = 11 : i64} {
  func.func @_fused_captioning_kernel(%arg0: i32, %arg1: memref<8x768xbf16, #tpu.memory_space<vmem>>, %arg2: memref<64x1xi32, #tpu.memory_space<vmem>>, %arg3: memref<768x2048xbf16, #tpu.memory_space<vmem>>, %arg4: memref<1x2048xf32, #tpu.memory_space<vmem>>, %arg5: memref<2048x32xbf16, #tpu.memory_space<vmem>>, %arg6: memref<1x32xf32, #tpu.memory_space<vmem>>, %arg7: memref<64x32xbf16, #tpu.memory_space<vmem>>, %arg8: memref<32x32xbf16, #tpu.memory_space<vmem>>, %arg9: memref<1x32xf32, #tpu.memory_space<vmem>>, %arg10: memref<32x128xbf16, #tpu.memory_space<vmem>>, %arg11: memref<1x128xf32, #tpu.memory_space<vmem>>, %arg12: memref<72x128xf32, #tpu.memory_space<vmem>>) attributes {dimension_semantics = [#tpu.dimension_semantics<arbitrary>], iteration_bounds = array<i64: 1>, scalar_prefetch = 0 : i64, scratch_operands = 0 : i64, tpu.core_type = #tpu.core_type<tc>, window_params = [{pipeline_mode = #tpu.pipeline_mode<synchronous>, transform_indices = @transform_0, window_bounds = array<i64: 8, 768>}, {pipeline_mode = #tpu.pipeline_mode<synchronous>, transform_indices = @transform_1, window_bounds = array<i64: 64, 1>}, {pipeline_mode = #tpu.pipeline_mode<synchronous>, transform_indices = @transform_2, window_bounds = array<i64: 768, 2048>}, {pipeline_mode = #tpu.pipeline_mode<synchronous>, transform_indices = @transform_3, window_bounds = array<i64: 1, 2048>}, {pipeline_mode = #tpu.pipeline_mode<synchronous>, transform_indices = @transform_4, window_bounds = array<i64: 2048, 32>}, {pipeline_mode = #tpu.pipeline_mode<synchronous>, transform_indices = @transform_5, window_bounds = array<i64: 1, 32>}, {pipeline_mode = #tpu.pipeline_mode<synchronous>, transform_indices = @transform_6, window_bounds = array<i64: 64, 32>}, {pipeline_mode = #tpu.pipeline_mode<synchronous>, transform_indices = @transform_7, window_bounds = array<i64: 32, 32>}, {pipeline_mode = #tpu.pipeline_mode<synchronous>, transform_indices = @transform_8, window_bounds = array<i64: 1, 32>}, {pipeline_mode = #tpu.pipeline_mode<synchronous>, transform_indices = @transform_9, window_bounds = array<i64: 32, 128>}, {pipeline_mode = #tpu.pipeline_mode<synchronous>, transform_indices = @transform_10, window_bounds = array<i64: 1, 128>}, {pipeline_mode = #tpu.pipeline_mode<synchronous>, transform_indices = @transform_11, window_bounds = array<i64: 72, 128>}]} {
    %c0 = arith.constant 0 : index
    %c0_0 = arith.constant 0 : index
    %0 = vector.load %arg1[%c0, %c0_0] : memref<8x768xbf16, #tpu.memory_space<vmem>>, vector<8x768xbf16>
    %c0_1 = arith.constant 0 : index
    %c0_2 = arith.constant 0 : index
    %1 = vector.load %arg3[%c0_1, %c0_2] : memref<768x2048xbf16, #tpu.memory_space<vmem>>, vector<768x2048xbf16>
    %cst = arith.constant dense<0.000000e+00> : vector<8x2048xf32>
    %2 = tpu.matmul %0, %1, %cst {dimension_numbers = #tpu.dot_dimension_numbers<[1], [0], [0], [1], [0, 0, 1, 1], [], []>} : vector<8x768xbf16>, vector<768x2048xbf16>, vector<8x2048xf32> -> vector<8x2048xf32>
    %c0_3 = arith.constant 0 : index
    %c0_4 = arith.constant 0 : index
    %3 = vector.load %arg4[%c0_3, %c0_4] : memref<1x2048xf32, #tpu.memory_space<vmem>>, vector<1x2048xf32>
    %4 = vector.broadcast %3 : vector<1x2048xf32> to vector<8x2048xf32>
    %5 = arith.addf %2, %4 : vector<8x2048xf32>
    %cst_5 = arith.constant 0.000000e+00 : f32
    %6 = vector.broadcast %cst_5 : f32 to vector<8x2048xf32>
    %7 = arith.maximumf %5, %6 : vector<8x2048xf32>
    %8 = arith.truncf %7 : vector<8x2048xf32> to vector<8x2048xbf16>
    %c0_6 = arith.constant 0 : index
    %c0_7 = arith.constant 0 : index
    %9 = vector.load %arg5[%c0_6, %c0_7] : memref<2048x32xbf16, #tpu.memory_space<vmem>>, vector<2048x32xbf16>
    %cst_8 = arith.constant dense<0.000000e+00> : vector<8x32xf32>
    %10 = tpu.matmul %8, %9, %cst_8 {dimension_numbers = #tpu.dot_dimension_numbers<[1], [0], [0], [1], [0, 0, 1, 1], [], []>} : vector<8x2048xbf16>, vector<2048x32xbf16>, vector<8x32xf32> -> vector<8x32xf32>
    %c0_9 = arith.constant 0 : index
    %c0_10 = arith.constant 0 : index
    %11 = vector.load %arg6[%c0_9, %c0_10] : memref<1x32xf32, #tpu.memory_space<vmem>>, vector<1x32xf32>
    %12 = vector.broadcast %11 : vector<1x32xf32> to vector<8x32xf32>
    %13 = arith.addf %10, %12 : vector<8x32xf32>
    %c0_11 = arith.constant 0 : index
    %c0_12 = arith.constant 0 : index
    %14 = vector.load %arg2[%c0_11, %c0_12] : memref<64x1xi32, #tpu.memory_space<vmem>>, vector<64x1xi32>
    %15 = tpu.iota {dimensions = array<i32: 1>} : vector<64x64xi32>
    %16 = vector.broadcast %14 : vector<64x1xi32> to vector<64x64xi32>
    %17 = arith.cmpi eq, %16, %15 : vector<64x64xi32>
    %18 = arith.extui %17 : vector<64x64xi1> to vector<64x64xi32>
    %19 = arith.sitofp %18 : vector<64x64xi32> to vector<64x64xf32>
    %20 = arith.truncf %19 : vector<64x64xf32> to vector<64x64xbf16>
    %c0_13 = arith.constant 0 : index
    %c0_14 = arith.constant 0 : index
    %21 = vector.load %arg7[%c0_13, %c0_14] : memref<64x32xbf16, #tpu.memory_space<vmem>>, vector<64x32xbf16>
    %cst_15 = arith.constant dense<0.000000e+00> : vector<64x32xf32>
    %22 = tpu.matmul %20, %21, %cst_15 {dimension_numbers = #tpu.dot_dimension_numbers<[1], [0], [0], [1], [0, 0, 1, 1], [], []>} : vector<64x64xbf16>, vector<64x32xbf16>, vector<64x32xf32> -> vector<64x32xf32>
    %23 = tpu.concatenate %13, %22 in 0 : vector<8x32xf32>, vector<64x32xf32> -> vector<72x32xf32>
    %24 = arith.truncf %23 : vector<72x32xf32> to vector<72x32xbf16>
    %c0_16 = arith.constant 0 : index
    %c0_17 = arith.constant 0 : index
    %25 = vector.load %arg8[%c0_16, %c0_17] : memref<32x32xbf16, #tpu.memory_space<vmem>>, vector<32x32xbf16>
    %cst_18 = arith.constant dense<0.000000e+00> : vector<72x32xf32>
    %26 = tpu.matmul %24, %25, %cst_18 {dimension_numbers = #tpu.dot_dimension_numbers<[1], [0], [0], [1], [0, 0, 1, 1], [], []>} : vector<72x32xbf16>, vector<32x32xbf16>, vector<72x32xf32> -> vector<72x32xf32>
    %c0_19 = arith.constant 0 : index
    %c0_20 = arith.constant 0 : index
    %27 = vector.load %arg9[%c0_19, %c0_20] : memref<1x32xf32, #tpu.memory_space<vmem>>, vector<1x32xf32>
    %28 = vector.broadcast %27 : vector<1x32xf32> to vector<72x32xf32>
    %29 = arith.addf %26, %28 : vector<72x32xf32>
    %30 = arith.truncf %29 : vector<72x32xf32> to vector<72x32xbf16>
    %c0_21 = arith.constant 0 : index
    %c0_22 = arith.constant 0 : index
    %31 = vector.load %arg10[%c0_21, %c0_22] : memref<32x128xbf16, #tpu.memory_space<vmem>>, vector<32x128xbf16>
    %cst_23 = arith.constant dense<0.000000e+00> : vector<72x128xf32>
    %32 = tpu.matmul %30, %31, %cst_23 {dimension_numbers = #tpu.dot_dimension_numbers<[1], [0], [0], [1], [0, 0, 1, 1], [], []>} : vector<72x32xbf16>, vector<32x128xbf16>, vector<72x128xf32> -> vector<72x128xf32>
    %c0_24 = arith.constant 0 : index
    %c0_25 = arith.constant 0 : index
    %33 = vector.load %arg11[%c0_24, %c0_25] : memref<1x128xf32, #tpu.memory_space<vmem>>, vector<1x128xf32>
    %34 = vector.broadcast %33 : vector<1x128xf32> to vector<72x128xf32>
    %35 = arith.addf %32, %34 : vector<72x128xf32>
    %c0_26 = arith.constant 0 : index
    %c0_27 = arith.constant 0 : index
    %36 = vector.load %arg12[%c0_26, %c0_27] : memref<72x128xf32, #tpu.memory_space<vmem>>, vector<72x128xf32>
    tpu.vector_store %arg12[%c0_26, %c0_27], %35 {strides = array<i32>} : memref<72x128xf32, #tpu.memory_space<vmem>>, vector<72x128xf32>,
    return
  }
  func.func @transform_0(%arg0: i32) -> (i32, i32) {
    %c0_i32 = arith.constant 0 : i32
    %c0_i32_0 = arith.constant 0 : i32
    %c0_i32_1 = arith.constant 0 : i32
    return %c0_i32, %c0_i32_0 : i32, i32
  }
  func.func @transform_1(%arg0: i32) -> (i32, i32) {
    %c0_i32 = arith.constant 0 : i32
    %c0_i32_0 = arith.constant 0 : i32
    %c0_i32_1 = arith.constant 0 : i32
    return %c0_i32, %c0_i32_0 : i32, i32
  }
  func.func @transform_2(%arg0: i32) -> (i32, i32) {
    %c0_i32 = arith.constant 0 : i32
    %c0_i32_0 = arith.constant 0 : i32
    %c0_i32_1 = arith.constant 0 : i32
    return %c0_i32, %c0_i32_0 : i32, i32
  }
  func.func @transform_3(%arg0: i32) -> (i32, i32) {
    %c0_i32 = arith.constant 0 : i32
    %c0_i32_0 = arith.constant 0 : i32
    %c0_i32_1 = arith.constant 0 : i32
    return %c0_i32, %c0_i32_0 : i32, i32
  }
  func.func @transform_4(%arg0: i32) -> (i32, i32) {
    %c0_i32 = arith.constant 0 : i32
    %c0_i32_0 = arith.constant 0 : i32
    %c0_i32_1 = arith.constant 0 : i32
    return %c0_i32, %c0_i32_0 : i32, i32
  }
  func.func @transform_5(%arg0: i32) -> (i32, i32) {
    %c0_i32 = arith.constant 0 : i32
    %c0_i32_0 = arith.constant 0 : i32
    %c0_i32_1 = arith.constant 0 : i32
    return %c0_i32, %c0_i32_0 : i32, i32
  }
  func.func @transform_6(%arg0: i32) -> (i32, i32) {
    %c0_i32 = arith.constant 0 : i32
    %c0_i32_0 = arith.constant 0 : i32
    %c0_i32_1 = arith.constant 0 : i32
    return %c0_i32, %c0_i32_0 : i32, i32
  }
  func.func @transform_7(%arg0: i32) -> (i32, i32) {
    %c0_i32 = arith.constant 0 : i32
    %c0_i32_0 = arith.constant 0 : i32
    %c0_i32_1 = arith.constant 0 : i32
    return %c0_i32, %c0_i32_0 : i32, i32
  }
  func.func @transform_8(%arg0: i32) -> (i32, i32) {
    %c0_i32 = arith.constant 0 : i32
    %c0_i32_0 = arith.constant 0 : i32
    %c0_i32_1 = arith.constant 0 : i32
    return %c0_i32, %c0_i32_0 : i32, i32
  }
  func.func @transform_9(%arg0: i32) -> (i32, i32) {
    %c0_i32 = arith.constant 0 : i32
    %c0_i32_0 = arith.constant 0 : i32
    %c0_i32_1 = arith.constant 0 : i32
    return %c0_i32, %c0_i32_0 : i32, i32
  }
  func.func @transform_10(%arg0: i32) -> (i32, i32) {
    %c0_i32 = arith.constant 0 : i32
    %c0_i32_0 = arith.constant 0 : i32
    %c0_i32_1 = arith.constant 0 : i32
    return %c0_i32, %c0_i32_0 : i32, i32
  }
  func.func @transform_11(%arg0: i32) -> (i32, i32) {
    %c0_i32 = arith.constant 0 : i32
    %c0_i32_0 = arith.constant 0 : i32
    %c0_i32_1 = arith.constant 0 : i32
    return %c0_i32, %c0_i32_0 : i32, i32
  }
}

</mosaic_0001>

<llo_original>
// kernel: image_captioning_forward.1
$region0: #{image_captioning_forward.1}
  #allocation0 [shape = 'u32[]', space=smem, size = 0x4, offset = 0x4, fixed_abs, tag = 'smem constant byte address 0x4 - core index']
  #allocation1 [shape = 'u32[144,128]{1,0:T(1,128)}', space=vmem, size = 0x12000, scoped, tag = 'internal scratch']
  %s0 = inlined_call_operand.vmem [shape: bf16[8,768], index: 0, kind: input, shape index: {}]
  %s1 = inlined_call_operand.vmem [shape: s32[64,1], index: 1, kind: input, shape index: {}]
  %s2 = inlined_call_operand.hbm [shape: bf16[768,2048], index: 2, kind: input, shape index: {}]
  %s3 = inlined_call_operand.hbm [shape: f32[1,2048], index: 3, kind: input, shape index: {}]
  %s4 = inlined_call_operand.vmem [shape: bf16[2048,32], index: 4, kind: input, shape index: {}]
  %s5 = inlined_call_operand.hbm [shape: f32[1,32], index: 5, kind: input, shape index: {}]
  %s6 = inlined_call_operand.vmem [shape: bf16[64,32], index: 6, kind: input, shape index: {}]
  %s7 = inlined_call_operand.hbm [shape: bf16[32,32], index: 7, kind: input, shape index: {}]
  %s8 = inlined_call_operand.hbm [shape: f32[1,32], index: 8, kind: input, shape index: {}]
  %s9 = inlined_call_operand.hbm [shape: bf16[32,128], index: 9, kind: input, shape index: {}]
  %s10 = inlined_call_operand.hbm [shape: f32[1,128], index: 10, kind: input, shape index: {}]
  %s11 = inlined_call_operand.vmem [shape: f32[72,128], index: 11, kind: output, shape index: {}]
  %s12 = sld [smem:[#allocation0]]
  $region82: #{image_captioning_forward.1} parent=0
    _
  %s14 = ssub.s32 1, %s12
  %s15 = scalar_select 0, %s14, %s12
  $region1: #{image_captioning_forward.1} parent=0
    #allocation2 [shape = 'u8[3145728]{0}', space=vmem, size = 0x300000, scoped, tag = 'input window, operand 2, single buffered']
    #allocation3 [shape = 's32[1]{0}', space=sflag, size = 0x4, scoped, tag = 'scoped memory for image_captioning_forward.1']
    #allocation4 [shape = 'u8[8192]{0}', space=vmem, size = 0x2000, scoped, tag = 'input window, operand 3, single buffered']
    #allocation5 [shape = 's32[1]{0}', space=sflag, size = 0x4, scoped, tag = 'scoped memory for image_captioning_forward.1']
    #allocation6 [shape = 'u8[512]{0}', space=vmem, size = 0x400, scoped, tag = 'input window, operand 5, single buffered']
    #allocation7 [shape = 'u8[8192]{0}', space=vmem, size = 0x2000, scoped, tag = 'input window, operand 7, single buffered']
    #allocation8 [shape = 's32[1]{0}', space=sflag, size = 0x4, scoped, tag = 'scoped memory for image_captioning_forward.1']
    #allocation9 [shape = 'u8[512]{0}', space=vmem, size = 0x400, scoped, tag = 'input window, operand 8, single buffered']
    #allocation10 [shape = 'u8[8192]{0}', space=vmem, size = 0x2000, scoped, tag = 'input window, operand 9, single buffered']
    #allocation11 [shape = 's32[1]{0}', space=sflag, size = 0x4, scoped, tag = 'scoped memory for image_captioning_forward.1']
    #allocation12 [shape = 'u8[512]{0}', space=vmem, size = 0x400, scoped, tag = 'input window, operand 10, single buffered']
    %16 = vsyncpa [#allocation3], 0
    %17 = vsyncpa [#allocation5], 0
    %18 = vsyncpa [#allocation8], 0
    %19 = vsyncpa [#allocation11], 0
    // Predicated region
    $region2: #{image_captioning_forward.1} parent=1 // pred_check
      _
    $region3: #{image_captioning_forward.1} parent=1 // pred_check_branch
      %21 = sbr.rel (0) target = $region5
    $region4: #{image_captioning_forward.1} parent=1 // pred_region
      _
    $region5: #{image_captioning_forward.1} parent=1 // pred_fallthru
      _
    // Predicated region
    $region6: #{image_captioning_forward.1} parent=1 // pred_check
      _
    $region7: #{image_captioning_forward.1} parent=1 // pred_check_branch
      %23 = sbr.rel (0) target = $region9
    $region8: #{image_captioning_forward.1} parent=1 // pred_region
      _
    $region9: #{image_captioning_forward.1} parent=1 // pred_fallthru
      _
    // Predicated region
    $region10: #{image_captioning_forward.1} parent=1 // pred_check
      _
    $region11: #{image_captioning_forward.1} parent=1 // pred_check_branch
      %25 = sbr.rel (0) target = $region13
    $region12: #{image_captioning_forward.1} parent=1 // pred_region
      %s27 = ssub.s32 98304, 98304
      %28 = vsyncadd [#allocation3], %s27
      %s29 = sshll.u32 [#allocation2], 4
      %s30 = int_to_ptr.vmem [resolvable:$true] %s29
      %35 = dma.hbm_to_vmem [thread:$0]  %s2, 98304, %s30, [#allocation3], 1024, 1024, 64
    $region13: #{image_captioning_forward.1} parent=1 // pred_fallthru
      _
    // Predicated region
    $region14: #{image_captioning_forward.1} parent=1 // pred_check
      _
    $region15: #{image_captioning_forward.1} parent=1 // pred_check_branch
      %37 = sbr.rel (0) target = $region17
    $region16: #{image_captioning_forward.1} parent=1 // pred_region
      %s39 = ssub.s32 256, 256
      %40 = vsyncadd [#allocation5], %s39
      %s42 = sshll.u32 [#allocation4], 4
      %s43 = int_to_ptr.vmem [resolvable:$true] %s42
      %45 = dma.hbm_to_vmem [thread:$0]  %s3, 256, %s43, [#allocation5]
    $region17: #{image_captioning_forward.1} parent=1 // pred_fallthru
      _
    // Predicated region
    $region18: #{image_captioning_forward.1} parent=1 // pred_check
      _
    $region19: #{image_captioning_forward.1} parent=1 // pred_check_branch
      %47 = sbr.rel (0) target = $region21
    $region20: #{image_captioning_forward.1} parent=1 // pred_region
      _
    $region21: #{image_captioning_forward.1} parent=1 // pred_fallthru
      _
    // Predicated region
    $region22: #{image_captioning_forward.1} parent=1 // pred_check
      _
    $region23: #{image_captioning_forward.1} parent=1 // pred_check_branch
      %49 = sbr.rel (0) target = $region25
    $region24: #{image_captioning_forward.1} parent=1 // pred_region
      %s51 = ssub.s32 16, 16
      %52 = vsyncadd [#allocation5], %s51
      %s54 = sshll.u32 [#allocation6], 4
      %s55 = int_to_ptr.vmem [resolvable:$true] %s54
      %57 = dma.hbm_to_vmem [thread:$0]  %s5, 16, %s55, [#allocation5]
    $region25: #{image_captioning_forward.1} parent=1 // pred_fallthru
      _
    // Predicated region
    $region26: #{image_captioning_forward.1} parent=1 // pred_check
      _
    $region27: #{image_captioning_forward.1} parent=1 // pred_check_branch
      %59 = sbr.rel (0) target = $region29
    $region28: #{image_captioning_forward.1} parent=1 // pred_region
      _
    $region29: #{image_captioning_forward.1} parent=1 // pred_fallthru
      _
    // Predicated region
    $region30: #{image_captioning_forward.1} parent=1 // pred_check
      _
    $region31: #{image_captioning_forward.1} parent=1 // pred_check_branch
      %61 = sbr.rel (0) target = $region33
    $region32: #{image_captioning_forward.1} parent=1 // pred_region
      %s63 = ssub.s32 256, 256
      %64 = vsyncadd [#allocation8], %s63
      %s65 = sshll.u32 [#allocation7], 4
      %s66 = int_to_ptr.vmem [resolvable:$true] %s65
      %71 = dma.hbm_to_vmem [thread:$0]  %s7, 256, %s66, [#allocation8], 64, 64, 4
    $region33: #{image_captioning_forward.1} parent=1 // pred_fallthru
      _
    // Predicated region
    $region34: #{image_captioning_forward.1} parent=1 // pred_check
      _
    $region35: #{image_captioning_forward.1} parent=1 // pred_check_branch
      %73 = sbr.rel (0) target = $region37
    $region36: #{image_captioning_forward.1} parent=1 // pred_region
      %s75 = ssub.s32 16, 16
      %76 = vsyncadd [#allocation8], %s75
      %s78 = sshll.u32 [#allocation9], 4
      %s79 = int_to_ptr.vmem [resolvable:$true] %s78
      %81 = dma.hbm_to_vmem [thread:$0]  %s8, 16, %s79, [#allocation8]
    $region37: #{image_captioning_forward.1} parent=1 // pred_fallthru
      _
    // Predicated region
    $region38: #{image_captioning_forward.1} parent=1 // pred_check
      _
    $region39: #{image_captioning_forward.1} parent=1 // pred_check_branch
      %83 = sbr.rel (0) target = $region41
    $region40: #{image_captioning_forward.1} parent=1 // pred_region
      %s85 = ssub.s32 256, 256
      %86 = vsyncadd [#allocation11], %s85
      %s87 = sshll.u32 [#allocation10], 4
      %s88 = int_to_ptr.vmem [resolvable:$true] %s87
      %93 = dma.hbm_to_vmem [thread:$0]  %s9, 256, %s88, [#allocation11], 64, 64, 4
    $region41: #{image_captioning_forward.1} parent=1 // pred_fallthru
      _
    // Predicated region
    $region42: #{image_captioning_forward.1} parent=1 // pred_check
      _
    $region43: #{image_captioning_forward.1} parent=1 // pred_check_branch
      %95 = sbr.rel (0) target = $region45
    $region44: #{image_captioning_forward.1} parent=1 // pred_region
      %s97 = ssub.s32 16, 16
      %98 = vsyncadd [#allocation11], %s97
      %s100 = sshll.u32 [#allocation12], 4
      %s101 = int_to_ptr.vmem [resolvable:$true] %s100
      %103 = dma.hbm_to_vmem [thread:$0]  %s10, 16, %s101, [#allocation11]
    $region45: #{image_captioning_forward.1} parent=1 // pred_fallthru
      _
    // Predicated region
    $region46: #{image_captioning_forward.1} parent=1 // pred_check
      _
    $region47: #{image_captioning_forward.1} parent=1 // pred_check_branch
      %105 = sbr.rel (0) target = $region49
    $region48: #{image_captioning_forward.1} parent=1 // pred_region
      %106 = dma.done [#allocation3], 98304
    $region49: #{image_captioning_forward.1} parent=1 // pred_fallthru
      _
    // Predicated region
    $region50: #{image_captioning_forward.1} parent=1 // pred_check
      _
    $region51: #{image_captioning_forward.1} parent=1 // pred_check_branch
      %108 = sbr.rel (0) target = $region53
    $region52: #{image_captioning_forward.1} parent=1 // pred_region
      %109 = dma.done [#allocation5], 256
    $region53: #{image_captioning_forward.1} parent=1 // pred_fallthru
      _
    // Predicated region
    $region54: #{image_captioning_forward.1} parent=1 // pred_check
      _
    $region55: #{image_captioning_forward.1} parent=1 // pred_check_branch
      %111 = sbr.rel (0) target = $region57
    $region56: #{image_captioning_forward.1} parent=1 // pred_region
      %112 = dma.done [#allocation5], 16
    $region57: #{image_captioning_forward.1} parent=1 // pred_fallthru
      _
    // Predicated region
    $region58: #{image_captioning_forward.1} parent=1 // pred_check
      _
    $region59: #{image_captioning_forward.1} parent=1 // pred_check_branch
      %114 = sbr.rel (0) target = $region61
    $region60: #{image_captioning_forward.1} parent=1 // pred_region
      %115 = dma.done [#allocation8], 256
    $region61: #{image_captioning_forward.1} parent=1 // pred_fallthru
      _
    // Predicated region
    $region62: #{image_captioning_forward.1} parent=1 // pred_check
      _
    $region63: #{image_captioning_forward.1} parent=1 // pred_check_branch
      %117 = sbr.rel (0) target = $region65
    $region64: #{image_captioning_forward.1} parent=1 // pred_region
      %118 = dma.done [#allocation8], 16
    $region65: #{image_captioning_forward.1} parent=1 // pred_fallthru
      _
    // Predicated region
    $region66: #{image_captioning_forward.1} parent=1 // pred_check
      _
    $region67: #{image_captioning_forward.1} parent=1 // pred_check_branch
      %120 = sbr.rel (0) target = $region69
    $region68: #{image_captioning_forward.1} parent=1 // pred_region
      %121 = dma.done [#allocation11], 256
    $region69: #{image_captioning_forward.1} parent=1 // pred_fallthru
      _
    // Predicated region
    $region70: #{image_captioning_forward.1} parent=1 // pred_check
      _
    $region71: #{image_captioning_forward.1} parent=1 // pred_check_branch
      %123 = sbr.rel (0) target = $region73
    $region72: #{image_captioning_forward.1} parent=1 // pred_region
      %124 = dma.done [#allocation11], 16
    $region73: #{image_captioning_forward.1} parent=1 // pred_fallthru
      _
    %v126 = vld [vmem:[%s0] sm:$0xff]
    %v127 = vld [vmem:[%s0 + $0x8] sm:$0xff]
    %v128 = vld [vmem:[%s0 + $0x10] sm:$0xff]
    %v129 = vld [vmem:[#allocation2] sm:$0xff]
    %v130 = vld [vmem:[#allocation2 + $0x8] sm:$0xff]
    %v131 = vld [vmem:[#allocation2 + $0x10] sm:$0xff]
    %v132 = vld [vmem:[#allocation2 + $0x18] sm:$0xff]
    %v133 = vld [vmem:[#allocation2 + $0x20] sm:$0xff]
    %v134 = vld [vmem:[#allocation2 + $0x28] sm:$0xff]
    %v135 = vld [vmem:[#allocation2 + $0x30] sm:$0xff]
    %v136 = vld [vmem:[#allocation2 + $0x38] sm:$0xff]
    %v137 = vld [vmem:[#allocation2 + $0x40] sm:$0xff]
    %v138 = vld [vmem:[#allocation2 + $0x48] sm:$0xff]
    %v139 = vld [vmem:[#allocation2 + $0x50] sm:$0xff]
    %v140 = vld [vmem:[#allocation2 + $0x58] sm:$0xff]
    %v141 = vld [vmem:[#allocation2 + $0x60] sm:$0xff]
    %v142 = vld [vmem:[#allocation2 + $0x68] sm:$0xff]
    %v143 = vld [vmem:[#allocation2 + $0x70] sm:$0xff]
    %v144 = vld [vmem:[#allocation2 + $0x78] sm:$0xff]
    %v145 = vld [vmem:[#allocation2 + $0x80] sm:$0xff]
    %v146 = vld [vmem:[#allocation2 + $0x88] sm:$0xff]
    %v147 = vld [vmem:[#allocation2 + $0x90] sm:$0xff]
    %v148 = vld [vmem:[#allocation2 + $0x98] sm:$0xff]
    %v149 = vld [vmem:[#allocation2 + $0xa0] sm:$0xff]
    %v150 = vld [vmem:[#allocation2 + $0xa8] sm:$0xff]
    %v151 = vld [vmem:[#allocation2 + $0xb0] sm:$0xff]
    %v152 = vld [vmem:[#allocation2 + $0xb8] sm:$0xff]
    %v153 = vld [vmem:[#allocation2 + $0xc0] sm:$0xff]
    %v154 = vld [vmem:[#allocation2 + $0xc8] sm:$0xff]
    %v155 = vld [vmem:[#allocation2 + $0xd0] sm:$0xff]
    %v156 = vld [vmem:[#allocation2 + $0xd8] sm:$0xff]
    %v157 = vld [vmem:[#allocation2 + $0xe0] sm:$0xff]
    %v158 = vld [vmem:[#allocation2 + $0xe8] sm:$0xff]
    %v159 = vld [vmem:[#allocation2 + $0xf0] sm:$0xff]
    %v160 = vld [vmem:[#allocation2 + $0xf8] sm:$0xff]
    %v161 = vld [vmem:[#allocation2 + $0x100] sm:$0xff]
    %v162 = vld [vmem:[#allocation2 + $0x108] sm:$0xff]
    %v163 = vld [vmem:[#allocation2 + $0x110] sm:$0xff]
    %v164 = vld [vmem:[#allocation2 + $0x118] sm:$0xff]
    %v165 = vld [vmem:[#allocation2 + $0x120] sm:$0xff]
    %v166 = vld [vmem:[#allocation2 + $0x128] sm:$0xff]
    %v167 = vld [vmem:[#allocation2 + $0x130] sm:$0xff]
    %v168 = vld [vmem:[#allocation2 + $0x138] sm:$0xff]
    %v169 = vld [vmem:[#allocation2 + $0x140] sm:$0xff]
    %v170 = vld [vmem:[#allocation2 + $0x148] sm:$0xff]
    %v171 = vld [vmem:[#allocation2 + $0x150] sm:$0xff]
    %v172 = vld [vmem:[#allocation2 + $0x158] sm:$0xff]
    %v173 = vld [vmem:[#allocation2 + $0x160] sm:$0xff]
    %v174 = vld [vmem:[#allocation2 + $0x168] sm:$0xff]
    %v175 = vld [vmem:[#allocation2 + $0x170] sm:$0xff]
    %v176 = vld [vmem:[#allocation2 + $0x178] sm:$0xff]
    %v177 = vld [vmem:[#allocation2 + $0x180] sm:$0xff]
    %v178 = vld [vmem:[#allocation2 + $0x188] sm:$0xff]
    %v179 = vld [vmem:[#allocation2 + $0x190] sm:$0xff]
    %v180 = vld [vmem:[#allocation2 + $0x198] sm:$0xff]
    %v181 = vld [vmem:[#allocation2 + $0x1a0] sm:$0xff]
    %v182 = vld [vmem:[#allocation2 + $0x1a8] sm:$0xff]
    %v183 = vld [vmem:[#allocation2 + $0x1b0] sm:$0xff]
    %v184 = vld [vmem:[#allocation2 + $0x1b8] sm:$0xff]
    %v185 = vld [vmem:[#allocation2 + $0x1c0] sm:$0xff]
    %v186 = vld [vmem:[#allocation2 + $0x1c8] sm:$0xff]
    %v187 = vld [vmem:[#allocation2 + $0x1d0] sm:$0xff]
    %v188 = vld [vmem:[#allocation2 + $0x1d8] sm:$0xff]
    %v189 = vld [vmem:[#allocation2 + $0x1e0] sm:$0xff]
    %v190 = vld [vmem:[#allocation2 + $0x1e8] sm:$0xff]
    %v191 = vld [vmem:[#allocation2 + $0x1f0] sm:$0xff]
    %v192 = vld [vmem:[#allocation2 + $0x1f8] sm:$0xff]
    %v193 = vld [vmem:[#allocation2 + $0x200] sm:$0xff]
    %v194 = vld [vmem:[#allocation2 + $0x208] sm:$0xff]
    %v195 = vld [vmem:[#allocation2 + $0x210] sm:$0xff]
    %v196 = vld [vmem:[#allocation2 + $0x218] sm:$0xff]
    %v197 = vld [vmem:[#allocation2 + $0x220] sm:$0xff]
    %v198 = vld [vmem:[#allocation2 + $0x228] sm:$0xff]
    %v199 = vld [vmem:[#allocation2 + $0x230] sm:$0xff]
    %v200 = vld [vmem:[#allocation2 + $0x238] sm:$0xff]
    %v201 = vld [vmem:[#allocation2 + $0x240] sm:$0xff]
    %v202 = vld [vmem:[#allocation2 + $0x248] sm:$0xff]
    %v203 = vld [vmem:[#allocation2 + $0x250] sm:$0xff]
    %v204 = vld [vmem:[#allocation2 + $0x258] sm:$0xff]
    %v205 = vld [vmem:[#allocation2 + $0x260] sm:$0xff]
    %v206 = vld [vmem:[#allocation2 + $0x268] sm:$0xff]
    %v207 = vld [vmem:[#allocation2 + $0x270] sm:$0xff]
    %v208 = vld [vmem:[#allocation2 + $0x278] sm:$0xff]
    %v209 = vld [vmem:[#allocation2 + $0x280] sm:$0xff]
    %v210 = vld [vmem:[#allocation2 + $0x288] sm:$0xff]
    %v211 = vld [vmem:[#allocation2 + $0x290] sm:$0xff]
    %v212 = vld [vmem:[#allocation2 + $0x298] sm:$0xff]
    %v213 = vld [vmem:[#allocation2 + $0x2a0] sm:$0xff]
    %v214 = vld [vmem:[#allocation2 + $0x2a8] sm:$0xff]
    %v215 = vld [vmem:[#allocation2 + $0x2b0] sm:$0xff]
    %v216 = vld [vmem:[#allocation2 + $0x2b8] sm:$0xff]
    %v217 = vld [vmem:[#allocation2 + $0x2c0] sm:$0xff]
    %v218 = vld [vmem:[#allocation2 + $0x2c8] sm:$0xff]
    %v219 = vld [vmem:[#allocation2 + $0x2d0] sm:$0xff]
    %v220 = vld [vmem:[#allocation2 + $0x2d8] sm:$0xff]
    %v221 = vld [vmem:[#allocation2 + $0x2e0] sm:$0xff]
    %v222 = vld [vmem:[#allocation2 + $0x2e8] sm:$0xff]
    %v223 = vld [vmem:[#allocation2 + $0x2f0] sm:$0xff]
    %v224 = vld [vmem:[#allocation2 + $0x2f8] sm:$0xff]
    %v225 = vld [vmem:[#allocation2 + $0x300] sm:$0xff]
    %v226 = vld [vmem:[#allocation2 + $0x308] sm:$0xff]
    %v227 = vld [vmem:[#allocation2 + $0x310] sm:$0xff]
    %v228 = vld [vmem:[#allocation2 + $0x318] sm:$0xff]
    %v229 = vld [vmem:[#allocation2 + $0x320] sm:$0xff]
    %v230 = vld [vmem:[#allocation2 + $0x328] sm:$0xff]
    %v231 = vld [vmem:[#allocation2 + $0x330] sm:$0xff]
    %v232 = vld [vmem:[#allocation2 + $0x338] sm:$0xff]
    %v233 = vld [vmem:[#allocation2 + $0x340] sm:$0xff]
    %v234 = vld [vmem:[#allocation2 + $0x348] sm:$0xff]
    %v235 = vld [vmem:[#allocation2 + $0x350] sm:$0xff]
    %v236 = vld [vmem:[#allocation2 + $0x358] sm:$0xff]
    %v237 = vld [vmem:[#allocation2 + $0x360] sm:$0xff]
    %v238 = vld [vmem:[#allocation2 + $0x368] sm:$0xff]
    %v239 = vld [vmem:[#allocation2 + $0x370] sm:$0xff]
    %v240 = vld [vmem:[#allocation2 + $0x378] sm:$0xff]
    %v241 = vld [vmem:[#allocation2 + $0x380] sm:$0xff]
    %v242 = vld [vmem:[#allocation2 + $0x388] sm:$0xff]
    %v243 = vld [vmem:[#allocation2 + $0x390] sm:$0xff]
    %v244 = vld [vmem:[#allocation2 + $0x398] sm:$0xff]
    %v245 = vld [vmem:[#allocation2 + $0x3a0] sm:$0xff]
    %v246 = vld [vmem:[#allocation2 + $0x3a8] sm:$0xff]
    %v247 = vld [vmem:[#allocation2 + $0x3b0] sm:$0xff]
    %v248 = vld [vmem:[#allocation2 + $0x3b8] sm:$0xff]
    %v249 = vld [vmem:[#allocation2 + $0x3c0] sm:$0xff]
    %v250 = vld [vmem:[#allocation2 + $0x3c8] sm:$0xff]
    %v251 = vld [vmem:[#allocation2 + $0x3d0] sm:$0xff]
    %v252 = vld [vmem:[#allocation2 + $0x3d8] sm:$0xff]
    %v253 = vld [vmem:[#allocation2 + $0x3e0] sm:$0xff]
    %v254 = vld [vmem:[#allocation2 + $0x3e8] sm:$0xff]
    %v255 = vld [vmem:[#allocation2 + $0x3f0] sm:$0xff]
    %v256 = vld [vmem:[#allocation2 + $0x3f8] sm:$0xff]
    %v257 = vld [vmem:[#allocation2 + $0x400] sm:$0xff]
    %v258 = vld [vmem:[#allocation2 + $0x408] sm:$0xff]
    %v259 = vld [vmem:[#allocation2 + $0x410] sm:$0xff]
    %v260 = vld [vmem:[#allocation2 + $0x418] sm:$0xff]
    %v261 = vld [vmem:[#allocation2 + $0x420] sm:$0xff]
    %v262 = vld [vmem:[#allocation2 + $0x428] sm:$0xff]
    %v263 = vld [vmem:[#allocation2 + $0x430] sm:$0xff]
    %v264 = vld [vmem:[#allocation2 + $0x438] sm:$0xff]
    %v265 = vld [vmem:[#allocation2 + $0x440] sm:$0xff]
    %v266 = vld [vmem:[#allocation2 + $0x448] sm:$0xff]
    %v267 = vld [vmem:[#allocation2 + $0x450] sm:$0xff]
    %v268 = vld [vmem:[#allocation2 + $0x458] sm:$0xff]
    %v269 = vld [vmem:[#allocation2 + $0x460] sm:$0xff]
    %v270 = vld [vmem:[#allocation2 + $0x468] sm:$0xff]
    %v271 = vld [vmem:[#allocation2 + $0x470] sm:$0xff]
    %v272 = vld [vmem:[#allocation2 + $0x478] sm:$0xff]
    %v273 = vld [vmem:[#allocation2 + $0x480] sm:$0xff]
    %v274 = vld [vmem:[#allocation2 + $0x488] sm:$0xff]
    %v275 = vld [vmem:[#allocation2 + $0x490] sm:$0xff]
    %v276 = vld [vmem:[#allocation2 + $0x498] sm:$0xff]
    %v277 = vld [vmem:[#allocation2 + $0x4a0] sm:$0xff]
    %v278 = vld [vmem:[#allocation2 + $0x4a8] sm:$0xff]
    %v279 = vld [vmem:[#allocation2 + $0x4b0] sm:$0xff]
    %v280 = vld [vmem:[#allocation2 + $0x4b8] sm:$0xff]
    %v281 = vld [vmem:[#allocation2 + $0x4c0] sm:$0xff]
    %v282 = vld [vmem:[#allocation2 + $0x4c8] sm:$0xff]
    %v283 = vld [vmem:[#allocation2 + $0x4d0] sm:$0xff]
    %v284 = vld [vmem:[#allocation2 + $0x4d8] sm:$0xff]
    %v285 = vld [vmem:[#allocation2 + $0x4e0] sm:$0xff]
    %v286 = vld [vmem:[#allocation2 + $0x4e8] sm:$0xff]
    %v287 = vld [vmem:[#allocation2 + $0x4f0] sm:$0xff]
    %v288 = vld [vmem:[#allocation2 + $0x4f8] sm:$0xff]
    %v289 = vld [vmem:[#allocation2 + $0x500] sm:$0xff]
    %v290 = vld [vmem:[#allocation2 + $0x508] sm:$0xff]
    %v291 = vld [vmem:[#allocation2 + $0x510] sm:$0xff]
    %v292 = vld [vmem:[#allocation2 + $0x518] sm:$0xff]
    %v293 = vld [vmem:[#allocation2 + $0x520] sm:$0xff]
    %v294 = vld [vmem:[#allocation2 + $0x528] sm:$0xff]
    %v295 = vld [vmem:[#allocation2 + $0x530] sm:$0xff]
    %v296 = vld [vmem:[#allocation2 + $0x538] sm:$0xff]
    %v297 = vld [vmem:[#allocation2 + $0x540] sm:$0xff]
    %v298 = vld [vmem:[#allocation2 + $0x548] sm:$0xff]
    %v299 = vld [vmem:[#allocation2 + $0x550] sm:$0xff]
    %v300 = vld [vmem:[#allocation2 + $0x558] sm:$0xff]
    %v301 = vld [vmem:[#allocation2 + $0x560] sm:$0xff]
    %v302 = vld [vmem:[#allocation2 + $0x568] sm:$0xff]
    %v303 = vld [vmem:[#allocation2 + $0x570] sm:$0xff]
    %v304 = vld [vmem:[#allocation2 + $0x578] sm:$0xff]
    %v305 = vld [vmem:[#allocation2 + $0x580] sm:$0xff]
    %v306 = vld [vmem:[#allocation2 + $0x588] sm:$0xff]
    %v307 = vld [vmem:[#allocation2 + $0x590] sm:$0xff]
    %v308 = vld [vmem:[#allocation2 + $0x598] sm:$0xff]
    %v309 = vld [vmem:[#allocation2 + $0x5a0] sm:$0xff]
    %v310 = vld [vmem:[#allocation2 + $0x5a8] sm:$0xff]
    %v311 = vld [vmem:[#allocation2 + $0x5b0] sm:$0xff]
    %v312 = vld [vmem:[#allocation2 + $0x5b8] sm:$0xff]
    %v313 = vld [vmem:[#allocation2 + $0x5c0] sm:$0xff]
    %v314 = vld [vmem:[#allocation2 + $0x5c8] sm:$0xff]
    %v315 = vld [vmem:[#allocation2 + $0x5d0] sm:$0xff]
    %v316 = vld [vmem:[#allocation2 + $0x5d8] sm:$0xff]
    %v317 = vld [vmem:[#allocation2 + $0x5e0] sm:$0xff]
    %v318 = vld [vmem:[#allocation2 + $0x5e8] sm:$0xff]
    %v319 = vld [vmem:[#allocation2 + $0x5f0] sm:$0xff]
    %v320 = vld [vmem:[#allocation2 + $0x5f8] sm:$0xff]
    %v321 = vld [vmem:[#allocation2 + $0x600] sm:$0xff]
    %v322 = vld [vmem:[#allocation2 + $0x608] sm:$0xff]
    %v323 = vld [vmem:[#allocation2 + $0x610] sm:$0xff]
    %v324 = vld [vmem:[#allocation2 + $0x618] sm:$0xff]
    %v325 = vld [vmem:[#allocation2 + $0x620] sm:$0xff]
    %v326 = vld [vmem:[#allocation2 + $0x628] sm:$0xff]
    %v327 = vld [vmem:[#allocation2 + $0x630] sm:$0xff]
    %v328 = vld [vmem:[#allocation2 + $0x638] sm:$0xff]
    %v329 = vld [vmem:[#allocation2 + $0x640] sm:$0xff]
    %v330 = vld [vmem:[#allocation2 + $0x648] sm:$0xff]
    %v331 = vld [vmem:[#allocation2 + $0x650] sm:$0xff]
    %v332 = vld [vmem:[#allocation2 + $0x658] sm:$0xff]
    %v333 = vld [vmem:[#allocation2 + $0x660] sm:$0xff]
    %v334 = vld [vmem:[#allocation2 + $0x668] sm:$0xff]
    %v335 = vld [vmem:[#allocation2 + $0x670] sm:$0xff]
    %v336 = vld [vmem:[#allocation2 + $0x678] sm:$0xff]
    %v337 = vld [vmem:[#allocation2 + $0x680] sm:$0xff]
    %v338 = vld [vmem:[#allocation2 + $0x688] sm:$0xff]
    %v339 = vld [vmem:[#allocation2 + $0x690] sm:$0xff]
    %v340 = vld [vmem:[#allocation2 + $0x698] sm:$0xff]
    %v341 = vld [vmem:[#allocation2 + $0x6a0] sm:$0xff]
    %v342 = vld [vmem:[#allocation2 + $0x6a8] sm:$0xff]
    %v343 = vld [vmem:[#allocation2 + $0x6b0] sm:$0xff]
    %v344 = vld [vmem:[#allocation2 + $0x6b8] sm:$0xff]
    %v345 = vld [vmem:[#allocation2 + $0x6c0] sm:$0xff]
    %v346 = vld [vmem:[#allocation2 + $0x6c8] sm:$0xff]
    %v347 = vld [vmem:[#allocation2 + $0x6d0] sm:$0xff]
    %v348 = vld [vmem:[#allocation2 + $0x6d8] sm:$0xff]
    %v349 = vld [vmem:[#allocation2 + $0x6e0] sm:$0xff]
    %v350 = vld [vmem:[#allocation2 + $0x6e8] sm:$0xff]
    %v351 = vld [vmem:[#allocation2 + $0x6f0] sm:$0xff]
    %v352 = vld [vmem:[#allocation2 + $0x6f8] sm:$0xff]
    %v353 = vld [vmem:[#allocation2 + $0x700] sm:$0xff]
    %v354 = vld [vmem:[#allocation2 + $0x708] sm:$0xff]
    %v355 = vld [vmem:[#allocation2 + $0x710] sm:$0xff]
    %v356 = vld [vmem:[#allocation2 + $0x718] sm:$0xff]
    %v357 = vld [vmem:[#allocation2 + $0x720] sm:$0xff]
    %v358 = vld [vmem:[#allocation2 + $0x728] sm:$0xff]
    %v359 = vld [vmem:[#allocation2 + $0x730] sm:$0xff]
    %v360 = vld [vmem:[#allocation2 + $0x738] sm:$0xff]
    %v361 = vld [vmem:[#allocation2 + $0x740] sm:$0xff]
    %v362 = vld [vmem:[#allocation2 + $0x748] sm:$0xff]
    %v363 = vld [vmem:[#allocation2 + $0x750] sm:$0xff]
    %v364 = vld [vmem:[#allocation2 + $0x758] sm:$0xff]
    %v365 = vld [vmem:[#allocation2 + $0x760] sm:$0xff]
    %v366 = vld [vmem:[#allocation2 + $0x768] sm:$0xff]
    %v367 = vld [vmem:[#allocation2 + $0x770] sm:$0xff]
    %v368 = vld [vmem:[#allocation2 + $0x778] sm:$0xff]
    %v369 = vld [vmem:[#allocation2 + $0x780] sm:$0xff]
    %v370 = vld [vmem:[#allocation2 + $0x788] sm:$0xff]
    %v371 = vld [vmem:[#allocation2 + $0x790] sm:$0xff]
    %v372 = vld [vmem:[#allocation2 + $0x798] sm:$0xff]
    %v373 = vld [vmem:[#allocation2 + $0x7a0] sm:$0xff]
    %v374 = vld [vmem:[#allocation2 + $0x7a8] sm:$0xff]
    %v375 = vld [vmem:[#allocation2 + $0x7b0] sm:$0xff]
    %v376 = vld [vmem:[#allocation2 + $0x7b8] sm:$0xff]
    %v377 = vld [vmem:[#allocation2 + $0x7c0] sm:$0xff]
    %v378 = vld [vmem:[#allocation2 + $0x7c8] sm:$0xff]
    %v379 = vld [vmem:[#allocation2 + $0x7d0] sm:$0xff]
    %v380 = vld [vmem:[#allocation2 + $0x7d8] sm:$0xff]
    %v381 = vld [vmem:[#allocation2 + $0x7e0] sm:$0xff]
    %v382 = vld [vmem:[#allocation2 + $0x7e8] sm:$0xff]
    %v383 = vld [vmem:[#allocation2 + $0x7f0] sm:$0xff]
    %v384 = vld [vmem:[#allocation2 + $0x7f8] sm:$0xff]
    %v385 = vld [vmem:[#allocation2 + $0x800] sm:$0xff]
    %v386 = vld [vmem:[#allocation2 + $0x808] sm:$0xff]
    %v387 = vld [vmem:[#allocation2 + $0x810] sm:$0xff]
    %v388 = vld [vmem:[#allocation2 + $0x818] sm:$0xff]
    %v389 = vld [vmem:[#allocation2 + $0x820] sm:$0xff]
    %v390 = vld [vmem:[#allocation2 + $0x828] sm:$0xff]
    %v391 = vld [vmem:[#allocation2 + $0x830] sm:$0xff]
    %v392 = vld [vmem:[#allocation2 + $0x838] sm:$0xff]
    %v393 = vld [vmem:[#allocation2 + $0x840] sm:$0xff]
    %v394 = vld [vmem:[#allocation2 + $0x848] sm:$0xff]
    %v395 = vld [vmem:[#allocation2 + $0x850] sm:$0xff]
    %v396 = vld [vmem:[#allocation2 + $0x858] sm:$0xff]
    %v397 = vld [vmem:[#allocation2 + $0x860] sm:$0xff]
    %v398 = vld [vmem:[#allocation2 + $0x868] sm:$0xff]
    %v399 = vld [vmem:[#allocation2 + $0x870] sm:$0xff]
    %v400 = vld [vmem:[#allocation2 + $0x878] sm:$0xff]
    %v401 = vld [vmem:[#allocation2 + $0x880] sm:$0xff]
    %v402 = vld [vmem:[#allocation2 + $0x888] sm:$0xff]
    %v403 = vld [vmem:[#allocation2 + $0x890] sm:$0xff]
    %v404 = vld [vmem:[#allocation2 + $0x898] sm:$0xff]
    %v405 = vld [vmem:[#allocation2 + $0x8a0] sm:$0xff]
    %v406 = vld [vmem:[#allocation2 + $0x8a8] sm:$0xff]
    %v407 = vld [vmem:[#allocation2 + $0x8b0] sm:$0xff]
    %v408 = vld [vmem:[#allocation2 + $0x8b8] sm:$0xff]
    %v409 = vld [vmem:[#allocation2 + $0x8c0] sm:$0xff]
    %v410 = vld [vmem:[#allocation2 + $0x8c8] sm:$0xff]
    %v411 = vld [vmem:[#allocation2 + $0x8d0] sm:$0xff]
    %v412 = vld [vmem:[#allocation2 + $0x8d8] sm:$0xff]
    %v413 = vld [vmem:[#allocation2 + $0x8e0] sm:$0xff]
    %v414 = vld [vmem:[#allocation2 + $0x8e8] sm:$0xff]
    %v415 = vld [vmem:[#allocation2 + $0x8f0] sm:$0xff]
    %v416 = vld [vmem:[#allocation2 + $0x8f8] sm:$0xff]
    %v417 = vld [vmem:[#allocation2 + $0x900] sm:$0xff]
    %v418 = vld [vmem:[#allocation2 + $0x908] sm:$0xff]
    %v419 = vld [vmem:[#allocation2 + $0x910] sm:$0xff]
    %v420 = vld [vmem:[#allocation2 + $0x918] sm:$0xff]
    %v421 = vld [vmem:[#allocation2 + $0x920] sm:$0xff]
    %v422 = vld [vmem:[#allocation2 + $0x928] sm:$0xff]
    %v423 = vld [vmem:[#allocation2 + $0x930] sm:$0xff]
    %v424 = vld [vmem:[#allocation2 + $0x938] sm:$0xff]
    %v425 = vld [vmem:[#allocation2 + $0x940] sm:$0xff]
    %v426 = vld [vmem:[#allocation2 + $0x948] sm:$0xff]
    %v427 = vld [vmem:[#allocation2 + $0x950] sm:$0xff]
    %v428 = vld [vmem:[#allocation2 + $0x958] sm:$0xff]
    %v429 = vld [vmem:[#allocation2 + $0x960] sm:$0xff]
    %v430 = vld [vmem:[#allocation2 + $0x968] sm:$0xff]
    %v431 = vld [vmem:[#allocation2 + $0x970] sm:$0xff]
    %v432 = vld [vmem:[#allocation2 + $0x978] sm:$0xff]
    %v433 = vld [vmem:[#allocation2 + $0x980] sm:$0xff]
    %v434 = vld [vmem:[#allocation2 + $0x988] sm:$0xff]
    %v435 = vld [vmem:[#allocation2 + $0x990] sm:$0xff]
    %v436 = vld [vmem:[#allocation2 + $0x998] sm:$0xff]
    %v437 = vld [vmem:[#allocation2 + $0x9a0] sm:$0xff]
    %v438 = vld [vmem:[#allocation2 + $0x9a8] sm:$0xff]
    %v439 = vld [vmem:[#allocation2 + $0x9b0] sm:$0xff]
    %v440 = vld [vmem:[#allocation2 + $0x9b8] sm:$0xff]
    %v441 = vld [vmem:[#allocation2 + $0x9c0] sm:$0xff]
    %v442 = vld [vmem:[#allocation2 + $0x9c8] sm:$0xff]
    %v443 = vld [vmem:[#allocation2 + $0x9d0] sm:$0xff]
    %v444 = vld [vmem:[#allocation2 + $0x9d8] sm:$0xff]
    %v445 = vld [vmem:[#allocation2 + $0x9e0] sm:$0xff]
    %v446 = vld [vmem:[#allocation2 + $0x9e8] sm:$0xff]
    %v447 = vld [vmem:[#allocation2 + $0x9f0] sm:$0xff]
    %v448 = vld [vmem:[#allocation2 + $0x9f8] sm:$0xff]
    %v449 = vld [vmem:[#allocation2 + $0xa00] sm:$0xff]
    %v450 = vld [vmem:[#allocation2 + $0xa08] sm:$0xff]
    %v451 = vld [vmem:[#allocation2 + $0xa10] sm:$0xff]
    %v452 = vld [vmem:[#allocation2 + $0xa18] sm:$0xff]
    %v453 = vld [vmem:[#allocation2 + $0xa20] sm:$0xff]
    %v454 = vld [vmem:[#allocation2 + $0xa28] sm:$0xff]
    %v455 = vld [vmem:[#allocation2 + $0xa30] sm:$0xff]
    %v456 = vld [vmem:[#allocation2 + $0xa38] sm:$0xff]
    %v457 = vld [vmem:[#allocation2 + $0xa40] sm:$0xff]
    %v458 = vld [vmem:[#allocation2 + $0xa48] sm:$0xff]
    %v459 = vld [vmem:[#allocation2 + $0xa50] sm:$0xff]
    %v460 = vld [vmem:[#allocation2 + $0xa58] sm:$0xff]
    %v461 = vld [vmem:[#allocation2 + $0xa60] sm:$0xff]
    %v462 = vld [vmem:[#allocation2 + $0xa68] sm:$0xff]
    %v463 = vld [vmem:[#allocation2 + $0xa70] sm:$0xff]
    %v464 = vld [vmem:[#allocation2 + $0xa78] sm:$0xff]
    %v465 = vld [vmem:[#allocation2 + $0xa80] sm:$0xff]
    %v466 = vld [vmem:[#allocation2 + $0xa88] sm:$0xff]
    %v467 = vld [vmem:[#allocation2 + $0xa90] sm:$0xff]
    %v468 = vld [vmem:[#allocation2 + $0xa98] sm:$0xff]
    %v469 = vld [vmem:[#allocation2 + $0xaa0] sm:$0xff]
    %v470 = vld [vmem:[#allocation2 + $0xaa8] sm:$0xff]
    %v471 = vld [vmem:[#allocation2 + $0xab0] sm:$0xff]
    %v472 = vld [vmem:[#allocation2 + $0xab8] sm:$0xff]
    %v473 = vld [vmem:[#allocation2 + $0xac0] sm:$0xff]
    %v474 = vld [vmem:[#allocation2 + $0xac8] sm:$0xff]
    %v475 = vld [vmem:[#allocation2 + $0xad0] sm:$0xff]
    %v476 = vld [vmem:[#allocation2 + $0xad8] sm:$0xff]
    %v477 = vld [vmem:[#allocation2 + $0xae0] sm:$0xff]
    %v478 = vld [vmem:[#allocation2 + $0xae8] sm:$0xff]
    %v479 = vld [vmem:[#allocation2 + $0xaf0] sm:$0xff]
    %v480 = vld [vmem:[#allocation2 + $0xaf8] sm:$0xff]
    %v481 = vld [vmem:[#allocation2 + $0xb00] sm:$0xff]
    %v482 = vld [vmem:[#allocation2 + $0xb08] sm:$0xff]
    %v483 = vld [vmem:[#allocation2 + $0xb10] sm:$0xff]
    %v484 = vld [vmem:[#allocation2 + $0xb18] sm:$0xff]
    %v485 = vld [vmem:[#allocation2 + $0xb20] sm:$0xff]
    %v486 = vld [vmem:[#allocation2 + $0xb28] sm:$0xff]
    %v487 = vld [vmem:[#allocation2 + $0xb30] sm:$0xff]
    %v488 = vld [vmem:[#allocation2 + $0xb38] sm:$0xff]
    %v489 = vld [vmem:[#allocation2 + $0xb40] sm:$0xff]
    %v490 = vld [vmem:[#allocation2 + $0xb48] sm:$0xff]
    %v491 = vld [vmem:[#allocation2 + $0xb50] sm:$0xff]
    %v492 = vld [vmem:[#allocation2 + $0xb58] sm:$0xff]
    %v493 = vld [vmem:[#allocation2 + $0xb60] sm:$0xff]
    %v494 = vld [vmem:[#allocation2 + $0xb68] sm:$0xff]
    %v495 = vld [vmem:[#allocation2 + $0xb70] sm:$0xff]
    %v496 = vld [vmem:[#allocation2 + $0xb78] sm:$0xff]
    %v497 = vld [vmem:[#allocation2 + $0xb80] sm:$0xff]
    %v498 = vld [vmem:[#allocation2 + $0xb88] sm:$0xff]
    %v499 = vld [vmem:[#allocation2 + $0xb90] sm:$0xff]
    %v500 = vld [vmem:[#allocation2 + $0xb98] sm:$0xff]
    %v501 = vld [vmem:[#allocation2 + $0xba0] sm:$0xff]
    %v502 = vld [vmem:[#allocation2 + $0xba8] sm:$0xff]
    %v503 = vld [vmem:[#allocation2 + $0xbb0] sm:$0xff]
    %v504 = vld [vmem:[#allocation2 + $0xbb8] sm:$0xff]
    %v505 = vld [vmem:[#allocation2 + $0xbc0] sm:$0xff]
    %v506 = vld [vmem:[#allocation2 + $0xbc8] sm:$0xff]
    %v507 = vld [vmem:[#allocation2 + $0xbd0] sm:$0xff]
    %v508 = vld [vmem:[#allocation2 + $0xbd8] sm:$0xff]
    %v509 = vld [vmem:[#allocation2 + $0xbe0] sm:$0xff]
    %v510 = vld [vmem:[#allocation2 + $0xbe8] sm:$0xff]
    %v511 = vld [vmem:[#allocation2 + $0xbf0] sm:$0xff]
    %v512 = vld [vmem:[#allocation2 + $0xbf8] sm:$0xff]
    %v513 = vld [vmem:[#allocation2 + $0xc00] sm:$0xff]
    %v514 = vld [vmem:[#allocation2 + $0xc08] sm:$0xff]
    %v515 = vld [vmem:[#allocation2 + $0xc10] sm:$0xff]
    %v516 = vld [vmem:[#allocation2 + $0xc18] sm:$0xff]
    %v517 = vld [vmem:[#allocation2 + $0xc20] sm:$0xff]
    %v518 = vld [vmem:[#allocation2 + $0xc28] sm:$0xff]
    %v519 = vld [vmem:[#allocation2 + $0xc30] sm:$0xff]
    %v520 = vld [vmem:[#allocation2 + $0xc38] sm:$0xff]
    %v521 = vld [vmem:[#allocation2 + $0xc40] sm:$0xff]
    %v522 = vld [vmem:[#allocation2 + $0xc48] sm:$0xff]
    %v523 = vld [vmem:[#allocation2 + $0xc50] sm:$0xff]
    %v524 = vld [vmem:[#allocation2 + $0xc58] sm:$0xff]
    %v525 = vld [vmem:[#allocation2 + $0xc60] sm:$0xff]
    %v526 = vld [vmem:[#allocation2 + $0xc68] sm:$0xff]
    %v527 = vld [vmem:[#allocation2 + $0xc70] sm:$0xff]
    %v528 = vld [vmem:[#allocation2 + $0xc78] sm:$0xff]
    %v529 = vld [vmem:[#allocation2 + $0xc80] sm:$0xff]
    %v530 = vld [vmem:[#allocation2 + $0xc88] sm:$0xff]
    %v531 = vld [vmem:[#allocation2 + $0xc90] sm:$0xff]
    %v532 = vld [vmem:[#allocation2 + $0xc98] sm:$0xff]
    %v533 = vld [vmem:[#allocation2 + $0xca0] sm:$0xff]
    %v534 = vld [vmem:[#allocation2 + $0xca8] sm:$0xff]
    %v535 = vld [vmem:[#allocation2 + $0xcb0] sm:$0xff]
    %v536 = vld [vmem:[#allocation2 + $0xcb8] sm:$0xff]
    %v537 = vld [vmem:[#allocation2 + $0xcc0] sm:$0xff]
    %v538 = vld [vmem:[#allocation2 + $0xcc8] sm:$0xff]
    %v539 = vld [vmem:[#allocation2 + $0xcd0] sm:$0xff]
    %v540 = vld [vmem:[#allocation2 + $0xcd8] sm:$0xff]
    %v541 = vld [vmem:[#allocation2 + $0xce0] sm:$0xff]
    %v542 = vld [vmem:[#allocation2 + $0xce8] sm:$0xff]
    %v543 = vld [vmem:[#allocation2 + $0xcf0] sm:$0xff]
    %v544 = vld [vmem:[#allocation2 + $0xcf8] sm:$0xff]
    %v545 = vld [vmem:[#allocation2 + $0xd00] sm:$0xff]
    %v546 = vld [vmem:[#allocation2 + $0xd08] sm:$0xff]
    %v547 = vld [vmem:[#allocation2 + $0xd10] sm:$0xff]
    %v548 = vld [vmem:[#allocation2 + $0xd18] sm:$0xff]
    %v549 = vld [vmem:[#allocation2 + $0xd20] sm:$0xff]
    %v550 = vld [vmem:[#allocation2 + $0xd28] sm:$0xff]
    %v551 = vld [vmem:[#allocation2 + $0xd30] sm:$0xff]
    %v552 = vld [vmem:[#allocation2 + $0xd38] sm:$0xff]
    %v553 = vld [vmem:[#allocation2 + $0xd40] sm:$0xff]
    %v554 = vld [vmem:[#allocation2 + $0xd48] sm:$0xff]
    %v555 = vld [vmem:[#allocation2 + $0xd50] sm:$0xff]
    %v556 = vld [vmem:[#allocation2 + $0xd58] sm:$0xff]
    %v557 = vld [vmem:[#allocation2 + $0xd60] sm:$0xff]
    %v558 = vld [vmem:[#allocation2 + $0xd68] sm:$0xff]
    %v559 = vld [vmem:[#allocation2 + $0xd70] sm:$0xff]
    %v560 = vld [vmem:[#allocation2 + $0xd78] sm:$0xff]
    %v561 = vld [vmem:[#allocation2 + $0xd80] sm:$0xff]
    %v562 = vld [vmem:[#allocation2 + $0xd88] sm:$0xff]
    %v563 = vld [vmem:[#allocation2 + $0xd90] sm:$0xff]
    %v564 = vld [vmem:[#allocation2 + $0xd98] sm:$0xff]
    %v565 = vld [vmem:[#allocation2 + $0xda0] sm:$0xff]
    %v566 = vld [vmem:[#allocation2 + $0xda8] sm:$0xff]
    %v567 = vld [vmem:[#allocation2 + $0xdb0] sm:$0xff]
    %v568 = vld [vmem:[#allocation2 + $0xdb8] sm:$0xff]
    %v569 = vld [vmem:[#allocation2 + $0xdc0] sm:$0xff]
    %v570 = vld [vmem:[#allocation2 + $0xdc8] sm:$0xff]
    %v571 = vld [vmem:[#allocation2 + $0xdd0] sm:$0xff]
    %v572 = vld [vmem:[#allocation2 + $0xdd8] sm:$0xff]
    %v573 = vld [vmem:[#allocation2 + $0xde0] sm:$0xff]
    %v574 = vld [vmem:[#allocation2 + $0xde8] sm:$0xff]
    %v575 = vld [vmem:[#allocation2 + $0xdf0] sm:$0xff]
    %v576 = vld [vmem:[#allocation2 + $0xdf8] sm:$0xff]
    %v577 = vld [vmem:[#allocation2 + $0xe00] sm:$0xff]
    %v578 = vld [vmem:[#allocation2 + $0xe08] sm:$0xff]
    %v579 = vld [vmem:[#allocation2 + $0xe10] sm:$0xff]
    %v580 = vld [vmem:[#allocation2 + $0xe18] sm:$0xff]
    %v581 = vld [vmem:[#allocation2 + $0xe20] sm:$0xff]
    %v582 = vld [vmem:[#allocation2 + $0xe28] sm:$0xff]
    %v583 = vld [vmem:[#allocation2 + $0xe30] sm:$0xff]
    %v584 = vld [vmem:[#allocation2 + $0xe38] sm:$0xff]
    %v585 = vld [vmem:[#allocation2 + $0xe40] sm:$0xff]
    %v586 = vld [vmem:[#allocation2 + $0xe48] sm:$0xff]
    %v587 = vld [vmem:[#allocation2 + $0xe50] sm:$0xff]
    %v588 = vld [vmem:[#allocation2 + $0xe58] sm:$0xff]
    %v589 = vld [vmem:[#allocation2 + $0xe60] sm:$0xff]
    %v590 = vld [vmem:[#allocation2 + $0xe68] sm:$0xff]
    %v591 = vld [vmem:[#allocation2 + $0xe70] sm:$0xff]
    %v592 = vld [vmem:[#allocation2 + $0xe78] sm:$0xff]
    %v593 = vld [vmem:[#allocation2 + $0xe80] sm:$0xff]
    %v594 = vld [vmem:[#allocation2 + $0xe88] sm:$0xff]
    %v595 = vld [vmem:[#allocation2 + $0xe90] sm:$0xff]
    %v596 = vld [vmem:[#allocation2 + $0xe98] sm:$0xff]
    %v597 = vld [vmem:[#allocation2 + $0xea0] sm:$0xff]
    %v598 = vld [vmem:[#allocation2 + $0xea8] sm:$0xff]
    %v599 = vld [vmem:[#allocation2 + $0xeb0] sm:$0xff]
    %v600 = vld [vmem:[#allocation2 + $0xeb8] sm:$0xff]
    %v601 = vld [vmem:[#allocation2 + $0xec0] sm:$0xff]
    %v602 = vld [vmem:[#allocation2 + $0xec8] sm:$0xff]
    %v603 = vld [vmem:[#allocation2 + $0xed0] sm:$0xff]
    %v604 = vld [vmem:[#allocation2 + $0xed8] sm:$0xff]
    %v605 = vld [vmem:[#allocation2 + $0xee0] sm:$0xff]
    %v606 = vld [vmem:[#allocation2 + $0xee8] sm:$0xff]
    %v607 = vld [vmem:[#allocation2 + $0xef0] sm:$0xff]
    %v608 = vld [vmem:[#allocation2 + $0xef8] sm:$0xff]
    %v609 = vld [vmem:[#allocation2 + $0xf00] sm:$0xff]
    %v610 = vld [vmem:[#allocation2 + $0xf08] sm:$0xff]
    %v611 = vld [vmem:[#allocation2 + $0xf10] sm:$0xff]
    %v612 = vld [vmem:[#allocation2 + $0xf18] sm:$0xff]
    %v613 = vld [vmem:[#allocation2 + $0xf20] sm:$0xff]
    %v614 = vld [vmem:[#allocation2 + $0xf28] sm:$0xff]
    %v615 = vld [vmem:[#allocation2 + $0xf30] sm:$0xff]
    %v616 = vld [vmem:[#allocation2 + $0xf38] sm:$0xff]
    %v617 = vld [vmem:[#allocation2 + $0xf40] sm:$0xff]
    %v618 = vld [vmem:[#allocation2 + $0xf48] sm:$0xff]
    %v619 = vld [vmem:[#allocation2 + $0xf50] sm:$0xff]
    %v620 = vld [vmem:[#allocation2 + $0xf58] sm:$0xff]
    %v621 = vld [vmem:[#allocation2 + $0xf60] sm:$0xff]
    %v622 = vld [vmem:[#allocation2 + $0xf68] sm:$0xff]
    %v623 = vld [vmem:[#allocation2 + $0xf70] sm:$0xff]
    %v624 = vld [vmem:[#allocation2 + $0xf78] sm:$0xff]
    %v625 = vld [vmem:[#allocation2 + $0xf80] sm:$0xff]
    %v626 = vld [vmem:[#allocation2 + $0xf88] sm:$0xff]
    %v627 = vld [vmem:[#allocation2 + $0xf90] sm:$0xff]
    %v628 = vld [vmem:[#allocation2 + $0xf98] sm:$0xff]
    %v629 = vld [vmem:[#allocation2 + $0xfa0] sm:$0xff]
    %v630 = vld [vmem:[#allocation2 + $0xfa8] sm:$0xff]
    %v631 = vld [vmem:[#allocation2 + $0xfb0] sm:$0xff]
    %v632 = vld [vmem:[#allocation2 + $0xfb8] sm:$0xff]
    %v633 = vld [vmem:[#allocation2 + $0xfc0] sm:$0xff]
    %v634 = vld [vmem:[#allocation2 + $0xfc8] sm:$0xff]
    %v635 = vld [vmem:[#allocation2 + $0xfd0] sm:$0xff]
    %v636 = vld [vmem:[#allocation2 + $0xfd8] sm:$0xff]
    %v637 = vld [vmem:[#allocation2 + $0xfe0] sm:$0xff]
    %v638 = vld [vmem:[#allocation2 + $0xfe8] sm:$0xff]
    %v639 = vld [vmem:[#allocation2 + $0xff0] sm:$0xff]
    %v640 = vld [vmem:[#allocation2 + $0xff8] sm:$0xff]
    %v641 = vld [vmem:[#allocation2 + $0x1000] sm:$0xff]
    %v642 = vld [vmem:[#allocation2 + $0x1008] sm:$0xff]
    %v643 = vld [vmem:[#allocation2 + $0x1010] sm:$0xff]
    %v644 = vld [vmem:[#allocation2 + $0x1018] sm:$0xff]
    %v645 = vld [vmem:[#allocation2 + $0x1020] sm:$0xff]
    %v646 = vld [vmem:[#allocation2 + $0x1028] sm:$0xff]
    %v647 = vld [vmem:[#allocation2 + $0x1030] sm:$0xff]
    %v648 = vld [vmem:[#allocation2 + $0x1038] sm:$0xff]
    %v649 = vld [vmem:[#allocation2 + $0x1040] sm:$0xff]
    %v650 = vld [vmem:[#allocation2 + $0x1048] sm:$0xff]
    %v651 = vld [vmem:[#allocation2 + $0x1050] sm:$0xff]
    %v652 = vld [vmem:[#allocation2 + $0x1058] sm:$0xff]
    %v653 = vld [vmem:[#allocation2 + $0x1060] sm:$0xff]
    %v654 = vld [vmem:[#allocation2 + $0x1068] sm:$0xff]
    %v655 = vld [vmem:[#allocation2 + $0x1070] sm:$0xff]
    %v656 = vld [vmem:[#allocation2 + $0x1078] sm:$0xff]
    %v657 = vld [vmem:[#allocation2 + $0x1080] sm:$0xff]
    %v658 = vld [vmem:[#allocation2 + $0x1088] sm:$0xff]
    %v659 = vld [vmem:[#allocation2 + $0x1090] sm:$0xff]
    %v660 = vld [vmem:[#allocation2 + $0x1098] sm:$0xff]
    %v661 = vld [vmem:[#allocation2 + $0x10a0] sm:$0xff]
    %v662 = vld [vmem:[#allocation2 + $0x10a8] sm:$0xff]
    %v663 = vld [vmem:[#allocation2 + $0x10b0] sm:$0xff]
    %v664 = vld [vmem:[#allocation2 + $0x10b8] sm:$0xff]
    %v665 = vld [vmem:[#allocation2 + $0x10c0] sm:$0xff]
    %v666 = vld [vmem:[#allocation2 + $0x10c8] sm:$0xff]
    %v667 = vld [vmem:[#allocation2 + $0x10d0] sm:$0xff]
    %v668 = vld [vmem:[#allocation2 + $0x10d8] sm:$0xff]
    %v669 = vld [vmem:[#allocation2 + $0x10e0] sm:$0xff]
    %v670 = vld [vmem:[#allocation2 + $0x10e8] sm:$0xff]
    %v671 = vld [vmem:[#allocation2 + $0x10f0] sm:$0xff]
    %v672 = vld [vmem:[#allocation2 + $0x10f8] sm:$0xff]
    %v673 = vld [vmem:[#allocation2 + $0x1100] sm:$0xff]
    %v674 = vld [vmem:[#allocation2 + $0x1108] sm:$0xff]
    %v675 = vld [vmem:[#allocation2 + $0x1110] sm:$0xff]
    %v676 = vld [vmem:[#allocation2 + $0x1118] sm:$0xff]
    %v677 = vld [vmem:[#allocation2 + $0x1120] sm:$0xff]
    %v678 = vld [vmem:[#allocation2 + $0x1128] sm:$0xff]
    %v679 = vld [vmem:[#allocation2 + $0x1130] sm:$0xff]
    %v680 = vld [vmem:[#allocation2 + $0x1138] sm:$0xff]
    %v681 = vld [vmem:[#allocation2 + $0x1140] sm:$0xff]
    %v682 = vld [vmem:[#allocation2 + $0x1148] sm:$0xff]
    %v683 = vld [vmem:[#allocation2 + $0x1150] sm:$0xff]
    %v684 = vld [vmem:[#allocation2 + $0x1158] sm:$0xff]
    %v685 = vld [vmem:[#allocation2 + $0x1160] sm:$0xff]
    %v686 = vld [vmem:[#allocation2 + $0x1168] sm:$0xff]
    %v687 = vld [vmem:[#allocation2 + $0x1170] sm:$0xff]
    %v688 = vld [vmem:[#allocation2 + $0x1178] sm:$0xff]
    %v689 = vld [vmem:[#allocation2 + $0x1180] sm:$0xff]
    %v690 = vld [vmem:[#allocation2 + $0x1188] sm:$0xff]
    %v691 = vld [vmem:[#allocation2 + $0x1190] sm:$0xff]
    %v692 = vld [vmem:[#allocation2 + $0x1198] sm:$0xff]
    %v693 = vld [vmem:[#allocation2 + $0x11a0] sm:$0xff]
    %v694 = vld [vmem:[#allocation2 + $0x11a8] sm:$0xff]
    %v695 = vld [vmem:[#allocation2 + $0x11b0] sm:$0xff]
    %v696 = vld [vmem:[#allocation2 + $0x11b8] sm:$0xff]
    %v697 = vld [vmem:[#allocation2 + $0x11c0] sm:$0xff]
    %v698 = vld [vmem:[#allocation2 + $0x11c8] sm:$0xff]
    %v699 = vld [vmem:[#allocation2 + $0x11d0] sm:$0xff]
    %v700 = vld [vmem:[#allocation2 + $0x11d8] sm:$0xff]
    %v701 = vld [vmem:[#allocation2 + $0x11e0] sm:$0xff]
    %v702 = vld [vmem:[#allocation2 + $0x11e8] sm:$0xff]
    %v703 = vld [vmem:[#allocation2 + $0x11f0] sm:$0xff]
    %v704 = vld [vmem:[#allocation2 + $0x11f8] sm:$0xff]
    %v705 = vld [vmem:[#allocation2 + $0x1200] sm:$0xff]
    %v706 = vld [vmem:[#allocation2 + $0x1208] sm:$0xff]
    %v707 = vld [vmem:[#allocation2 + $0x1210] sm:$0xff]
    %v708 = vld [vmem:[#allocation2 + $0x1218] sm:$0xff]
    %v709 = vld [vmem:[#allocation2 + $0x1220] sm:$0xff]
    %v710 = vld [vmem:[#allocation2 + $0x1228] sm:$0xff]
    %v711 = vld [vmem:[#allocation2 + $0x1230] sm:$0xff]
    %v712 = vld [vmem:[#allocation2 + $0x1238] sm:$0xff]
    %v713 = vld [vmem:[#allocation2 + $0x1240] sm:$0xff]
    %v714 = vld [vmem:[#allocation2 + $0x1248] sm:$0xff]
    %v715 = vld [vmem:[#allocation2 + $0x1250] sm:$0xff]
    %v716 = vld [vmem:[#allocation2 + $0x1258] sm:$0xff]
    %v717 = vld [vmem:[#allocation2 + $0x1260] sm:$0xff]
    %v718 = vld [vmem:[#allocation2 + $0x1268] sm:$0xff]
    %v719 = vld [vmem:[#allocation2 + $0x1270] sm:$0xff]
    %v720 = vld [vmem:[#allocation2 + $0x1278] sm:$0xff]
    %v721 = vld [vmem:[#allocation2 + $0x1280] sm:$0xff]
    %v722 = vld [vmem:[#allocation2 + $0x1288] sm:$0xff]
    %v723 = vld [vmem:[#allocation2 + $0x1290] sm:$0xff]
    %v724 = vld [vmem:[#allocation2 + $0x1298] sm:$0xff]
    %v725 = vld [vmem:[#allocation2 + $0x12a0] sm:$0xff]
    %v726 = vld [vmem:[#allocation2 + $0x12a8] sm:$0xff]
    %v727 = vld [vmem:[#allocation2 + $0x12b0] sm:$0xff]
    %v728 = vld [vmem:[#allocation2 + $0x12b8] sm:$0xff]
    %v729 = vld [vmem:[#allocation2 + $0x12c0] sm:$0xff]
    %v730 = vld [vmem:[#allocation2 + $0x12c8] sm:$0xff]
    %v731 = vld [vmem:[#allocation2 + $0x12d0] sm:$0xff]
    %v732 = vld [vmem:[#allocation2 + $0x12d8] sm:$0xff]
    %v733 = vld [vmem:[#allocation2 + $0x12e0] sm:$0xff]
    %v734 = vld [vmem:[#allocation2 + $0x12e8] sm:$0xff]
    %v735 = vld [vmem:[#allocation2 + $0x12f0] sm:$0xff]
    %v736 = vld [vmem:[#allocation2 + $0x12f8] sm:$0xff]
    %v737 = vld [vmem:[#allocation2 + $0x1300] sm:$0xff]
    %v738 = vld [vmem:[#allocation2 + $0x1308] sm:$0xff]
    %v739 = vld [vmem:[#allocation2 + $0x1310] sm:$0xff]
    %v740 = vld [vmem:[#allocation2 + $0x1318] sm:$0xff]
    %v741 = vld [vmem:[#allocation2 + $0x1320] sm:$0xff]
    %v742 = vld [vmem:[#allocation2 + $0x1328] sm:$0xff]
    %v743 = vld [vmem:[#allocation2 + $0x1330] sm:$0xff]
    %v744 = vld [vmem:[#allocation2 + $0x1338] sm:$0xff]
    %v745 = vld [vmem:[#allocation2 + $0x1340] sm:$0xff]
    %v746 = vld [vmem:[#allocation2 + $0x1348] sm:$0xff]
    %v747 = vld [vmem:[#allocation2 + $0x1350] sm:$0xff]
    %v748 = vld [vmem:[#allocation2 + $0x1358] sm:$0xff]
    %v749 = vld [vmem:[#allocation2 + $0x1360] sm:$0xff]
    %v750 = vld [vmem:[#allocation2 + $0x1368] sm:$0xff]
    %v751 = vld [vmem:[#allocation2 + $0x1370] sm:$0xff]
    %v752 = vld [vmem:[#allocation2 + $0x1378] sm:$0xff]
    %v753 = vld [vmem:[#allocation2 + $0x1380] sm:$0xff]
    %v754 = vld [vmem:[#allocation2 + $0x1388] sm:$0xff]
    %v755 = vld [vmem:[#allocation2 + $0x1390] sm:$0xff]
    %v756 = vld [vmem:[#allocation2 + $0x1398] sm:$0xff]
    %v757 = vld [vmem:[#allocation2 + $0x13a0] sm:$0xff]
    %v758 = vld [vmem:[#allocation2 + $0x13a8] sm:$0xff]
    %v759 = vld [vmem:[#allocation2 + $0x13b0] sm:$0xff]
    %v760 = vld [vmem:[#allocation2 + $0x13b8] sm:$0xff]
    %v761 = vld [vmem:[#allocation2 + $0x13c0] sm:$0xff]
    %v762 = vld [vmem:[#allocation2 + $0x13c8] sm:$0xff]
    %v763 = vld [vmem:[#allocation2 + $0x13d0] sm:$0xff]
    %v764 = vld [vmem:[#allocation2 + $0x13d8] sm:$0xff]
    %v765 = vld [vmem:[#allocation2 + $0x13e0] sm:$0xff]
    %v766 = vld [vmem:[#allocation2 + $0x13e8] sm:$0xff]
    %v767 = vld [vmem:[#allocation2 + $0x13f0] sm:$0xff]
    %v768 = vld [vmem:[#allocation2 + $0x13f8] sm:$0xff]
    %v769 = vld [vmem:[#allocation2 + $0x1400] sm:$0xff]
    %v770 = vld [vmem:[#allocation2 + $0x1408] sm:$0xff]
    %v771 = vld [vmem:[#allocation2 + $0x1410] sm:$0xff]
    %v772 = vld [vmem:[#allocation2 + $0x1418] sm:$0xff]
    %v773 = vld [vmem:[#allocation2 + $0x1420] sm:$0xff]
    %v774 = vld [vmem:[#allocation2 + $0x1428] sm:$0xff]
    %v775 = vld [vmem:[#allocation2 + $0x1430] sm:$0xff]
    %v776 = vld [vmem:[#allocation2 + $0x1438] sm:$0xff]
    %v777 = vld [vmem:[#allocation2 + $0x1440] sm:$0xff]
    %v778 = vld [vmem:[#allocation2 + $0x1448] sm:$0xff]
    %v779 = vld [vmem:[#allocation2 + $0x1450] sm:$0xff]
    %v780 = vld [vmem:[#allocation2 + $0x1458] sm:$0xff]
    %v781 = vld [vmem:[#allocation2 + $0x1460] sm:$0xff]
    %v782 = vld [vmem:[#allocation2 + $0x1468] sm:$0xff]
    %v783 = vld [vmem:[#allocation2 + $0x1470] sm:$0xff]
    %v784 = vld [vmem:[#allocation2 + $0x1478] sm:$0xff]
    %v785 = vld [vmem:[#allocation2 + $0x1480] sm:$0xff]
    %v786 = vld [vmem:[#allocation2 + $0x1488] sm:$0xff]
    %v787 = vld [vmem:[#allocation2 + $0x1490] sm:$0xff]
    %v788 = vld [vmem:[#allocation2 + $0x1498] sm:$0xff]
    %v789 = vld [vmem:[#allocation2 + $0x14a0] sm:$0xff]
    %v790 = vld [vmem:[#allocation2 + $0x14a8] sm:$0xff]
    %v791 = vld [vmem:[#allocation2 + $0x14b0] sm:$0xff]
    %v792 = vld [vmem:[#allocation2 + $0x14b8] sm:$0xff]
    %v793 = vld [vmem:[#allocation2 + $0x14c0] sm:$0xff]
    %v794 = vld [vmem:[#allocation2 + $0x14c8] sm:$0xff]
    %v795 = vld [vmem:[#allocation2 + $0x14d0] sm:$0xff]
    %v796 = vld [vmem:[#allocation2 + $0x14d8] sm:$0xff]
    %v797 = vld [vmem:[#allocation2 + $0x14e0] sm:$0xff]
    %v798 = vld [vmem:[#allocation2 + $0x14e8] sm:$0xff]
    %v799 = vld [vmem:[#allocation2 + $0x14f0] sm:$0xff]
    %v800 = vld [vmem:[#allocation2 + $0x14f8] sm:$0xff]
    %v801 = vld [vmem:[#allocation2 + $0x1500] sm:$0xff]
    %v802 = vld [vmem:[#allocation2 + $0x1508] sm:$0xff]
    %v803 = vld [vmem:[#allocation2 + $0x1510] sm:$0xff]
    %v804 = vld [vmem:[#allocation2 + $0x1518] sm:$0xff]
    %v805 = vld [vmem:[#allocation2 + $0x1520] sm:$0xff]
    %v806 = vld [vmem:[#allocation2 + $0x1528] sm:$0xff]
    %v807 = vld [vmem:[#allocation2 + $0x1530] sm:$0xff]
    %v808 = vld [vmem:[#allocation2 + $0x1538] sm:$0xff]
    %v809 = vld [vmem:[#allocation2 + $0x1540] sm:$0xff]
    %v810 = vld [vmem:[#allocation2 + $0x1548] sm:$0xff]
    %v811 = vld [vmem:[#allocation2 + $0x1550] sm:$0xff]
    %v812 = vld [vmem:[#allocation2 + $0x1558] sm:$0xff]
    %v813 = vld [vmem:[#allocation2 + $0x1560] sm:$0xff]
    %v814 = vld [vmem:[#allocation2 + $0x1568] sm:$0xff]
    %v815 = vld [vmem:[#allocation2 + $0x1570] sm:$0xff]
    %v816 = vld [vmem:[#allocation2 + $0x1578] sm:$0xff]
    %v817 = vld [vmem:[#allocation2 + $0x1580] sm:$0xff]
    %v818 = vld [vmem:[#allocation2 + $0x1588] sm:$0xff]
    %v819 = vld [vmem:[#allocation2 + $0x1590] sm:$0xff]
    %v820 = vld [vmem:[#allocation2 + $0x1598] sm:$0xff]
    %v821 = vld [vmem:[#allocation2 + $0x15a0] sm:$0xff]
    %v822 = vld [vmem:[#allocation2 + $0x15a8] sm:$0xff]
    %v823 = vld [vmem:[#allocation2 + $0x15b0] sm:$0xff]
    %v824 = vld [vmem:[#allocation2 + $0x15b8] sm:$0xff]
    %v825 = vld [vmem:[#allocation2 + $0x15c0] sm:$0xff]
    %v826 = vld [vmem:[#allocation2 + $0x15c8] sm:$0xff]
    %v827 = vld [vmem:[#allocation2 + $0x15d0] sm:$0xff]
    %v828 = vld [vmem:[#allocation2 + $0x15d8] sm:$0xff]
    %v829 = vld [vmem:[#allocation2 + $0x15e0] sm:$0xff]
    %v830 = vld [vmem:[#allocation2 + $0x15e8] sm:$0xff]
    %v831 = vld [vmem:[#allocation2 + $0x15f0] sm:$0xff]
    %v832 = vld [vmem:[#allocation2 + $0x15f8] sm:$0xff]
    %v833 = vld [vmem:[#allocation2 + $0x1600] sm:$0xff]
    %v834 = vld [vmem:[#allocation2 + $0x1608] sm:$0xff]
    %v835 = vld [vmem:[#allocation2 + $0x1610] sm:$0xff]
    %v836 = vld [vmem:[#allocation2 + $0x1618] sm:$0xff]
    %v837 = vld [vmem:[#allocation2 + $0x1620] sm:$0xff]
    %v838 = vld [vmem:[#allocation2 + $0x1628] sm:$0xff]
    %v839 = vld [vmem:[#allocation2 + $0x1630] sm:$0xff]
    %v840 = vld [vmem:[#allocation2 + $0x1638] sm:$0xff]
    %v841 = vld [vmem:[#allocation2 + $0x1640] sm:$0xff]
    %v842 = vld [vmem:[#allocation2 + $0x1648] sm:$0xff]
    %v843 = vld [vmem:[#allocation2 + $0x1650] sm:$0xff]
    %v844 = vld [vmem:[#allocation2 + $0x1658] sm:$0xff]
    %v845 = vld [vmem:[#allocation2 + $0x1660] sm:$0xff]
    %v846 = vld [vmem:[#allocation2 + $0x1668] sm:$0xff]
    %v847 = vld [vmem:[#allocation2 + $0x1670] sm:$0xff]
    %v848 = vld [vmem:[#allocation2 + $0x1678] sm:$0xff]
    %v849 = vld [vmem:[#allocation2 + $0x1680] sm:$0xff]
    %v850 = vld [vmem:[#allocation2 + $0x1688] sm:$0xff]
    %v851 = vld [vmem:[#allocation2 + $0x1690] sm:$0xff]
    %v852 = vld [vmem:[#allocation2 + $0x1698] sm:$0xff]
    %v853 = vld [vmem:[#allocation2 + $0x16a0] sm:$0xff]
    %v854 = vld [vmem:[#allocation2 + $0x16a8] sm:$0xff]
    %v855 = vld [vmem:[#allocation2 + $0x16b0] sm:$0xff]
    %v856 = vld [vmem:[#allocation2 + $0x16b8] sm:$0xff]
    %v857 = vld [vmem:[#allocation2 + $0x16c0] sm:$0xff]
    %v858 = vld [vmem:[#allocation2 + $0x16c8] sm:$0xff]
    %v859 = vld [vmem:[#allocation2 + $0x16d0] sm:$0xff]
    %v860 = vld [vmem:[#allocation2 + $0x16d8] sm:$0xff]
    %v861 = vld [vmem:[#allocation2 + $0x16e0] sm:$0xff]
    %v862 = vld [vmem:[#allocation2 + $0x16e8] sm:$0xff]
    %v863 = vld [vmem:[#allocation2 + $0x16f0] sm:$0xff]
    %v864 = vld [vmem:[#allocation2 + $0x16f8] sm:$0xff]
    %v865 = vld [vmem:[#allocation2 + $0x1700] sm:$0xff]
    %v866 = vld [vmem:[#allocation2 + $0x1708] sm:$0xff]
    %v867 = vld [vmem:[#allocation2 + $0x1710] sm:$0xff]
    %v868 = vld [vmem:[#allocation2 + $0x1718] sm:$0xff]
    %v869 = vld [vmem:[#allocation2 + $0x1720] sm:$0xff]
    %v870 = vld [vmem:[#allocation2 + $0x1728] sm:$0xff]
    %v871 = vld [vmem:[#allocation2 + $0x1730] sm:$0xff]
    %v872 = vld [vmem:[#allocation2 + $0x1738] sm:$0xff]
    %v873 = vld [vmem:[#allocation2 + $0x1740] sm:$0xff]
    %v874 = vld [vmem:[#allocation2 + $0x1748] sm:$0xff]
    %v875 = vld [vmem:[#allocation2 + $0x1750] sm:$0xff]
    %v876 = vld [vmem:[#allocation2 + $0x1758] sm:$0xff]
    %v877 = vld [vmem:[#allocation2 + $0x1760] sm:$0xff]
    %v878 = vld [vmem:[#allocation2 + $0x1768] sm:$0xff]
    %v879 = vld [vmem:[#allocation2 + $0x1770] sm:$0xff]
    %v880 = vld [vmem:[#allocation2 + $0x1778] sm:$0xff]
    %v881 = vld [vmem:[#allocation2 + $0x1780] sm:$0xff]
    %v882 = vld [vmem:[#allocation2 + $0x1788] sm:$0xff]
    %v883 = vld [vmem:[#allocation2 + $0x1790] sm:$0xff]
    %v884 = vld [vmem:[#allocation2 + $0x1798] sm:$0xff]
    %v885 = vld [vmem:[#allocation2 + $0x17a0] sm:$0xff]
    %v886 = vld [vmem:[#allocation2 + $0x17a8] sm:$0xff]
    %v887 = vld [vmem:[#allocation2 + $0x17b0] sm:$0xff]
    %v888 = vld [vmem:[#allocation2 + $0x17b8] sm:$0xff]
    %v889 = vld [vmem:[#allocation2 + $0x17c0] sm:$0xff]
    %v890 = vld [vmem:[#allocation2 + $0x17c8] sm:$0xff]
    %v891 = vld [vmem:[#allocation2 + $0x17d0] sm:$0xff]
    %v892 = vld [vmem:[#allocation2 + $0x17d8] sm:$0xff]
    %v893 = vld [vmem:[#allocation2 + $0x17e0] sm:$0xff]
    %v894 = vld [vmem:[#allocation2 + $0x17e8] sm:$0xff]
    %v895 = vld [vmem:[#allocation2 + $0x17f0] sm:$0xff]
    %v896 = vld [vmem:[#allocation2 + $0x17f8] sm:$0xff]
    %v897 = vld [vmem:[#allocation4] sm:$0xff]
    %v898 = vld [vmem:[#allocation4 + $0x8] sm:$0xff]
    %v901 = vlaneseq
    %v902 = vshrl.u32 %v901, 7
    %v903 = vsub.s32 0, %v902
    %v904 = vrot.slane %v897, %v903
    %v905 = vlaneseq
    %v906 = vshrl.u32 %v905, 7
    %v907 = vsub.s32 1, %v906
    %v908 = vrot.slane %v897, %v907
    %v909 = vlaneseq
    %v910 = vshrl.u32 %v909, 7
    %v911 = vsub.s32 2, %v910
    %v912 = vrot.slane %v897, %v911
    %v913 = vlaneseq
    %v914 = vshrl.u32 %v913, 7
    %v915 = vsub.s32 3, %v914
    %v916 = vrot.slane %v897, %v915
    %v917 = vlaneseq
    %v918 = vshrl.u32 %v917, 7
    %v919 = vsub.s32 4, %v918
    %v920 = vrot.slane %v897, %v919
    %v921 = vlaneseq
    %v922 = vshrl.u32 %v921, 7
    %v923 = vsub.s32 5, %v922
    %v924 = vrot.slane %v897, %v923
    %v925 = vlaneseq
    %v926 = vshrl.u32 %v925, 7
    %v927 = vsub.s32 6, %v926
    %v928 = vrot.slane %v897, %v927
    %v929 = vlaneseq
    %v930 = vshrl.u32 %v929, 7
    %v931 = vsub.s32 7, %v930
    %v932 = vrot.slane %v897, %v931
    %v933 = vlaneseq
    %v934 = vshrl.u32 %v933, 7
    %v935 = vsub.s32 0, %v934
    %v936 = vrot.slane %v898, %v935
    %v937 = vlaneseq
    %v938 = vshrl.u32 %v937, 7
    %v939 = vsub.s32 1, %v938
    %v940 = vrot.slane %v898, %v939
    %v941 = vlaneseq
    %v942 = vshrl.u32 %v941, 7
    %v943 = vsub.s32 2, %v942
    %v944 = vrot.slane %v898, %v943
    %v945 = vlaneseq
    %v946 = vshrl.u32 %v945, 7
    %v947 = vsub.s32 3, %v946
    %v948 = vrot.slane %v898, %v947
    %v949 = vlaneseq
    %v950 = vshrl.u32 %v949, 7
    %v951 = vsub.s32 4, %v950
    %v952 = vrot.slane %v898, %v951
    %v953 = vlaneseq
    %v954 = vshrl.u32 %v953, 7
    %v955 = vsub.s32 5, %v954
    %v956 = vrot.slane %v898, %v955
    %v957 = vlaneseq
    %v958 = vshrl.u32 %v957, 7
    %v959 = vsub.s32 6, %v958
    %v960 = vrot.slane %v898, %v959
    %v961 = vlaneseq
    %v962 = vshrl.u32 %v961, 7
    %v963 = vsub.s32 7, %v962
    %v964 = vrot.slane %v898, %v963
    %v984 = vunpack.c.l.b16 %v126
    %v985 = vunpack.c.h.b16 %v126
    %v986 = vunpack.c.l.b16 %v127
    %v987 = vunpack.c.h.b16 %v127
    %v988 = vunpack.c.l.b16 %v128
    %v989 = vunpack.c.h.b16 %v128
    %v990 = vpack.c.b16 %v984, %v984
    %v991 = vpack.c.b16 %v985, %v985
    %v992 = vpack.c.b16 %v986, %v986
    %v993 = vpack.c.b16 %v987, %v987
    %v994 = vpack.c.b16 %v988, %v988
    %v995 = vpack.c.b16 %v989, %v989
    %v1770 = vunpack.c.l.b16 %v129
    %v1771 = vunpack.c.h.b16 %v129
    %v1772 = vunpack.c.l.b16 %v130
    %v1773 = vunpack.c.h.b16 %v130
    %v1774 = vunpack.c.l.b16 %v131
    %v1775 = vunpack.c.h.b16 %v131
    %v1776 = vunpack.c.l.b16 %v132
    %v1777 = vunpack.c.h.b16 %v132
    %v1778 = vunpack.c.l.b16 %v133
    %v1779 = vunpack.c.h.b16 %v133
    %v1780 = vunpack.c.l.b16 %v134
    %v1781 = vunpack.c.h.b16 %v134
    %v1782 = vunpack.c.l.b16 %v135
    %v1783 = vunpack.c.h.b16 %v135
    %v1784 = vunpack.c.l.b16 %v136
    %v1785 = vunpack.c.h.b16 %v136
    %v1786 = vunpack.c.l.b16 %v137
    %v1787 = vunpack.c.h.b16 %v137
    %v1788 = vunpack.c.l.b16 %v138
    %v1789 = vunpack.c.h.b16 %v138
    %v1790 = vunpack.c.l.b16 %v139
    %v1791 = vunpack.c.h.b16 %v139
    %v1792 = vunpack.c.l.b16 %v140
    %v1793 = vunpack.c.h.b16 %v140
    %v1794 = vunpack.c.l.b16 %v141
    %v1795 = vunpack.c.h.b16 %v141
    %v1796 = vunpack.c.l.b16 %v142
    %v1797 = vunpack.c.h.b16 %v142
    %v1798 = vunpack.c.l.b16 %v143
    %v1799 = vunpack.c.h.b16 %v143
    %v1800 = vunpack.c.l.b16 %v144
    %v1801 = vunpack.c.h.b16 %v144
    %v1802 = vunpack.c.l.b16 %v145
    %v1803 = vunpack.c.h.b16 %v145
    %v1804 = vunpack.c.l.b16 %v146
    %v1805 = vunpack.c.h.b16 %v146
    %v1806 = vunpack.c.l.b16 %v147
    %v1807 = vunpack.c.h.b16 %v147
    %v1808 = vunpack.c.l.b16 %v148
    %v1809 = vunpack.c.h.b16 %v148
    %v1810 = vunpack.c.l.b16 %v149
    %v1811 = vunpack.c.h.b16 %v149
    %v1812 = vunpack.c.l.b16 %v150
    %v1813 = vunpack.c.h.b16 %v150
    %v1814 = vunpack.c.l.b16 %v151
    %v1815 = vunpack.c.h.b16 %v151
    %v1816 = vunpack.c.l.b16 %v152
    %v1817 = vunpack.c.h.b16 %v152
    %v1818 = vunpack.c.l.b16 %v153
    %v1819 = vunpack.c.h.b16 %v153
    %v1820 = vunpack.c.l.b16 %v154
    %v1821 = vunpack.c.h.b16 %v154
    %v1822 = vunpack.c.l.b16 %v155
    %v1823 = vunpack.c.h.b16 %v155
    %v1824 = vunpack.c.l.b16 %v156
    %v1825 = vunpack.c.h.b16 %v156
    %v1826 = vunpack.c.l.b16 %v157
    %v1827 = vunpack.c.h.b16 %v157
    %v1828 = vunpack.c.l.b16 %v158
    %v1829 = vunpack.c.h.b16 %v158
    %v1830 = vunpack.c.l.b16 %v159
    %v1831 = vunpack.c.h.b16 %v159
    %v1832 = vunpack.c.l.b16 %v160
    %v1833 = vunpack.c.h.b16 %v160
    %v1834 = vunpack.c.l.b16 %v161
    %v1835 = vunpack.c.h.b16 %v161
    %v1836 = vunpack.c.l.b16 %v162
    %v1837 = vunpack.c.h.b16 %v162
    %v1838 = vunpack.c.l.b16 %v163
    %v1839 = vunpack.c.h.b16 %v163
    %v1840 = vunpack.c.l.b16 %v164
    %v1841 = vunpack.c.h.b16 %v164
    %v1842 = vunpack.c.l.b16 %v165
    %v1843 = vunpack.c.h.b16 %v165
    %v1844 = vunpack.c.l.b16 %v166
    %v1845 = vunpack.c.h.b16 %v166
    %v1846 = vunpack.c.l.b16 %v167
    %v1847 = vunpack.c.h.b16 %v167
    %v1848 = vunpack.c.l.b16 %v168
    %v1849 = vunpack.c.h.b16 %v168
    %v1850 = vunpack.c.l.b16 %v169
    %v1851 = vunpack.c.h.b16 %v169
    %v1852 = vunpack.c.l.b16 %v170
    %v1853 = vunpack.c.h.b16 %v170
    %v1854 = vunpack.c.l.b16 %v171
    %v1855 = vunpack.c.h.b16 %v171
    %v1856 = vunpack.c.l.b16 %v172
    %v1857 = vunpack.c.h.b16 %v172
    %v1858 = vunpack.c.l.b16 %v173
    %v1859 = vunpack.c.h.b16 %v173
    %v1860 = vunpack.c.l.b16 %v174
    %v1861 = vunpack.c.h.b16 %v174
    %v1862 = vunpack.c.l.b16 %v175
    %v1863 = vunpack.c.h.b16 %v175
    %v1864 = vunpack.c.l.b16 %v176
    %v1865 = vunpack.c.h.b16 %v176
    %v1866 = vunpack.c.l.b16 %v177
    %v1867 = vunpack.c.h.b16 %v177
    %v1868 = vunpack.c.l.b16 %v178
    %v1869 = vunpack.c.h.b16 %v178
    %v1870 = vunpack.c.l.b16 %v179
    %v1871 = vunpack.c.h.b16 %v179
    %v1872 = vunpack.c.l.b16 %v180
    %v1873 = vunpack.c.h.b16 %v180
    %v1874 = vunpack.c.l.b16 %v181
    %v1875 = vunpack.c.h.b16 %v181
    %v1876 = vunpack.c.l.b16 %v182
    %v1877 = vunpack.c.h.b16 %v182
    %v1878 = vunpack.c.l.b16 %v183
    %v1879 = vunpack.c.h.b16 %v183
    %v1880 = vunpack.c.l.b16 %v184
    %v1881 = vunpack.c.h.b16 %v184
    %v1882 = vunpack.c.l.b16 %v185
    %v1883 = vunpack.c.h.b16 %v185
    %v1884 = vunpack.c.l.b16 %v186
    %v1885 = vunpack.c.h.b16 %v186
    %v1886 = vunpack.c.l.b16 %v187
    %v1887 = vunpack.c.h.b16 %v187
    %v1888 = vunpack.c.l.b16 %v188
    %v1889 = vunpack.c.h.b16 %v188
    %v1890 = vunpack.c.l.b16 %v189
    %v1891 = vunpack.c.h.b16 %v189
    %v1892 = vunpack.c.l.b16 %v190
    %v1893 = vunpack.c.h.b16 %v190
    %v1894 = vunpack.c.l.b16 %v191
    %v1895 = vunpack.c.h.b16 %v191
    %v1896 = vunpack.c.l.b16 %v192
    %v1897 = vunpack.c.h.b16 %v192
    %v1898 = vunpack.c.l.b16 %v193
    %v1899 = vunpack.c.h.b16 %v193
    %v1900 = vunpack.c.l.b16 %v194
    %v1901 = vunpack.c.h.b16 %v194
    %v1902 = vunpack.c.l.b16 %v195
    %v1903 = vunpack.c.h.b16 %v195
    %v1904 = vunpack.c.l.b16 %v196
    %v1905 = vunpack.c.h.b16 %v196
    %v1906 = vunpack.c.l.b16 %v197
    %v1907 = vunpack.c.h.b16 %v197
    %v1908 = vunpack.c.l.b16 %v198
    %v1909 = vunpack.c.h.b16 %v198
    %v1910 = vunpack.c.l.b16 %v199
    %v1911 = vunpack.c.h.b16 %v199
    %v1912 = vunpack.c.l.b16 %v200
    %v1913 = vunpack.c.h.b16 %v200
    %v1914 = vunpack.c.l.b16 %v201
    %v1915 = vunpack.c.h.b16 %v201
    %v1916 = vunpack.c.l.b16 %v202
    %v1917 = vunpack.c.h.b16 %v202
    %v1918 = vunpack.c.l.b16 %v203
    %v1919 = vunpack.c.h.b16 %v203
    %v1920 = vunpack.c.l.b16 %v204
    %v1921 = vunpack.c.h.b16 %v204
    %v1922 = vunpack.c.l.b16 %v205
    %v1923 = vunpack.c.h.b16 %v205
    %v1924 = vunpack.c.l.b16 %v206
    %v1925 = vunpack.c.h.b16 %v206
    %v1926 = vunpack.c.l.b16 %v207
    %v1927 = vunpack.c.h.b16 %v207
    %v1928 = vunpack.c.l.b16 %v208
    %v1929 = vunpack.c.h.b16 %v208
    %v1930 = vunpack.c.l.b16 %v209
    %v1931 = vunpack.c.h.b16 %v209
    %v1932 = vunpack.c.l.b16 %v210
    %v1933 = vunpack.c.h.b16 %v210
    %v1934 = vunpack.c.l.b16 %v211
    %v1935 = vunpack.c.h.b16 %v211
    %v1936 = vunpack.c.l.b16 %v212
    %v1937 = vunpack.c.h.b16 %v212
    %v1938 = vunpack.c.l.b16 %v213
    %v1939 = vunpack.c.h.b16 %v213
    %v1940 = vunpack.c.l.b16 %v214
    %v1941 = vunpack.c.h.b16 %v214
    %v1942 = vunpack.c.l.b16 %v215
    %v1943 = vunpack.c.h.b16 %v215
    %v1944 = vunpack.c.l.b16 %v216
    %v1945 = vunpack.c.h.b16 %v216
    %v1946 = vunpack.c.l.b16 %v217
    %v1947 = vunpack.c.h.b16 %v217
    %v1948 = vunpack.c.l.b16 %v218
    %v1949 = vunpack.c.h.b16 %v218
    %v1950 = vunpack.c.l.b16 %v219
    %v1951 = vunpack.c.h.b16 %v219
    %v1952 = vunpack.c.l.b16 %v220
    %v1953 = vunpack.c.h.b16 %v220
    %v1954 = vunpack.c.l.b16 %v221
    %v1955 = vunpack.c.h.b16 %v221
    %v1956 = vunpack.c.l.b16 %v222
    %v1957 = vunpack.c.h.b16 %v222
    %v1958 = vunpack.c.l.b16 %v223
    %v1959 = vunpack.c.h.b16 %v223
    %v1960 = vunpack.c.l.b16 %v224
    %v1961 = vunpack.c.h.b16 %v224
    %v1962 = vunpack.c.l.b16 %v225
    %v1963 = vunpack.c.h.b16 %v225
    %v1964 = vunpack.c.l.b16 %v226
    %v1965 = vunpack.c.h.b16 %v226
    %v1966 = vunpack.c.l.b16 %v227
    %v1967 = vunpack.c.h.b16 %v227
    %v1968 = vunpack.c.l.b16 %v228
    %v1969 = vunpack.c.h.b16 %v228
    %v1970 = vunpack.c.l.b16 %v229
    %v1971 = vunpack.c.h.b16 %v229
    %v1972 = vunpack.c.l.b16 %v230
    %v1973 = vunpack.c.h.b16 %v230
    %v1974 = vunpack.c.l.b16 %v231
    %v1975 = vunpack.c.h.b16 %v231
    %v1976 = vunpack.c.l.b16 %v232
    %v1977 = vunpack.c.h.b16 %v232
    %v1978 = vunpack.c.l.b16 %v233
    %v1979 = vunpack.c.h.b16 %v233
    %v1980 = vunpack.c.l.b16 %v234
    %v1981 = vunpack.c.h.b16 %v234
    %v1982 = vunpack.c.l.b16 %v235
    %v1983 = vunpack.c.h.b16 %v235
    %v1984 = vunpack.c.l.b16 %v236
    %v1985 = vunpack.c.h.b16 %v236
    %v1986 = vunpack.c.l.b16 %v237
    %v1987 = vunpack.c.h.b16 %v237
    %v1988 = vunpack.c.l.b16 %v238
    %v1989 = vunpack.c.h.b16 %v238
    %v1990 = vunpack.c.l.b16 %v239
    %v1991 = vunpack.c.h.b16 %v239
    %v1992 = vunpack.c.l.b16 %v240
    %v1993 = vunpack.c.h.b16 %v240
    %v1994 = vunpack.c.l.b16 %v241
    %v1995 = vunpack.c.h.b16 %v241
    %v1996 = vunpack.c.l.b16 %v242
    %v1997 = vunpack.c.h.b16 %v242
    %v1998 = vunpack.c.l.b16 %v243
    %v1999 = vunpack.c.h.b16 %v243
    %v2000 = vunpack.c.l.b16 %v244
    %v2001 = vunpack.c.h.b16 %v244
    %v2002 = vunpack.c.l.b16 %v245
    %v2003 = vunpack.c.h.b16 %v245
    %v2004 = vunpack.c.l.b16 %v246
    %v2005 = vunpack.c.h.b16 %v246
    %v2006 = vunpack.c.l.b16 %v247
    %v2007 = vunpack.c.h.b16 %v247
    %v2008 = vunpack.c.l.b16 %v248
    %v2009 = vunpack.c.h.b16 %v248
    %v2010 = vunpack.c.l.b16 %v249
    %v2011 = vunpack.c.h.b16 %v249
    %v2012 = vunpack.c.l.b16 %v250
    %v2013 = vunpack.c.h.b16 %v250
    %v2014 = vunpack.c.l.b16 %v251
    %v2015 = vunpack.c.h.b16 %v251
    %v2016 = vunpack.c.l.b16 %v252
    %v2017 = vunpack.c.h.b16 %v252
    %v2018 = vunpack.c.l.b16 %v253
    %v2019 = vunpack.c.h.b16 %v253
    %v2020 = vunpack.c.l.b16 %v254
    %v2021 = vunpack.c.h.b16 %v254
    %v2022 = vunpack.c.l.b16 %v255
    %v2023 = vunpack.c.h.b16 %v255
    %v2024 = vunpack.c.l.b16 %v256
    %v2025 = vunpack.c.h.b16 %v256
    %v2026 = vunpack.c.l.b16 %v257
    %v2027 = vunpack.c.h.b16 %v257
    %v2028 = vunpack.c.l.b16 %v258
    %v2029 = vunpack.c.h.b16 %v258
    %v2030 = vunpack.c.l.b16 %v259
    %v2031 = vunpack.c.h.b16 %v259
    %v2032 = vunpack.c.l.b16 %v260
    %v2033 = vunpack.c.h.b16 %v260
    %v2034 = vunpack.c.l.b16 %v261
    %v2035 = vunpack.c.h.b16 %v261
    %v2036 = vunpack.c.l.b16 %v262
    %v2037 = vunpack.c.h.b16 %v262
    %v2038 = vunpack.c.l.b16 %v263
    %v2039 = vunpack.c.h.b16 %v263
    %v2040 = vunpack.c.l.b16 %v264
    %v2041 = vunpack.c.h.b16 %v264
    %v2042 = vunpack.c.l.b16 %v265
    %v2043 = vunpack.c.h.b16 %v265
    %v2044 = vunpack.c.l.b16 %v266
    %v2045 = vunpack.c.h.b16 %v266
    %v2046 = vunpack.c.l.b16 %v267
    %v2047 = vunpack.c.h.b16 %v267
    %v2048 = vunpack.c.l.b16 %v268
    %v2049 = vunpack.c.h.b16 %v268
    %v2050 = vunpack.c.l.b16 %v269
    %v2051 = vunpack.c.h.b16 %v269
    %v2052 = vunpack.c.l.b16 %v270
    %v2053 = vunpack.c.h.b16 %v270
    %v2054 = vunpack.c.l.b16 %v271
    %v2055 = vunpack.c.h.b16 %v271
    %v2056 = vunpack.c.l.b16 %v272
    %v2057 = vunpack.c.h.b16 %v272
    %v2058 = vunpack.c.l.b16 %v273
    %v2059 = vunpack.c.h.b16 %v273
    %v2060 = vunpack.c.l.b16 %v274
    %v2061 = vunpack.c.h.b16 %v274
    %v2062 = vunpack.c.l.b16 %v275
    %v2063 = vunpack.c.h.b16 %v275
    %v2064 = vunpack.c.l.b16 %v276
    %v2065 = vunpack.c.h.b16 %v276
    %v2066 = vunpack.c.l.b16 %v277
    %v2067 = vunpack.c.h.b16 %v277
    %v2068 = vunpack.c.l.b16 %v278
    %v2069 = vunpack.c.h.b16 %v278
    %v2070 = vunpack.c.l.b16 %v279
    %v2071 = vunpack.c.h.b16 %v279
    %v2072 = vunpack.c.l.b16 %v280
    %v2073 = vunpack.c.h.b16 %v280
    %v2074 = vunpack.c.l.b16 %v281
    %v2075 = vunpack.c.h.b16 %v281
    %v2076 = vunpack.c.l.b16 %v282
    %v2077 = vunpack.c.h.b16 %v282
    %v2078 = vunpack.c.l.b16 %v283
    %v2079 = vunpack.c.h.b16 %v283
    %v2080 = vunpack.c.l.b16 %v284
    %v2081 = vunpack.c.h.b16 %v284
    %v2082 = vunpack.c.l.b16 %v285
    %v2083 = vunpack.c.h.b16 %v285
    %v2084 = vunpack.c.l.b16 %v286
    %v2085 = vunpack.c.h.b16 %v286
    %v2086 = vunpack.c.l.b16 %v287
    %v2087 = vunpack.c.h.b16 %v287
    %v2088 = vunpack.c.l.b16 %v288
    %v2089 = vunpack.c.h.b16 %v288
    %v2090 = vunpack.c.l.b16 %v289
    %v2091 = vunpack.c.h.b16 %v289
    %v2092 = vunpack.c.l.b16 %v290
    %v2093 = vunpack.c.h.b16 %v290
    %v2094 = vunpack.c.l.b16 %v291
    %v2095 = vunpack.c.h.b16 %v291
    %v2096 = vunpack.c.l.b16 %v292
    %v2097 = vunpack.c.h.b16 %v292
    %v2098 = vunpack.c.l.b16 %v293
    %v2099 = vunpack.c.h.b16 %v293
    %v2100 = vunpack.c.l.b16 %v294
    %v2101 = vunpack.c.h.b16 %v294
    %v2102 = vunpack.c.l.b16 %v295
    %v2103 = vunpack.c.h.b16 %v295
    %v2104 = vunpack.c.l.b16 %v296
    %v2105 = vunpack.c.h.b16 %v296
    %v2106 = vunpack.c.l.b16 %v297
    %v2107 = vunpack.c.h.b16 %v297
    %v2108 = vunpack.c.l.b16 %v298
    %v2109 = vunpack.c.h.b16 %v298
    %v2110 = vunpack.c.l.b16 %v299
    %v2111 = vunpack.c.h.b16 %v299
    %v2112 = vunpack.c.l.b16 %v300
    %v2113 = vunpack.c.h.b16 %v300
    %v2114 = vunpack.c.l.b16 %v301
    %v2115 = vunpack.c.h.b16 %v301
    %v2116 = vunpack.c.l.b16 %v302
    %v2117 = vunpack.c.h.b16 %v302
    %v2118 = vunpack.c.l.b16 %v303
    %v2119 = vunpack.c.h.b16 %v303
    %v2120 = vunpack.c.l.b16 %v304
    %v2121 = vunpack.c.h.b16 %v304
    %v2122 = vunpack.c.l.b16 %v305
    %v2123 = vunpack.c.h.b16 %v305
    %v2124 = vunpack.c.l.b16 %v306
    %v2125 = vunpack.c.h.b16 %v306
    %v2126 = vunpack.c.l.b16 %v307
    %v2127 = vunpack.c.h.b16 %v307
    %v2128 = vunpack.c.l.b16 %v308
    %v2129 = vunpack.c.h.b16 %v308
    %v2130 = vunpack.c.l.b16 %v309
    %v2131 = vunpack.c.h.b16 %v309
    %v2132 = vunpack.c.l.b16 %v310
    %v2133 = vunpack.c.h.b16 %v310
    %v2134 = vunpack.c.l.b16 %v311
    %v2135 = vunpack.c.h.b16 %v311
    %v2136 = vunpack.c.l.b16 %v312
    %v2137 = vunpack.c.h.b16 %v312
    %v2138 = vunpack.c.l.b16 %v313
    %v2139 = vunpack.c.h.b16 %v313
    %v2140 = vunpack.c.l.b16 %v314
    %v2141 = vunpack.c.h.b16 %v314
    %v2142 = vunpack.c.l.b16 %v315
    %v2143 = vunpack.c.h.b16 %v315
    %v2144 = vunpack.c.l.b16 %v316
    %v2145 = vunpack.c.h.b16 %v316
    %v2146 = vunpack.c.l.b16 %v317
    %v2147 = vunpack.c.h.b16 %v317
    %v2148 = vunpack.c.l.b16 %v318
    %v2149 = vunpack.c.h.b16 %v318
    %v2150 = vunpack.c.l.b16 %v319
    %v2151 = vunpack.c.h.b16 %v319
    %v2152 = vunpack.c.l.b16 %v320
    %v2153 = vunpack.c.h.b16 %v320
    %v2154 = vunpack.c.l.b16 %v321
    %v2155 = vunpack.c.h.b16 %v321
    %v2156 = vunpack.c.l.b16 %v322
    %v2157 = vunpack.c.h.b16 %v322
    %v2158 = vunpack.c.l.b16 %v323
    %v2159 = vunpack.c.h.b16 %v323
    %v2160 = vunpack.c.l.b16 %v324
    %v2161 = vunpack.c.h.b16 %v324
    %v2162 = vunpack.c.l.b16 %v325
    %v2163 = vunpack.c.h.b16 %v325
    %v2164 = vunpack.c.l.b16 %v326
    %v2165 = vunpack.c.h.b16 %v326
    %v2166 = vunpack.c.l.b16 %v327
    %v2167 = vunpack.c.h.b16 %v327
    %v2168 = vunpack.c.l.b16 %v328
    %v2169 = vunpack.c.h.b16 %v328
    %v2170 = vunpack.c.l.b16 %v329
    %v2171 = vunpack.c.h.b16 %v329
    %v2172 = vunpack.c.l.b16 %v330
    %v2173 = vunpack.c.h.b16 %v330
    %v2174 = vunpack.c.l.b16 %v331
    %v2175 = vunpack.c.h.b16 %v331
    %v2176 = vunpack.c.l.b16 %v332
    %v2177 = vunpack.c.h.b16 %v332
    %v2178 = vunpack.c.l.b16 %v333
    %v2179 = vunpack.c.h.b16 %v333
    %v2180 = vunpack.c.l.b16 %v334
    %v2181 = vunpack.c.h.b16 %v334
    %v2182 = vunpack.c.l.b16 %v335
    %v2183 = vunpack.c.h.b16 %v335
    %v2184 = vunpack.c.l.b16 %v336
    %v2185 = vunpack.c.h.b16 %v336
    %v2186 = vunpack.c.l.b16 %v337
    %v2187 = vunpack.c.h.b16 %v337
    %v2188 = vunpack.c.l.b16 %v338
    %v2189 = vunpack.c.h.b16 %v338
    %v2190 = vunpack.c.l.b16 %v339
    %v2191 = vunpack.c.h.b16 %v339
    %v2192 = vunpack.c.l.b16 %v340
    %v2193 = vunpack.c.h.b16 %v340
    %v2194 = vunpack.c.l.b16 %v341
    %v2195 = vunpack.c.h.b16 %v341
    %v2196 = vunpack.c.l.b16 %v342
    %v2197 = vunpack.c.h.b16 %v342
    %v2198 = vunpack.c.l.b16 %v343
    %v2199 = vunpack.c.h.b16 %v343
    %v2200 = vunpack.c.l.b16 %v344
    %v2201 = vunpack.c.h.b16 %v344
    %v2202 = vunpack.c.l.b16 %v345
    %v2203 = vunpack.c.h.b16 %v345
    %v2204 = vunpack.c.l.b16 %v346
    %v2205 = vunpack.c.h.b16 %v346
    %v2206 = vunpack.c.l.b16 %v347
    %v2207 = vunpack.c.h.b16 %v347
    %v2208 = vunpack.c.l.b16 %v348
    %v2209 = vunpack.c.h.b16 %v348
    %v2210 = vunpack.c.l.b16 %v349
    %v2211 = vunpack.c.h.b16 %v349
    %v2212 = vunpack.c.l.b16 %v350
    %v2213 = vunpack.c.h.b16 %v350
    %v2214 = vunpack.c.l.b16 %v351
    %v2215 = vunpack.c.h.b16 %v351
    %v2216 = vunpack.c.l.b16 %v352
    %v2217 = vunpack.c.h.b16 %v352
    %v2218 = vunpack.c.l.b16 %v353
    %v2219 = vunpack.c.h.b16 %v353
    %v2220 = vunpack.c.l.b16 %v354
    %v2221 = vunpack.c.h.b16 %v354
    %v2222 = vunpack.c.l.b16 %v355
    %v2223 = vunpack.c.h.b16 %v355
    %v2224 = vunpack.c.l.b16 %v356
    %v2225 = vunpack.c.h.b16 %v356
    %v2226 = vunpack.c.l.b16 %v357
    %v2227 = vunpack.c.h.b16 %v357
    %v2228 = vunpack.c.l.b16 %v358
    %v2229 = vunpack.c.h.b16 %v358
    %v2230 = vunpack.c.l.b16 %v359
    %v2231 = vunpack.c.h.b16 %v359
    %v2232 = vunpack.c.l.b16 %v360
    %v2233 = vunpack.c.h.b16 %v360
    %v2234 = vunpack.c.l.b16 %v361
    %v2235 = vunpack.c.h.b16 %v361
    %v2236 = vunpack.c.l.b16 %v362
    %v2237 = vunpack.c.h.b16 %v362
    %v2238 = vunpack.c.l.b16 %v363
    %v2239 = vunpack.c.h.b16 %v363
    %v2240 = vunpack.c.l.b16 %v364
    %v2241 = vunpack.c.h.b16 %v364
    %v2242 = vunpack.c.l.b16 %v365
    %v2243 = vunpack.c.h.b16 %v365
    %v2244 = vunpack.c.l.b16 %v366
    %v2245 = vunpack.c.h.b16 %v366
    %v2246 = vunpack.c.l.b16 %v367
    %v2247 = vunpack.c.h.b16 %v367
    %v2248 = vunpack.c.l.b16 %v368
    %v2249 = vunpack.c.h.b16 %v368
    %v2250 = vunpack.c.l.b16 %v369
    %v2251 = vunpack.c.h.b16 %v369
    %v2252 = vunpack.c.l.b16 %v370
    %v2253 = vunpack.c.h.b16 %v370
    %v2254 = vunpack.c.l.b16 %v371
    %v2255 = vunpack.c.h.b16 %v371
    %v2256 = vunpack.c.l.b16 %v372
    %v2257 = vunpack.c.h.b16 %v372
    %v2258 = vunpack.c.l.b16 %v373
    %v2259 = vunpack.c.h.b16 %v373
    %v2260 = vunpack.c.l.b16 %v374
    %v2261 = vunpack.c.h.b16 %v374
    %v2262 = vunpack.c.l.b16 %v375
    %v2263 = vunpack.c.h.b16 %v375
    %v2264 = vunpack.c.l.b16 %v376
    %v2265 = vunpack.c.h.b16 %v376
    %v2266 = vunpack.c.l.b16 %v377
    %v2267 = vunpack.c.h.b16 %v377
    %v2268 = vunpack.c.l.b16 %v378
    %v2269 = vunpack.c.h.b16 %v378
    %v2270 = vunpack.c.l.b16 %v379
    %v2271 = vunpack.c.h.b16 %v379
    %v2272 = vunpack.c.l.b16 %v380
    %v2273 = vunpack.c.h.b16 %v380
    %v2274 = vunpack.c.l.b16 %v381
    %v2275 = vunpack.c.h.b16 %v381
    %v2276 = vunpack.c.l.b16 %v382
    %v2277 = vunpack.c.h.b16 %v382
    %v2278 = vunpack.c.l.b16 %v383
    %v2279 = vunpack.c.h.b16 %v383
    %v2280 = vunpack.c.l.b16 %v384
    %v2281 = vunpack.c.h.b16 %v384
    %v2282 = vunpack.c.l.b16 %v385
    %v2283 = vunpack.c.h.b16 %v385
    %v2284 = vunpack.c.l.b16 %v386
    %v2285 = vunpack.c.h.b16 %v386
    %v2286 = vunpack.c.l.b16 %v387
    %v2287 = vunpack.c.h.b16 %v387
    %v2288 = vunpack.c.l.b16 %v388
    %v2289 = vunpack.c.h.b16 %v388
    %v2290 = vunpack.c.l.b16 %v389
    %v2291 = vunpack.c.h.b16 %v389
    %v2292 = vunpack.c.l.b16 %v390
    %v2293 = vunpack.c.h.b16 %v390
    %v2294 = vunpack.c.l.b16 %v391
    %v2295 = vunpack.c.h.b16 %v391
    %v2296 = vunpack.c.l.b16 %v392
    %v2297 = vunpack.c.h.b16 %v392
    %v2298 = vunpack.c.l.b16 %v393
    %v2299 = vunpack.c.h.b16 %v393
    %v2300 = vunpack.c.l.b16 %v394
    %v2301 = vunpack.c.h.b16 %v394
    %v2302 = vunpack.c.l.b16 %v395
    %v2303 = vunpack.c.h.b16 %v395
    %v2304 = vunpack.c.l.b16 %v396
    %v2305 = vunpack.c.h.b16 %v396
    %v2306 = vunpack.c.l.b16 %v397
    %v2307 = vunpack.c.h.b16 %v397
    %v2308 = vunpack.c.l.b16 %v398
    %v2309 = vunpack.c.h.b16 %v398
    %v2310 = vunpack.c.l.b16 %v399
    %v2311 = vunpack.c.h.b16 %v399
    %v2312 = vunpack.c.l.b16 %v400
    %v2313 = vunpack.c.h.b16 %v400
    %v2314 = vunpack.c.l.b16 %v401
    %v2315 = vunpack.c.h.b16 %v401
    %v2316 = vunpack.c.l.b16 %v402
    %v2317 = vunpack.c.h.b16 %v402
    %v2318 = vunpack.c.l.b16 %v403
    %v2319 = vunpack.c.h.b16 %v403
    %v2320 = vunpack.c.l.b16 %v404
    %v2321 = vunpack.c.h.b16 %v404
    %v2322 = vunpack.c.l.b16 %v405
    %v2323 = vunpack.c.h.b16 %v405
    %v2324 = vunpack.c.l.b16 %v406
    %v2325 = vunpack.c.h.b16 %v406
    %v2326 = vunpack.c.l.b16 %v407
    %v2327 = vunpack.c.h.b16 %v407
    %v2328 = vunpack.c.l.b16 %v408
    %v2329 = vunpack.c.h.b16 %v408
    %v2330 = vunpack.c.l.b16 %v409
    %v2331 = vunpack.c.h.b16 %v409
    %v2332 = vunpack.c.l.b16 %v410
    %v2333 = vunpack.c.h.b16 %v410
    %v2334 = vunpack.c.l.b16 %v411
    %v2335 = vunpack.c.h.b16 %v411
    %v2336 = vunpack.c.l.b16 %v412
    %v2337 = vunpack.c.h.b16 %v412
    %v2338 = vunpack.c.l.b16 %v413
    %v2339 = vunpack.c.h.b16 %v413
    %v2340 = vunpack.c.l.b16 %v414
    %v2341 = vunpack.c.h.b16 %v414
    %v2342 = vunpack.c.l.b16 %v415
    %v2343 = vunpack.c.h.b16 %v415
    %v2344 = vunpack.c.l.b16 %v416
    %v2345 = vunpack.c.h.b16 %v416
    %v2346 = vunpack.c.l.b16 %v417
    %v2347 = vunpack.c.h.b16 %v417
    %v2348 = vunpack.c.l.b16 %v418
    %v2349 = vunpack.c.h.b16 %v418
    %v2350 = vunpack.c.l.b16 %v419
    %v2351 = vunpack.c.h.b16 %v419
    %v2352 = vunpack.c.l.b16 %v420
    %v2353 = vunpack.c.h.b16 %v420
    %v2354 = vunpack.c.l.b16 %v421
    %v2355 = vunpack.c.h.b16 %v421
    %v2356 = vunpack.c.l.b16 %v422
    %v2357 = vunpack.c.h.b16 %v422
    %v2358 = vunpack.c.l.b16 %v423
    %v2359 = vunpack.c.h.b16 %v423
    %v2360 = vunpack.c.l.b16 %v424
    %v2361 = vunpack.c.h.b16 %v424
    %v2362 = vunpack.c.l.b16 %v425
    %v2363 = vunpack.c.h.b16 %v425
    %v2364 = vunpack.c.l.b16 %v426
    %v2365 = vunpack.c.h.b16 %v426
    %v2366 = vunpack.c.l.b16 %v427
    %v2367 = vunpack.c.h.b16 %v427
    %v2368 = vunpack.c.l.b16 %v428
    %v2369 = vunpack.c.h.b16 %v428
    %v2370 = vunpack.c.l.b16 %v429
    %v2371 = vunpack.c.h.b16 %v429
    %v2372 = vunpack.c.l.b16 %v430
    %v2373 = vunpack.c.h.b16 %v430
    %v2374 = vunpack.c.l.b16 %v431
    %v2375 = vunpack.c.h.b16 %v431
    %v2376 = vunpack.c.l.b16 %v432
    %v2377 = vunpack.c.h.b16 %v432
    %v2378 = vunpack.c.l.b16 %v433
    %v2379 = vunpack.c.h.b16 %v433
    %v2380 = vunpack.c.l.b16 %v434
    %v2381 = vunpack.c.h.b16 %v434
    %v2382 = vunpack.c.l.b16 %v435
    %v2383 = vunpack.c.h.b16 %v435
    %v2384 = vunpack.c.l.b16 %v436
    %v2385 = vunpack.c.h.b16 %v436
    %v2386 = vunpack.c.l.b16 %v437
    %v2387 = vunpack.c.h.b16 %v437
    %v2388 = vunpack.c.l.b16 %v438
    %v2389 = vunpack.c.h.b16 %v438
    %v2390 = vunpack.c.l.b16 %v439
    %v2391 = vunpack.c.h.b16 %v439
    %v2392 = vunpack.c.l.b16 %v440
    %v2393 = vunpack.c.h.b16 %v440
    %v2394 = vunpack.c.l.b16 %v441
    %v2395 = vunpack.c.h.b16 %v441
    %v2396 = vunpack.c.l.b16 %v442
    %v2397 = vunpack.c.h.b16 %v442
    %v2398 = vunpack.c.l.b16 %v443
    %v2399 = vunpack.c.h.b16 %v443
    %v2400 = vunpack.c.l.b16 %v444
    %v2401 = vunpack.c.h.b16 %v444
    %v2402 = vunpack.c.l.b16 %v445
    %v2403 = vunpack.c.h.b16 %v445
    %v2404 = vunpack.c.l.b16 %v446
    %v2405 = vunpack.c.h.b16 %v446
    %v2406 = vunpack.c.l.b16 %v447
    %v2407 = vunpack.c.h.b16 %v447
    %v2408 = vunpack.c.l.b16 %v448
    %v2409 = vunpack.c.h.b16 %v448
    %v2410 = vunpack.c.l.b16 %v449
    %v2411 = vunpack.c.h.b16 %v449
    %v2412 = vunpack.c.l.b16 %v450
    %v2413 = vunpack.c.h.b16 %v450
    %v2414 = vunpack.c.l.b16 %v451
    %v2415 = vunpack.c.h.b16 %v451
    %v2416 = vunpack.c.l.b16 %v452
    %v2417 = vunpack.c.h.b16 %v452
    %v2418 = vunpack.c.l.b16 %v453
    %v2419 = vunpack.c.h.b16 %v453
    %v2420 = vunpack.c.l.b16 %v454
    %v2421 = vunpack.c.h.b16 %v454
    %v2422 = vunpack.c.l.b16 %v455
    %v2423 = vunpack.c.h.b16 %v455
    %v2424 = vunpack.c.l.b16 %v456
    %v2425 = vunpack.c.h.b16 %v456
    %v2426 = vunpack.c.l.b16 %v457
    %v2427 = vunpack.c.h.b16 %v457
    %v2428 = vunpack.c.l.b16 %v458
    %v2429 = vunpack.c.h.b16 %v458
    %v2430 = vunpack.c.l.b16 %v459
    %v2431 = vunpack.c.h.b16 %v459
    %v2432 = vunpack.c.l.b16 %v460
    %v2433 = vunpack.c.h.b16 %v460
    %v2434 = vunpack.c.l.b16 %v461
    %v2435 = vunpack.c.h.b16 %v461
    %v2436 = vunpack.c.l.b16 %v462
    %v2437 = vunpack.c.h.b16 %v462
    %v2438 = vunpack.c.l.b16 %v463
    %v2439 = vunpack.c.h.b16 %v463
    %v2440 = vunpack.c.l.b16 %v464
    %v2441 = vunpack.c.h.b16 %v464
    %v2442 = vunpack.c.l.b16 %v465
    %v2443 = vunpack.c.h.b16 %v465
    %v2444 = vunpack.c.l.b16 %v466
    %v2445 = vunpack.c.h.b16 %v466
    %v2446 = vunpack.c.l.b16 %v467
    %v2447 = vunpack.c.h.b16 %v467
    %v2448 = vunpack.c.l.b16 %v468
    %v2449 = vunpack.c.h.b16 %v468
    %v2450 = vunpack.c.l.b16 %v469
    %v2451 = vunpack.c.h.b16 %v469
    %v2452 = vunpack.c.l.b16 %v470
    %v2453 = vunpack.c.h.b16 %v470
    %v2454 = vunpack.c.l.b16 %v471
    %v2455 = vunpack.c.h.b16 %v471
    %v2456 = vunpack.c.l.b16 %v472
    %v2457 = vunpack.c.h.b16 %v472
    %v2458 = vunpack.c.l.b16 %v473
    %v2459 = vunpack.c.h.b16 %v473
    %v2460 = vunpack.c.l.b16 %v474
    %v2461 = vunpack.c.h.b16 %v474
    %v2462 = vunpack.c.l.b16 %v475
    %v2463 = vunpack.c.h.b16 %v475
    %v2464 = vunpack.c.l.b16 %v476
    %v2465 = vunpack.c.h.b16 %v476
    %v2466 = vunpack.c.l.b16 %v477
    %v2467 = vunpack.c.h.b16 %v477
    %v2468 = vunpack.c.l.b16 %v478
    %v2469 = vunpack.c.h.b16 %v478
    %v2470 = vunpack.c.l.b16 %v479
    %v2471 = vunpack.c.h.b16 %v479
    %v2472 = vunpack.c.l.b16 %v480
    %v2473 = vunpack.c.h.b16 %v480
    %v2474 = vunpack.c.l.b16 %v481
    %v2475 = vunpack.c.h.b16 %v481
    %v2476 = vunpack.c.l.b16 %v482
    %v2477 = vunpack.c.h.b16 %v482
    %v2478 = vunpack.c.l.b16 %v483
    %v2479 = vunpack.c.h.b16 %v483
    %v2480 = vunpack.c.l.b16 %v484
    %v2481 = vunpack.c.h.b16 %v484
    %v2482 = vunpack.c.l.b16 %v485
    %v2483 = vunpack.c.h.b16 %v485
    %v2484 = vunpack.c.l.b16 %v486
    %v2485 = vunpack.c.h.b16 %v486
    %v2486 = vunpack.c.l.b16 %v487
    %v2487 = vunpack.c.h.b16 %v487
    %v2488 = vunpack.c.l.b16 %v488
    %v2489 = vunpack.c.h.b16 %v488
    %v2490 = vunpack.c.l.b16 %v489
    %v2491 = vunpack.c.h.b16 %v489
    %v2492 = vunpack.c.l.b16 %v490
    %v2493 = vunpack.c.h.b16 %v490
    %v2494 = vunpack.c.l.b16 %v491
    %v2495 = vunpack.c.h.b16 %v491
    %v2496 = vunpack.c.l.b16 %v492
    %v2497 = vunpack.c.h.b16 %v492
    %v2498 = vunpack.c.l.b16 %v493
    %v2499 = vunpack.c.h.b16 %v493
    %v2500 = vunpack.c.l.b16 %v494
    %v2501 = vunpack.c.h.b16 %v494
    %v2502 = vunpack.c.l.b16 %v495
    %v2503 = vunpack.c.h.b16 %v495
    %v2504 = vunpack.c.l.b16 %v496
    %v2505 = vunpack.c.h.b16 %v496
    %v2506 = vunpack.c.l.b16 %v497
    %v2507 = vunpack.c.h.b16 %v497
    %v2508 = vunpack.c.l.b16 %v498
    %v2509 = vunpack.c.h.b16 %v498
    %v2510 = vunpack.c.l.b16 %v499
    %v2511 = vunpack.c.h.b16 %v499
    %v2512 = vunpack.c.l.b16 %v500
    %v2513 = vunpack.c.h.b16 %v500
    %v2514 = vunpack.c.l.b16 %v501
    %v2515 = vunpack.c.h.b16 %v501
    %v2516 = vunpack.c.l.b16 %v502
    %v2517 = vunpack.c.h.b16 %v502
    %v2518 = vunpack.c.l.b16 %v503
    %v2519 = vunpack.c.h.b16 %v503
    %v2520 = vunpack.c.l.b16 %v504
    %v2521 = vunpack.c.h.b16 %v504
    %v2522 = vunpack.c.l.b16 %v505
    %v2523 = vunpack.c.h.b16 %v505
    %v2524 = vunpack.c.l.b16 %v506
    %v2525 = vunpack.c.h.b16 %v506
    %v2526 = vunpack.c.l.b16 %v507
    %v2527 = vunpack.c.h.b16 %v507
    %v2528 = vunpack.c.l.b16 %v508
    %v2529 = vunpack.c.h.b16 %v508
    %v2530 = vunpack.c.l.b16 %v509
    %v2531 = vunpack.c.h.b16 %v509
    %v2532 = vunpack.c.l.b16 %v510
    %v2533 = vunpack.c.h.b16 %v510
    %v2534 = vunpack.c.l.b16 %v511
    %v2535 = vunpack.c.h.b16 %v511
    %v2536 = vunpack.c.l.b16 %v512
    %v2537 = vunpack.c.h.b16 %v512
    %v2538 = vunpack.c.l.b16 %v513
    %v2539 = vunpack.c.h.b16 %v513
    %v2540 = vunpack.c.l.b16 %v514
    %v2541 = vunpack.c.h.b16 %v514
    %v2542 = vunpack.c.l.b16 %v515
    %v2543 = vunpack.c.h.b16 %v515
    %v2544 = vunpack.c.l.b16 %v516
    %v2545 = vunpack.c.h.b16 %v516
    %v2546 = vunpack.c.l.b16 %v517
    %v2547 = vunpack.c.h.b16 %v517
    %v2548 = vunpack.c.l.b16 %v518
    %v2549 = vunpack.c.h.b16 %v518
    %v2550 = vunpack.c.l.b16 %v519
    %v2551 = vunpack.c.h.b16 %v519
    %v2552 = vunpack.c.l.b16 %v520
    %v2553 = vunpack.c.h.b16 %v520
    %v2554 = vunpack.c.l.b16 %v521
    %v2555 = vunpack.c.h.b16 %v521
    %v2556 = vunpack.c.l.b16 %v522
    %v2557 = vunpack.c.h.b16 %v522
    %v2558 = vunpack.c.l.b16 %v523
    %v2559 = vunpack.c.h.b16 %v523
    %v2560 = vunpack.c.l.b16 %v524
    %v2561 = vunpack.c.h.b16 %v524
    %v2562 = vunpack.c.l.b16 %v525
    %v2563 = vunpack.c.h.b16 %v525
    %v2564 = vunpack.c.l.b16 %v526
    %v2565 = vunpack.c.h.b16 %v526
    %v2566 = vunpack.c.l.b16 %v527
    %v2567 = vunpack.c.h.b16 %v527
    %v2568 = vunpack.c.l.b16 %v528
    %v2569 = vunpack.c.h.b16 %v528
    %v2570 = vunpack.c.l.b16 %v529
    %v2571 = vunpack.c.h.b16 %v529
    %v2572 = vunpack.c.l.b16 %v530
    %v2573 = vunpack.c.h.b16 %v530
    %v2574 = vunpack.c.l.b16 %v531
    %v2575 = vunpack.c.h.b16 %v531
    %v2576 = vunpack.c.l.b16 %v532
    %v2577 = vunpack.c.h.b16 %v532
    %v2578 = vunpack.c.l.b16 %v533
    %v2579 = vunpack.c.h.b16 %v533
    %v2580 = vunpack.c.l.b16 %v534
    %v2581 = vunpack.c.h.b16 %v534
    %v2582 = vunpack.c.l.b16 %v535
    %v2583 = vunpack.c.h.b16 %v535
    %v2584 = vunpack.c.l.b16 %v536
    %v2585 = vunpack.c.h.b16 %v536
    %v2586 = vunpack.c.l.b16 %v537
    %v2587 = vunpack.c.h.b16 %v537
    %v2588 = vunpack.c.l.b16 %v538
    %v2589 = vunpack.c.h.b16 %v538
    %v2590 = vunpack.c.l.b16 %v539
    %v2591 = vunpack.c.h.b16 %v539
    %v2592 = vunpack.c.l.b16 %v540
    %v2593 = vunpack.c.h.b16 %v540
    %v2594 = vunpack.c.l.b16 %v541
    %v2595 = vunpack.c.h.b16 %v541
    %v2596 = vunpack.c.l.b16 %v542
    %v2597 = vunpack.c.h.b16 %v542
    %v2598 = vunpack.c.l.b16 %v543
    %v2599 = vunpack.c.h.b16 %v543
    %v2600 = vunpack.c.l.b16 %v544
    %v2601 = vunpack.c.h.b16 %v544
    %v2602 = vunpack.c.l.b16 %v545
    %v2603 = vunpack.c.h.b16 %v545
    %v2604 = vunpack.c.l.b16 %v546
    %v2605 = vunpack.c.h.b16 %v546
    %v2606 = vunpack.c.l.b16 %v547
    %v2607 = vunpack.c.h.b16 %v547
    %v2608 = vunpack.c.l.b16 %v548
    %v2609 = vunpack.c.h.b16 %v548
    %v2610 = vunpack.c.l.b16 %v549
    %v2611 = vunpack.c.h.b16 %v549
    %v2612 = vunpack.c.l.b16 %v550
    %v2613 = vunpack.c.h.b16 %v550
    %v2614 = vunpack.c.l.b16 %v551
    %v2615 = vunpack.c.h.b16 %v551
    %v2616 = vunpack.c.l.b16 %v552
    %v2617 = vunpack.c.h.b16 %v552
    %v2618 = vunpack.c.l.b16 %v553
    %v2619 = vunpack.c.h.b16 %v553
    %v2620 = vunpack.c.l.b16 %v554
    %v2621 = vunpack.c.h.b16 %v554
    %v2622 = vunpack.c.l.b16 %v555
    %v2623 = vunpack.c.h.b16 %v555
    %v2624 = vunpack.c.l.b16 %v556
    %v2625 = vunpack.c.h.b16 %v556
    %v2626 = vunpack.c.l.b16 %v557
    %v2627 = vunpack.c.h.b16 %v557
    %v2628 = vunpack.c.l.b16 %v558
    %v2629 = vunpack.c.h.b16 %v558
    %v2630 = vunpack.c.l.b16 %v559
    %v2631 = vunpack.c.h.b16 %v559
    %v2632 = vunpack.c.l.b16 %v560
    %v2633 = vunpack.c.h.b16 %v560
    %v2634 = vunpack.c.l.b16 %v561
    %v2635 = vunpack.c.h.b16 %v561
    %v2636 = vunpack.c.l.b16 %v562
    %v2637 = vunpack.c.h.b16 %v562
    %v2638 = vunpack.c.l.b16 %v563
    %v2639 = vunpack.c.h.b16 %v563
    %v2640 = vunpack.c.l.b16 %v564
    %v2641 = vunpack.c.h.b16 %v564
    %v2642 = vunpack.c.l.b16 %v565
    %v2643 = vunpack.c.h.b16 %v565
    %v2644 = vunpack.c.l.b16 %v566
    %v2645 = vunpack.c.h.b16 %v566
    %v2646 = vunpack.c.l.b16 %v567
    %v2647 = vunpack.c.h.b16 %v567
    %v2648 = vunpack.c.l.b16 %v568
    %v2649 = vunpack.c.h.b16 %v568
    %v2650 = vunpack.c.l.b16 %v569
    %v2651 = vunpack.c.h.b16 %v569
    %v2652 = vunpack.c.l.b16 %v570
    %v2653 = vunpack.c.h.b16 %v570
    %v2654 = vunpack.c.l.b16 %v571
    %v2655 = vunpack.c.h.b16 %v571
    %v2656 = vunpack.c.l.b16 %v572
    %v2657 = vunpack.c.h.b16 %v572
    %v2658 = vunpack.c.l.b16 %v573
    %v2659 = vunpack.c.h.b16 %v573
    %v2660 = vunpack.c.l.b16 %v574
    %v2661 = vunpack.c.h.b16 %v574
    %v2662 = vunpack.c.l.b16 %v575
    %v2663 = vunpack.c.h.b16 %v575
    %v2664 = vunpack.c.l.b16 %v576
    %v2665 = vunpack.c.h.b16 %v576
    %v2666 = vunpack.c.l.b16 %v577
    %v2667 = vunpack.c.h.b16 %v577
    %v2668 = vunpack.c.l.b16 %v578
    %v2669 = vunpack.c.h.b16 %v578
    %v2670 = vunpack.c.l.b16 %v579
    %v2671 = vunpack.c.h.b16 %v579
    %v2672 = vunpack.c.l.b16 %v580
    %v2673 = vunpack.c.h.b16 %v580
    %v2674 = vunpack.c.l.b16 %v581
    %v2675 = vunpack.c.h.b16 %v581
    %v2676 = vunpack.c.l.b16 %v582
    %v2677 = vunpack.c.h.b16 %v582
    %v2678 = vunpack.c.l.b16 %v583
    %v2679 = vunpack.c.h.b16 %v583
    %v2680 = vunpack.c.l.b16 %v584
    %v2681 = vunpack.c.h.b16 %v584
    %v2682 = vunpack.c.l.b16 %v585
    %v2683 = vunpack.c.h.b16 %v585
    %v2684 = vunpack.c.l.b16 %v586
    %v2685 = vunpack.c.h.b16 %v586
    %v2686 = vunpack.c.l.b16 %v587
    %v2687 = vunpack.c.h.b16 %v587
    %v2688 = vunpack.c.l.b16 %v588
    %v2689 = vunpack.c.h.b16 %v588
    %v2690 = vunpack.c.l.b16 %v589
    %v2691 = vunpack.c.h.b16 %v589
    %v2692 = vunpack.c.l.b16 %v590
    %v2693 = vunpack.c.h.b16 %v590
    %v2694 = vunpack.c.l.b16 %v591
    %v2695 = vunpack.c.h.b16 %v591
    %v2696 = vunpack.c.l.b16 %v592
    %v2697 = vunpack.c.h.b16 %v592
    %v2698 = vunpack.c.l.b16 %v593
    %v2699 = vunpack.c.h.b16 %v593
    %v2700 = vunpack.c.l.b16 %v594
    %v2701 = vunpack.c.h.b16 %v594
    %v2702 = vunpack.c.l.b16 %v595
    %v2703 = vunpack.c.h.b16 %v595
    %v2704 = vunpack.c.l.b16 %v596
    %v2705 = vunpack.c.h.b16 %v596
    %v2706 = vunpack.c.l.b16 %v597
    %v2707 = vunpack.c.h.b16 %v597
    %v2708 = vunpack.c.l.b16 %v598
    %v2709 = vunpack.c.h.b16 %v598
    %v2710 = vunpack.c.l.b16 %v599
    %v2711 = vunpack.c.h.b16 %v599
    %v2712 = vunpack.c.l.b16 %v600
    %v2713 = vunpack.c.h.b16 %v600
    %v2714 = vunpack.c.l.b16 %v601
    %v2715 = vunpack.c.h.b16 %v601
    %v2716 = vunpack.c.l.b16 %v602
    %v2717 = vunpack.c.h.b16 %v602
    %v2718 = vunpack.c.l.b16 %v603
    %v2719 = vunpack.c.h.b16 %v603
    %v2720 = vunpack.c.l.b16 %v604
    %v2721 = vunpack.c.h.b16 %v604
    %v2722 = vunpack.c.l.b16 %v605
    %v2723 = vunpack.c.h.b16 %v605
    %v2724 = vunpack.c.l.b16 %v606
    %v2725 = vunpack.c.h.b16 %v606
    %v2726 = vunpack.c.l.b16 %v607
    %v2727 = vunpack.c.h.b16 %v607
    %v2728 = vunpack.c.l.b16 %v608
    %v2729 = vunpack.c.h.b16 %v608
    %v2730 = vunpack.c.l.b16 %v609
    %v2731 = vunpack.c.h.b16 %v609
    %v2732 = vunpack.c.l.b16 %v610
    %v2733 = vunpack.c.h.b16 %v610
    %v2734 = vunpack.c.l.b16 %v611
    %v2735 = vunpack.c.h.b16 %v611
    %v2736 = vunpack.c.l.b16 %v612
    %v2737 = vunpack.c.h.b16 %v612
    %v2738 = vunpack.c.l.b16 %v613
    %v2739 = vunpack.c.h.b16 %v613
    %v2740 = vunpack.c.l.b16 %v614
    %v2741 = vunpack.c.h.b16 %v614
    %v2742 = vunpack.c.l.b16 %v615
    %v2743 = vunpack.c.h.b16 %v615
    %v2744 = vunpack.c.l.b16 %v616
    %v2745 = vunpack.c.h.b16 %v616
    %v2746 = vunpack.c.l.b16 %v617
    %v2747 = vunpack.c.h.b16 %v617
    %v2748 = vunpack.c.l.b16 %v618
    %v2749 = vunpack.c.h.b16 %v618
    %v2750 = vunpack.c.l.b16 %v619
    %v2751 = vunpack.c.h.b16 %v619
    %v2752 = vunpack.c.l.b16 %v620
    %v2753 = vunpack.c.h.b16 %v620
    %v2754 = vunpack.c.l.b16 %v621
    %v2755 = vunpack.c.h.b16 %v621
    %v2756 = vunpack.c.l.b16 %v622
    %v2757 = vunpack.c.h.b16 %v622
    %v2758 = vunpack.c.l.b16 %v623
    %v2759 = vunpack.c.h.b16 %v623
    %v2760 = vunpack.c.l.b16 %v624
    %v2761 = vunpack.c.h.b16 %v624
    %v2762 = vunpack.c.l.b16 %v625
    %v2763 = vunpack.c.h.b16 %v625
    %v2764 = vunpack.c.l.b16 %v626
    %v2765 = vunpack.c.h.b16 %v626
    %v2766 = vunpack.c.l.b16 %v627
    %v2767 = vunpack.c.h.b16 %v627
    %v2768 = vunpack.c.l.b16 %v628
    %v2769 = vunpack.c.h.b16 %v628
    %v2770 = vunpack.c.l.b16 %v629
    %v2771 = vunpack.c.h.b16 %v629
    %v2772 = vunpack.c.l.b16 %v630
    %v2773 = vunpack.c.h.b16 %v630
    %v2774 = vunpack.c.l.b16 %v631
    %v2775 = vunpack.c.h.b16 %v631
    %v2776 = vunpack.c.l.b16 %v632
    %v2777 = vunpack.c.h.b16 %v632
    %v2778 = vunpack.c.l.b16 %v633
    %v2779 = vunpack.c.h.b16 %v633
    %v2780 = vunpack.c.l.b16 %v634
    %v2781 = vunpack.c.h.b16 %v634
    %v2782 = vunpack.c.l.b16 %v635
    %v2783 = vunpack.c.h.b16 %v635
    %v2784 = vunpack.c.l.b16 %v636
    %v2785 = vunpack.c.h.b16 %v636
    %v2786 = vunpack.c.l.b16 %v637
    %v2787 = vunpack.c.h.b16 %v637
    %v2788 = vunpack.c.l.b16 %v638
    %v2789 = vunpack.c.h.b16 %v638
    %v2790 = vunpack.c.l.b16 %v639
    %v2791 = vunpack.c.h.b16 %v639
    %v2792 = vunpack.c.l.b16 %v640
    %v2793 = vunpack.c.h.b16 %v640
    %v2794 = vunpack.c.l.b16 %v641
    %v2795 = vunpack.c.h.b16 %v641
    %v2796 = vunpack.c.l.b16 %v642
    %v2797 = vunpack.c.h.b16 %v642
    %v2798 = vunpack.c.l.b16 %v643
    %v2799 = vunpack.c.h.b16 %v643
    %v2800 = vunpack.c.l.b16 %v644
    %v2801 = vunpack.c.h.b16 %v644
    %v2802 = vunpack.c.l.b16 %v645
    %v2803 = vunpack.c.h.b16 %v645
    %v2804 = vunpack.c.l.b16 %v646
    %v2805 = vunpack.c.h.b16 %v646
    %v2806 = vunpack.c.l.b16 %v647
    %v2807 = vunpack.c.h.b16 %v647
    %v2808 = vunpack.c.l.b16 %v648
    %v2809 = vunpack.c.h.b16 %v648
    %v2810 = vunpack.c.l.b16 %v649
    %v2811 = vunpack.c.h.b16 %v649
    %v2812 = vunpack.c.l.b16 %v650
    %v2813 = vunpack.c.h.b16 %v650
    %v2814 = vunpack.c.l.b16 %v651
    %v2815 = vunpack.c.h.b16 %v651
    %v2816 = vunpack.c.l.b16 %v652
    %v2817 = vunpack.c.h.b16 %v652
    %v2818 = vunpack.c.l.b16 %v653
    %v2819 = vunpack.c.h.b16 %v653
    %v2820 = vunpack.c.l.b16 %v654
    %v2821 = vunpack.c.h.b16 %v654
    %v2822 = vunpack.c.l.b16 %v655
    %v2823 = vunpack.c.h.b16 %v655
    %v2824 = vunpack.c.l.b16 %v656
    %v2825 = vunpack.c.h.b16 %v656
    %v2826 = vunpack.c.l.b16 %v657
    %v2827 = vunpack.c.h.b16 %v657
    %v2828 = vunpack.c.l.b16 %v658
    %v2829 = vunpack.c.h.b16 %v658
    %v2830 = vunpack.c.l.b16 %v659
    %v2831 = vunpack.c.h.b16 %v659
    %v2832 = vunpack.c.l.b16 %v660
    %v2833 = vunpack.c.h.b16 %v660
    %v2834 = vunpack.c.l.b16 %v661
    %v2835 = vunpack.c.h.b16 %v661
    %v2836 = vunpack.c.l.b16 %v662
    %v2837 = vunpack.c.h.b16 %v662
    %v2838 = vunpack.c.l.b16 %v663
    %v2839 = vunpack.c.h.b16 %v663
    %v2840 = vunpack.c.l.b16 %v664
    %v2841 = vunpack.c.h.b16 %v664
    %v2842 = vunpack.c.l.b16 %v665
    %v2843 = vunpack.c.h.b16 %v665
    %v2844 = vunpack.c.l.b16 %v666
    %v2845 = vunpack.c.h.b16 %v666
    %v2846 = vunpack.c.l.b16 %v667
    %v2847 = vunpack.c.h.b16 %v667
    %v2848 = vunpack.c.l.b16 %v668
    %v2849 = vunpack.c.h.b16 %v668
    %v2850 = vunpack.c.l.b16 %v669
    %v2851 = vunpack.c.h.b16 %v669
    %v2852 = vunpack.c.l.b16 %v670
    %v2853 = vunpack.c.h.b16 %v670
    %v2854 = vunpack.c.l.b16 %v671
    %v2855 = vunpack.c.h.b16 %v671
    %v2856 = vunpack.c.l.b16 %v672
    %v2857 = vunpack.c.h.b16 %v672
    %v2858 = vunpack.c.l.b16 %v673
    %v2859 = vunpack.c.h.b16 %v673
    %v2860 = vunpack.c.l.b16 %v674
    %v2861 = vunpack.c.h.b16 %v674
    %v2862 = vunpack.c.l.b16 %v675
    %v2863 = vunpack.c.h.b16 %v675
    %v2864 = vunpack.c.l.b16 %v676
    %v2865 = vunpack.c.h.b16 %v676
    %v2866 = vunpack.c.l.b16 %v677
    %v2867 = vunpack.c.h.b16 %v677
    %v2868 = vunpack.c.l.b16 %v678
    %v2869 = vunpack.c.h.b16 %v678
    %v2870 = vunpack.c.l.b16 %v679
    %v2871 = vunpack.c.h.b16 %v679
    %v2872 = vunpack.c.l.b16 %v680
    %v2873 = vunpack.c.h.b16 %v680
    %v2874 = vunpack.c.l.b16 %v681
    %v2875 = vunpack.c.h.b16 %v681
    %v2876 = vunpack.c.l.b16 %v682
    %v2877 = vunpack.c.h.b16 %v682
    %v2878 = vunpack.c.l.b16 %v683
    %v2879 = vunpack.c.h.b16 %v683
    %v2880 = vunpack.c.l.b16 %v684
    %v2881 = vunpack.c.h.b16 %v684
    %v2882 = vunpack.c.l.b16 %v685
    %v2883 = vunpack.c.h.b16 %v685
    %v2884 = vunpack.c.l.b16 %v686
    %v2885 = vunpack.c.h.b16 %v686
    %v2886 = vunpack.c.l.b16 %v687
    %v2887 = vunpack.c.h.b16 %v687
    %v2888 = vunpack.c.l.b16 %v688
    %v2889 = vunpack.c.h.b16 %v688
    %v2890 = vunpack.c.l.b16 %v689
    %v2891 = vunpack.c.h.b16 %v689
    %v2892 = vunpack.c.l.b16 %v690
    %v2893 = vunpack.c.h.b16 %v690
    %v2894 = vunpack.c.l.b16 %v691
    %v2895 = vunpack.c.h.b16 %v691
    %v2896 = vunpack.c.l.b16 %v692
    %v2897 = vunpack.c.h.b16 %v692
    %v2898 = vunpack.c.l.b16 %v693
    %v2899 = vunpack.c.h.b16 %v693
    %v2900 = vunpack.c.l.b16 %v694
    %v2901 = vunpack.c.h.b16 %v694
    %v2902 = vunpack.c.l.b16 %v695
    %v2903 = vunpack.c.h.b16 %v695
    %v2904 = vunpack.c.l.b16 %v696
    %v2905 = vunpack.c.h.b16 %v696
    %v2906 = vunpack.c.l.b16 %v697
    %v2907 = vunpack.c.h.b16 %v697
    %v2908 = vunpack.c.l.b16 %v698
    %v2909 = vunpack.c.h.b16 %v698
    %v2910 = vunpack.c.l.b16 %v699
    %v2911 = vunpack.c.h.b16 %v699
    %v2912 = vunpack.c.l.b16 %v700
    %v2913 = vunpack.c.h.b16 %v700
    %v2914 = vunpack.c.l.b16 %v701
    %v2915 = vunpack.c.h.b16 %v701
    %v2916 = vunpack.c.l.b16 %v702
    %v2917 = vunpack.c.h.b16 %v702
    %v2918 = vunpack.c.l.b16 %v703
    %v2919 = vunpack.c.h.b16 %v703
    %v2920 = vunpack.c.l.b16 %v704
    %v2921 = vunpack.c.h.b16 %v704
    %v2922 = vunpack.c.l.b16 %v705
    %v2923 = vunpack.c.h.b16 %v705
    %v2924 = vunpack.c.l.b16 %v706
    %v2925 = vunpack.c.h.b16 %v706
    %v2926 = vunpack.c.l.b16 %v707
    %v2927 = vunpack.c.h.b16 %v707
    %v2928 = vunpack.c.l.b16 %v708
    %v2929 = vunpack.c.h.b16 %v708
    %v2930 = vunpack.c.l.b16 %v709
    %v2931 = vunpack.c.h.b16 %v709
    %v2932 = vunpack.c.l.b16 %v710
    %v2933 = vunpack.c.h.b16 %v710
    %v2934 = vunpack.c.l.b16 %v711
    %v2935 = vunpack.c.h.b16 %v711
    %v2936 = vunpack.c.l.b16 %v712
    %v2937 = vunpack.c.h.b16 %v712
    %v2938 = vunpack.c.l.b16 %v713
    %v2939 = vunpack.c.h.b16 %v713
    %v2940 = vunpack.c.l.b16 %v714
    %v2941 = vunpack.c.h.b16 %v714
    %v2942 = vunpack.c.l.b16 %v715
    %v2943 = vunpack.c.h.b16 %v715
    %v2944 = vunpack.c.l.b16 %v716
    %v2945 = vunpack.c.h.b16 %v716
    %v2946 = vunpack.c.l.b16 %v717
    %v2947 = vunpack.c.h.b16 %v717
    %v2948 = vunpack.c.l.b16 %v718
    %v2949 = vunpack.c.h.b16 %v718
    %v2950 = vunpack.c.l.b16 %v719
    %v2951 = vunpack.c.h.b16 %v719
    %v2952 = vunpack.c.l.b16 %v720
    %v2953 = vunpack.c.h.b16 %v720
    %v2954 = vunpack.c.l.b16 %v721
    %v2955 = vunpack.c.h.b16 %v721
    %v2956 = vunpack.c.l.b16 %v722
    %v2957 = vunpack.c.h.b16 %v722
    %v2958 = vunpack.c.l.b16 %v723
    %v2959 = vunpack.c.h.b16 %v723
    %v2960 = vunpack.c.l.b16 %v724
    %v2961 = vunpack.c.h.b16 %v724
    %v2962 = vunpack.c.l.b16 %v725
    %v2963 = vunpack.c.h.b16 %v725
    %v2964 = vunpack.c.l.b16 %v726
    %v2965 = vunpack.c.h.b16 %v726
    %v2966 = vunpack.c.l.b16 %v727
    %v2967 = vunpack.c.h.b16 %v727
    %v2968 = vunpack.c.l.b16 %v728
    %v2969 = vunpack.c.h.b16 %v728
    %v2970 = vunpack.c.l.b16 %v729
    %v2971 = vunpack.c.h.b16 %v729
    %v2972 = vunpack.c.l.b16 %v730
    %v2973 = vunpack.c.h.b16 %v730
    %v2974 = vunpack.c.l.b16 %v731
    %v2975 = vunpack.c.h.b16 %v731
    %v2976 = vunpack.c.l.b16 %v732
    %v2977 = vunpack.c.h.b16 %v732
    %v2978 = vunpack.c.l.b16 %v733
    %v2979 = vunpack.c.h.b16 %v733
    %v2980 = vunpack.c.l.b16 %v734
    %v2981 = vunpack.c.h.b16 %v734
    %v2982 = vunpack.c.l.b16 %v735
    %v2983 = vunpack.c.h.b16 %v735
    %v2984 = vunpack.c.l.b16 %v736
    %v2985 = vunpack.c.h.b16 %v736
    %v2986 = vunpack.c.l.b16 %v737
    %v2987 = vunpack.c.h.b16 %v737
    %v2988 = vunpack.c.l.b16 %v738
    %v2989 = vunpack.c.h.b16 %v738
    %v2990 = vunpack.c.l.b16 %v739
    %v2991 = vunpack.c.h.b16 %v739
    %v2992 = vunpack.c.l.b16 %v740
    %v2993 = vunpack.c.h.b16 %v740
    %v2994 = vunpack.c.l.b16 %v741
    %v2995 = vunpack.c.h.b16 %v741
    %v2996 = vunpack.c.l.b16 %v742
    %v2997 = vunpack.c.h.b16 %v742
    %v2998 = vunpack.c.l.b16 %v743
    %v2999 = vunpack.c.h.b16 %v743
    %v3000 = vunpack.c.l.b16 %v744
    %v3001 = vunpack.c.h.b16 %v744
    %v3002 = vunpack.c.l.b16 %v745
    %v3003 = vunpack.c.h.b16 %v745
    %v3004 = vunpack.c.l.b16 %v746
    %v3005 = vunpack.c.h.b16 %v746
    %v3006 = vunpack.c.l.b16 %v747
    %v3007 = vunpack.c.h.b16 %v747
    %v3008 = vunpack.c.l.b16 %v748
    %v3009 = vunpack.c.h.b16 %v748
    %v3010 = vunpack.c.l.b16 %v749
    %v3011 = vunpack.c.h.b16 %v749
    %v3012 = vunpack.c.l.b16 %v750
    %v3013 = vunpack.c.h.b16 %v750
    %v3014 = vunpack.c.l.b16 %v751
    %v3015 = vunpack.c.h.b16 %v751
    %v3016 = vunpack.c.l.b16 %v752
    %v3017 = vunpack.c.h.b16 %v752
    %v3018 = vunpack.c.l.b16 %v753
    %v3019 = vunpack.c.h.b16 %v753
    %v3020 = vunpack.c.l.b16 %v754
    %v3021 = vunpack.c.h.b16 %v754
    %v3022 = vunpack.c.l.b16 %v755
    %v3023 = vunpack.c.h.b16 %v755
    %v3024 = vunpack.c.l.b16 %v756
    %v3025 = vunpack.c.h.b16 %v756
    %v3026 = vunpack.c.l.b16 %v757
    %v3027 = vunpack.c.h.b16 %v757
    %v3028 = vunpack.c.l.b16 %v758
    %v3029 = vunpack.c.h.b16 %v758
    %v3030 = vunpack.c.l.b16 %v759
    %v3031 = vunpack.c.h.b16 %v759
    %v3032 = vunpack.c.l.b16 %v760
    %v3033 = vunpack.c.h.b16 %v760
    %v3034 = vunpack.c.l.b16 %v761
    %v3035 = vunpack.c.h.b16 %v761
    %v3036 = vunpack.c.l.b16 %v762
    %v3037 = vunpack.c.h.b16 %v762
    %v3038 = vunpack.c.l.b16 %v763
    %v3039 = vunpack.c.h.b16 %v763
    %v3040 = vunpack.c.l.b16 %v764
    %v3041 = vunpack.c.h.b16 %v764
    %v3042 = vunpack.c.l.b16 %v765
    %v3043 = vunpack.c.h.b16 %v765
    %v3044 = vunpack.c.l.b16 %v766
    %v3045 = vunpack.c.h.b16 %v766
    %v3046 = vunpack.c.l.b16 %v767
    %v3047 = vunpack.c.h.b16 %v767
    %v3048 = vunpack.c.l.b16 %v768
    %v3049 = vunpack.c.h.b16 %v768
    %v3050 = vunpack.c.l.b16 %v769
    %v3051 = vunpack.c.h.b16 %v769
    %v3052 = vunpack.c.l.b16 %v770
    %v3053 = vunpack.c.h.b16 %v770
    %v3054 = vunpack.c.l.b16 %v771
    %v3055 = vunpack.c.h.b16 %v771
    %v3056 = vunpack.c.l.b16 %v772
    %v3057 = vunpack.c.h.b16 %v772
    %v3058 = vunpack.c.l.b16 %v773
    %v3059 = vunpack.c.h.b16 %v773
    %v3060 = vunpack.c.l.b16 %v774
    %v3061 = vunpack.c.h.b16 %v774
    %v3062 = vunpack.c.l.b16 %v775
    %v3063 = vunpack.c.h.b16 %v775
    %v3064 = vunpack.c.l.b16 %v776
    %v3065 = vunpack.c.h.b16 %v776
    %v3066 = vunpack.c.l.b16 %v777
    %v3067 = vunpack.c.h.b16 %v777
    %v3068 = vunpack.c.l.b16 %v778
    %v3069 = vunpack.c.h.b16 %v778
    %v3070 = vunpack.c.l.b16 %v779
    %v3071 = vunpack.c.h.b16 %v779
    %v3072 = vunpack.c.l.b16 %v780
    %v3073 = vunpack.c.h.b16 %v780
    %v3074 = vunpack.c.l.b16 %v781
    %v3075 = vunpack.c.h.b16 %v781
    %v3076 = vunpack.c.l.b16 %v782
    %v3077 = vunpack.c.h.b16 %v782
    %v3078 = vunpack.c.l.b16 %v783
    %v3079 = vunpack.c.h.b16 %v783
    %v3080 = vunpack.c.l.b16 %v784
    %v3081 = vunpack.c.h.b16 %v784
    %v3082 = vunpack.c.l.b16 %v785
    %v3083 = vunpack.c.h.b16 %v785
    %v3084 = vunpack.c.l.b16 %v786
    %v3085 = vunpack.c.h.b16 %v786
    %v3086 = vunpack.c.l.b16 %v787
    %v3087 = vunpack.c.h.b16 %v787
    %v3088 = vunpack.c.l.b16 %v788
    %v3089 = vunpack.c.h.b16 %v788
    %v3090 = vunpack.c.l.b16 %v789
    %v3091 = vunpack.c.h.b16 %v789
    %v3092 = vunpack.c.l.b16 %v790
    %v3093 = vunpack.c.h.b16 %v790
    %v3094 = vunpack.c.l.b16 %v791
    %v3095 = vunpack.c.h.b16 %v791
    %v3096 = vunpack.c.l.b16 %v792
    %v3097 = vunpack.c.h.b16 %v792
    %v3098 = vunpack.c.l.b16 %v793
    %v3099 = vunpack.c.h.b16 %v793
    %v3100 = vunpack.c.l.b16 %v794
    %v3101 = vunpack.c.h.b16 %v794
    %v3102 = vunpack.c.l.b16 %v795
    %v3103 = vunpack.c.h.b16 %v795
    %v3104 = vunpack.c.l.b16 %v796
    %v3105 = vunpack.c.h.b16 %v796
    %v3106 = vunpack.c.l.b16 %v797
    %v3107 = vunpack.c.h.b16 %v797
    %v3108 = vunpack.c.l.b16 %v798
    %v3109 = vunpack.c.h.b16 %v798
    %v3110 = vunpack.c.l.b16 %v799
    %v3111 = vunpack.c.h.b16 %v799
    %v3112 = vunpack.c.l.b16 %v800
    %v3113 = vunpack.c.h.b16 %v800
    %v3114 = vunpack.c.l.b16 %v801
    %v3115 = vunpack.c.h.b16 %v801
    %v3116 = vunpack.c.l.b16 %v802
    %v3117 = vunpack.c.h.b16 %v802
    %v3118 = vunpack.c.l.b16 %v803
    %v3119 = vunpack.c.h.b16 %v803
    %v3120 = vunpack.c.l.b16 %v804
    %v3121 = vunpack.c.h.b16 %v804
    %v3122 = vunpack.c.l.b16 %v805
    %v3123 = vunpack.c.h.b16 %v805
    %v3124 = vunpack.c.l.b16 %v806
    %v3125 = vunpack.c.h.b16 %v806
    %v3126 = vunpack.c.l.b16 %v807
    %v3127 = vunpack.c.h.b16 %v807
    %v3128 = vunpack.c.l.b16 %v808
    %v3129 = vunpack.c.h.b16 %v808
    %v3130 = vunpack.c.l.b16 %v809
    %v3131 = vunpack.c.h.b16 %v809
    %v3132 = vunpack.c.l.b16 %v810
    %v3133 = vunpack.c.h.b16 %v810
    %v3134 = vunpack.c.l.b16 %v811
    %v3135 = vunpack.c.h.b16 %v811
    %v3136 = vunpack.c.l.b16 %v812
    %v3137 = vunpack.c.h.b16 %v812
    %v3138 = vunpack.c.l.b16 %v813
    %v3139 = vunpack.c.h.b16 %v813
    %v3140 = vunpack.c.l.b16 %v814
    %v3141 = vunpack.c.h.b16 %v814
    %v3142 = vunpack.c.l.b16 %v815
    %v3143 = vunpack.c.h.b16 %v815
    %v3144 = vunpack.c.l.b16 %v816
    %v3145 = vunpack.c.h.b16 %v816
    %v3146 = vunpack.c.l.b16 %v817
    %v3147 = vunpack.c.h.b16 %v817
    %v3148 = vunpack.c.l.b16 %v818
    %v3149 = vunpack.c.h.b16 %v818
    %v3150 = vunpack.c.l.b16 %v819
    %v3151 = vunpack.c.h.b16 %v819
    %v3152 = vunpack.c.l.b16 %v820
    %v3153 = vunpack.c.h.b16 %v820
    %v3154 = vunpack.c.l.b16 %v821
    %v3155 = vunpack.c.h.b16 %v821
    %v3156 = vunpack.c.l.b16 %v822
    %v3157 = vunpack.c.h.b16 %v822
    %v3158 = vunpack.c.l.b16 %v823
    %v3159 = vunpack.c.h.b16 %v823
    %v3160 = vunpack.c.l.b16 %v824
    %v3161 = vunpack.c.h.b16 %v824
    %v3162 = vunpack.c.l.b16 %v825
    %v3163 = vunpack.c.h.b16 %v825
    %v3164 = vunpack.c.l.b16 %v826
    %v3165 = vunpack.c.h.b16 %v826
    %v3166 = vunpack.c.l.b16 %v827
    %v3167 = vunpack.c.h.b16 %v827
    %v3168 = vunpack.c.l.b16 %v828
    %v3169 = vunpack.c.h.b16 %v828
    %v3170 = vunpack.c.l.b16 %v829
    %v3171 = vunpack.c.h.b16 %v829
    %v3172 = vunpack.c.l.b16 %v830
    %v3173 = vunpack.c.h.b16 %v830
    %v3174 = vunpack.c.l.b16 %v831
    %v3175 = vunpack.c.h.b16 %v831
    %v3176 = vunpack.c.l.b16 %v832
    %v3177 = vunpack.c.h.b16 %v832
    %v3178 = vunpack.c.l.b16 %v833
    %v3179 = vunpack.c.h.b16 %v833
    %v3180 = vunpack.c.l.b16 %v834
    %v3181 = vunpack.c.h.b16 %v834
    %v3182 = vunpack.c.l.b16 %v835
    %v3183 = vunpack.c.h.b16 %v835
    %v3184 = vunpack.c.l.b16 %v836
    %v3185 = vunpack.c.h.b16 %v836
    %v3186 = vunpack.c.l.b16 %v837
    %v3187 = vunpack.c.h.b16 %v837
    %v3188 = vunpack.c.l.b16 %v838
    %v3189 = vunpack.c.h.b16 %v838
    %v3190 = vunpack.c.l.b16 %v839
    %v3191 = vunpack.c.h.b16 %v839
    %v3192 = vunpack.c.l.b16 %v840
    %v3193 = vunpack.c.h.b16 %v840
    %v3194 = vunpack.c.l.b16 %v841
    %v3195 = vunpack.c.h.b16 %v841
    %v3196 = vunpack.c.l.b16 %v842
    %v3197 = vunpack.c.h.b16 %v842
    %v3198 = vunpack.c.l.b16 %v843
    %v3199 = vunpack.c.h.b16 %v843
    %v3200 = vunpack.c.l.b16 %v844
    %v3201 = vunpack.c.h.b16 %v844
    %v3202 = vunpack.c.l.b16 %v845
    %v3203 = vunpack.c.h.b16 %v845
    %v3204 = vunpack.c.l.b16 %v846
    %v3205 = vunpack.c.h.b16 %v846
    %v3206 = vunpack.c.l.b16 %v847
    %v3207 = vunpack.c.h.b16 %v847
    %v3208 = vunpack.c.l.b16 %v848
    %v3209 = vunpack.c.h.b16 %v848
    %v3210 = vunpack.c.l.b16 %v849
    %v3211 = vunpack.c.h.b16 %v849
    %v3212 = vunpack.c.l.b16 %v850
    %v3213 = vunpack.c.h.b16 %v850
    %v3214 = vunpack.c.l.b16 %v851
    %v3215 = vunpack.c.h.b16 %v851
    %v3216 = vunpack.c.l.b16 %v852
    %v3217 = vunpack.c.h.b16 %v852
    %v3218 = vunpack.c.l.b16 %v853
    %v3219 = vunpack.c.h.b16 %v853
    %v3220 = vunpack.c.l.b16 %v854
    %v3221 = vunpack.c.h.b16 %v854
    %v3222 = vunpack.c.l.b16 %v855
    %v3223 = vunpack.c.h.b16 %v855
    %v3224 = vunpack.c.l.b16 %v856
    %v3225 = vunpack.c.h.b16 %v856
    %v3226 = vunpack.c.l.b16 %v857
    %v3227 = vunpack.c.h.b16 %v857
    %v3228 = vunpack.c.l.b16 %v858
    %v3229 = vunpack.c.h.b16 %v858
    %v3230 = vunpack.c.l.b16 %v859
    %v3231 = vunpack.c.h.b16 %v859
    %v3232 = vunpack.c.l.b16 %v860
    %v3233 = vunpack.c.h.b16 %v860
    %v3234 = vunpack.c.l.b16 %v861
    %v3235 = vunpack.c.h.b16 %v861
    %v3236 = vunpack.c.l.b16 %v862
    %v3237 = vunpack.c.h.b16 %v862
    %v3238 = vunpack.c.l.b16 %v863
    %v3239 = vunpack.c.h.b16 %v863
    %v3240 = vunpack.c.l.b16 %v864
    %v3241 = vunpack.c.h.b16 %v864
    %v3242 = vunpack.c.l.b16 %v865
    %v3243 = vunpack.c.h.b16 %v865
    %v3244 = vunpack.c.l.b16 %v866
    %v3245 = vunpack.c.h.b16 %v866
    %v3246 = vunpack.c.l.b16 %v867
    %v3247 = vunpack.c.h.b16 %v867
    %v3248 = vunpack.c.l.b16 %v868
    %v3249 = vunpack.c.h.b16 %v868
    %v3250 = vunpack.c.l.b16 %v869
    %v3251 = vunpack.c.h.b16 %v869
    %v3252 = vunpack.c.l.b16 %v870
    %v3253 = vunpack.c.h.b16 %v870
    %v3254 = vunpack.c.l.b16 %v871
    %v3255 = vunpack.c.h.b16 %v871
    %v3256 = vunpack.c.l.b16 %v872
    %v3257 = vunpack.c.h.b16 %v872
    %v3258 = vunpack.c.l.b16 %v873
    %v3259 = vunpack.c.h.b16 %v873
    %v3260 = vunpack.c.l.b16 %v874
    %v3261 = vunpack.c.h.b16 %v874
    %v3262 = vunpack.c.l.b16 %v875
    %v3263 = vunpack.c.h.b16 %v875
    %v3264 = vunpack.c.l.b16 %v876
    %v3265 = vunpack.c.h.b16 %v876
    %v3266 = vunpack.c.l.b16 %v877
    %v3267 = vunpack.c.h.b16 %v877
    %v3268 = vunpack.c.l.b16 %v878
    %v3269 = vunpack.c.h.b16 %v878
    %v3270 = vunpack.c.l.b16 %v879
    %v3271 = vunpack.c.h.b16 %v879
    %v3272 = vunpack.c.l.b16 %v880
    %v3273 = vunpack.c.h.b16 %v880
    %v3274 = vunpack.c.l.b16 %v881
    %v3275 = vunpack.c.h.b16 %v881
    %v3276 = vunpack.c.l.b16 %v882
    %v3277 = vunpack.c.h.b16 %v882
    %v3278 = vunpack.c.l.b16 %v883
    %v3279 = vunpack.c.h.b16 %v883
    %v3280 = vunpack.c.l.b16 %v884
    %v3281 = vunpack.c.h.b16 %v884
    %v3282 = vunpack.c.l.b16 %v885
    %v3283 = vunpack.c.h.b16 %v885
    %v3284 = vunpack.c.l.b16 %v886
    %v3285 = vunpack.c.h.b16 %v886
    %v3286 = vunpack.c.l.b16 %v887
    %v3287 = vunpack.c.h.b16 %v887
    %v3288 = vunpack.c.l.b16 %v888
    %v3289 = vunpack.c.h.b16 %v888
    %v3290 = vunpack.c.l.b16 %v889
    %v3291 = vunpack.c.h.b16 %v889
    %v3292 = vunpack.c.l.b16 %v890
    %v3293 = vunpack.c.h.b16 %v890
    %v3294 = vunpack.c.l.b16 %v891
    %v3295 = vunpack.c.h.b16 %v891
    %v3296 = vunpack.c.l.b16 %v892
    %v3297 = vunpack.c.h.b16 %v892
    %v3298 = vunpack.c.l.b16 %v893
    %v3299 = vunpack.c.h.b16 %v893
    %v3300 = vunpack.c.l.b16 %v894
    %v3301 = vunpack.c.h.b16 %v894
    %v3302 = vunpack.c.l.b16 %v895
    %v3303 = vunpack.c.h.b16 %v895
    %v3304 = vunpack.c.l.b16 %v896
    %v3305 = vunpack.c.h.b16 %v896
    %v3306 = vpack.c.b16 %v1786, %v1770
    %v3307 = vpack.c.b16 %v1787, %v1771
    %v3308 = vpack.c.b16 %v1788, %v1772
    %v3309 = vpack.c.b16 %v1789, %v1773
    %v3310 = vpack.c.b16 %v1790, %v1774
    %v3311 = vpack.c.b16 %v1791, %v1775
    %v3312 = vpack.c.b16 %v1792, %v1776
    %v3313 = vpack.c.b16 %v1793, %v1777
    %v3314 = vpack.c.b16 %v1794, %v1778
    %v3315 = vpack.c.b16 %v1795, %v1779
    %v3316 = vpack.c.b16 %v1796, %v1780
    %v3317 = vpack.c.b16 %v1797, %v1781
    %v3318 = vpack.c.b16 %v1798, %v1782
    %v3319 = vpack.c.b16 %v1799, %v1783
    %v3320 = vpack.c.b16 %v1800, %v1784
    %v3321 = vpack.c.b16 %v1801, %v1785
    %v3322 = vpack.c.b16 %v1818, %v1802
    %v3323 = vpack.c.b16 %v1819, %v1803
    %v3324 = vpack.c.b16 %v1820, %v1804
    %v3325 = vpack.c.b16 %v1821, %v1805
    %v3326 = vpack.c.b16 %v1822, %v1806
    %v3327 = vpack.c.b16 %v1823, %v1807
    %v3328 = vpack.c.b16 %v1824, %v1808
    %v3329 = vpack.c.b16 %v1825, %v1809
    %v3330 = vpack.c.b16 %v1826, %v1810
    %v3331 = vpack.c.b16 %v1827, %v1811
    %v3332 = vpack.c.b16 %v1828, %v1812
    %v3333 = vpack.c.b16 %v1829, %v1813
    %v3334 = vpack.c.b16 %v1830, %v1814
    %v3335 = vpack.c.b16 %v1831, %v1815
    %v3336 = vpack.c.b16 %v1832, %v1816
    %v3337 = vpack.c.b16 %v1833, %v1817
    %v3338 = vpack.c.b16 %v1850, %v1834
    %v3339 = vpack.c.b16 %v1851, %v1835
    %v3340 = vpack.c.b16 %v1852, %v1836
    %v3341 = vpack.c.b16 %v1853, %v1837
    %v3342 = vpack.c.b16 %v1854, %v1838
    %v3343 = vpack.c.b16 %v1855, %v1839
    %v3344 = vpack.c.b16 %v1856, %v1840
    %v3345 = vpack.c.b16 %v1857, %v1841
    %v3346 = vpack.c.b16 %v1858, %v1842
    %v3347 = vpack.c.b16 %v1859, %v1843
    %v3348 = vpack.c.b16 %v1860, %v1844
    %v3349 = vpack.c.b16 %v1861, %v1845
    %v3350 = vpack.c.b16 %v1862, %v1846
    %v3351 = vpack.c.b16 %v1863, %v1847
    %v3352 = vpack.c.b16 %v1864, %v1848
    %v3353 = vpack.c.b16 %v1865, %v1849
    %v3354 = vpack.c.b16 %v1882, %v1866
    %v3355 = vpack.c.b16 %v1883, %v1867
    %v3356 = vpack.c.b16 %v1884, %v1868
    %v3357 = vpack.c.b16 %v1885, %v1869
    %v3358 = vpack.c.b16 %v1886, %v1870
    %v3359 = vpack.c.b16 %v1887, %v1871
    %v3360 = vpack.c.b16 %v1888, %v1872
    %v3361 = vpack.c.b16 %v1889, %v1873
    %v3362 = vpack.c.b16 %v1890, %v1874
    %v3363 = vpack.c.b16 %v1891, %v1875
    %v3364 = vpack.c.b16 %v1892, %v1876
    %v3365 = vpack.c.b16 %v1893, %v1877
    %v3366 = vpack.c.b16 %v1894, %v1878
    %v3367 = vpack.c.b16 %v1895, %v1879
    %v3368 = vpack.c.b16 %v1896, %v1880
    %v3369 = vpack.c.b16 %v1897, %v1881
    %v3370 = vpack.c.b16 %v1914, %v1898
    %v3371 = vpack.c.b16 %v1915, %v1899
    %v3372 = vpack.c.b16 %v1916, %v1900
    %v3373 = vpack.c.b16 %v1917, %v1901
    %v3374 = vpack.c.b16 %v1918, %v1902
    %v3375 = vpack.c.b16 %v1919, %v1903
    %v3376 = vpack.c.b16 %v1920, %v1904
    %v3377 = vpack.c.b16 %v1921, %v1905
    %v3378 = vpack.c.b16 %v1922, %v1906
    %v3379 = vpack.c.b16 %v1923, %v1907
    %v3380 = vpack.c.b16 %v1924, %v1908
    %v3381 = vpack.c.b16 %v1925, %v1909
    %v3382 = vpack.c.b16 %v1926, %v1910
    %v3383 = vpack.c.b16 %v1927, %v1911
    %v3384 = vpack.c.b16 %v1928, %v1912
    %v3385 = vpack.c.b16 %v1929, %v1913
    %v3386 = vpack.c.b16 %v1946, %v1930
    %v3387 = vpack.c.b16 %v1947, %v1931
    %v3388 = vpack.c.b16 %v1948, %v1932
    %v3389 = vpack.c.b16 %v1949, %v1933
    %v3390 = vpack.c.b16 %v1950, %v1934
    %v3391 = vpack.c.b16 %v1951, %v1935
    %v3392 = vpack.c.b16 %v1952, %v1936
    %v3393 = vpack.c.b16 %v1953, %v1937
    %v3394 = vpack.c.b16 %v1954, %v1938
    %v3395 = vpack.c.b16 %v1955, %v1939
    %v3396 = vpack.c.b16 %v1956, %v1940
    %v3397 = vpack.c.b16 %v1957, %v1941
    %v3398 = vpack.c.b16 %v1958, %v1942
    %v3399 = vpack.c.b16 %v1959, %v1943
    %v3400 = vpack.c.b16 %v1960, %v1944
    %v3401 = vpack.c.b16 %v1961, %v1945
    %v3402 = vpack.c.b16 %v1978, %v1962
    %v3403 = vpack.c.b16 %v1979, %v1963
    %v3404 = vpack.c.b16 %v1980, %v1964
    %v3405 = vpack.c.b16 %v1981, %v1965
    %v3406 = vpack.c.b16 %v1982, %v1966
    %v3407 = vpack.c.b16 %v1983, %v1967
    %v3408 = vpack.c.b16 %v1984, %v1968
    %v3409 = vpack.c.b16 %v1985, %v1969
    %v3410 = vpack.c.b16 %v1986, %v1970
    %v3411 = vpack.c.b16 %v1987, %v1971
    %v3412 = vpack.c.b16 %v1988, %v1972
    %v3413 = vpack.c.b16 %v1989, %v1973
    %v3414 = vpack.c.b16 %v1990, %v1974
    %v3415 = vpack.c.b16 %v1991, %v1975
    %v3416 = vpack.c.b16 %v1992, %v1976
    %v3417 = vpack.c.b16 %v1993, %v1977
    %v3418 = vpack.c.b16 %v2010, %v1994
    %v3419 = vpack.c.b16 %v2011, %v1995
    %v3420 = vpack.c.b16 %v2012, %v1996
    %v3421 = vpack.c.b16 %v2013, %v1997
    %v3422 = vpack.c.b16 %v2014, %v1998
    %v3423 = vpack.c.b16 %v2015, %v1999
    %v3424 = vpack.c.b16 %v2016, %v2000
    %v3425 = vpack.c.b16 %v2017, %v2001
    %v3426 = vpack.c.b16 %v2018, %v2002
    %v3427 = vpack.c.b16 %v2019, %v2003
    %v3428 = vpack.c.b16 %v2020, %v2004
    %v3429 = vpack.c.b16 %v2021, %v2005
    %v3430 = vpack.c.b16 %v2022, %v2006
    %v3431 = vpack.c.b16 %v2023, %v2007
    %v3432 = vpack.c.b16 %v2024, %v2008
    %v3433 = vpack.c.b16 %v2025, %v2009
    %v3434 = vpack.c.b16 %v2042, %v2026
    %v3435 = vpack.c.b16 %v2043, %v2027
    %v3436 = vpack.c.b16 %v2044, %v2028
    %v3437 = vpack.c.b16 %v2045, %v2029
    %v3438 = vpack.c.b16 %v2046, %v2030
    %v3439 = vpack.c.b16 %v2047, %v2031
    %v3440 = vpack.c.b16 %v2048, %v2032
    %v3441 = vpack.c.b16 %v2049, %v2033
    %v3442 = vpack.c.b16 %v2050, %v2034
    %v3443 = vpack.c.b16 %v2051, %v2035
    %v3444 = vpack.c.b16 %v2052, %v2036
    %v3445 = vpack.c.b16 %v2053, %v2037
    %v3446 = vpack.c.b16 %v2054, %v2038
    %v3447 = vpack.c.b16 %v2055, %v2039
    %v3448 = vpack.c.b16 %v2056, %v2040
    %v3449 = vpack.c.b16 %v2057, %v2041
    %v3450 = vpack.c.b16 %v2074, %v2058
    %v3451 = vpack.c.b16 %v2075, %v2059
    %v3452 = vpack.c.b16 %v2076, %v2060
    %v3453 = vpack.c.b16 %v2077, %v2061
    %v3454 = vpack.c.b16 %v2078, %v2062
    %v3455 = vpack.c.b16 %v2079, %v2063
    %v3456 = vpack.c.b16 %v2080, %v2064
    %v3457 = vpack.c.b16 %v2081, %v2065
    %v3458 = vpack.c.b16 %v2082, %v2066
    %v3459 = vpack.c.b16 %v2083, %v2067
    %v3460 = vpack.c.b16 %v2084, %v2068
    %v3461 = vpack.c.b16 %v2085, %v2069
    %v3462 = vpack.c.b16 %v2086, %v2070
    %v3463 = vpack.c.b16 %v2087, %v2071
    %v3464 = vpack.c.b16 %v2088, %v2072
    %v3465 = vpack.c.b16 %v2089, %v2073
    %v3466 = vpack.c.b16 %v2106, %v2090
    %v3467 = vpack.c.b16 %v2107, %v2091
    %v3468 = vpack.c.b16 %v2108, %v2092
    %v3469 = vpack.c.b16 %v2109, %v2093
    %v3470 = vpack.c.b16 %v2110, %v2094
    %v3471 = vpack.c.b16 %v2111, %v2095
    %v3472 = vpack.c.b16 %v2112, %v2096
    %v3473 = vpack.c.b16 %v2113, %v2097
    %v3474 = vpack.c.b16 %v2114, %v2098
    %v3475 = vpack.c.b16 %v2115, %v2099
    %v3476 = vpack.c.b16 %v2116, %v2100
    %v3477 = vpack.c.b16 %v2117, %v2101
    %v3478 = vpack.c.b16 %v2118, %v2102
    %v3479 = vpack.c.b16 %v2119, %v2103
    %v3480 = vpack.c.b16 %v2120, %v2104
    %v3481 = vpack.c.b16 %v2121, %v2105
    %v3482 = vpack.c.b16 %v2138, %v2122
    %v3483 = vpack.c.b16 %v2139, %v2123
    %v3484 = vpack.c.b16 %v2140, %v2124
    %v3485 = vpack.c.b16 %v2141, %v2125
    %v3486 = vpack.c.b16 %v2142, %v2126
    %v3487 = vpack.c.b16 %v2143, %v2127
    %v3488 = vpack.c.b16 %v2144, %v2128
    %v3489 = vpack.c.b16 %v2145, %v2129
    %v3490 = vpack.c.b16 %v2146, %v2130
    %v3491 = vpack.c.b16 %v2147, %v2131
    %v3492 = vpack.c.b16 %v2148, %v2132
    %v3493 = vpack.c.b16 %v2149, %v2133
    %v3494 = vpack.c.b16 %v2150, %v2134
    %v3495 = vpack.c.b16 %v2151, %v2135
    %v3496 = vpack.c.b16 %v2152, %v2136
    %v3497 = vpack.c.b16 %v2153, %v2137
    %v3498 = vpack.c.b16 %v2170, %v2154
    %v3499 = vpack.c.b16 %v2171, %v2155
    %v3500 = vpack.c.b16 %v2172, %v2156
    %v3501 = vpack.c.b16 %v2173, %v2157
    %v3502 = vpack.c.b16 %v2174, %v2158
    %v3503 = vpack.c.b16 %v2175, %v2159
    %v3504 = vpack.c.b16 %v2176, %v2160
    %v3505 = vpack.c.b16 %v2177, %v2161
    %v3506 = vpack.c.b16 %v2178, %v2162
    %v3507 = vpack.c.b16 %v2179, %v2163
    %v3508 = vpack.c.b16 %v2180, %v2164
    %v3509 = vpack.c.b16 %v2181, %v2165
    %v3510 = vpack.c.b16 %v2182, %v2166
    %v3511 = vpack.c.b16 %v2183, %v2167
    %v3512 = vpack.c.b16 %v2184, %v2168
    %v3513 = vpack.c.b16 %v2185, %v2169
    %v3514 = vpack.c.b16 %v2202, %v2186
    %v3515 = vpack.c.b16 %v2203, %v2187
    %v3516 = vpack.c.b16 %v2204, %v2188
    %v3517 = vpack.c.b16 %v2205, %v2189
    %v3518 = vpack.c.b16 %v2206, %v2190
    %v3519 = vpack.c.b16 %v2207, %v2191
    %v3520 = vpack.c.b16 %v2208, %v2192
    %v3521 = vpack.c.b16 %v2209, %v2193
    %v3522 = vpack.c.b16 %v2210, %v2194
    %v3523 = vpack.c.b16 %v2211, %v2195
    %v3524 = vpack.c.b16 %v2212, %v2196
    %v3525 = vpack.c.b16 %v2213, %v2197
    %v3526 = vpack.c.b16 %v2214, %v2198
    %v3527 = vpack.c.b16 %v2215, %v2199
    %v3528 = vpack.c.b16 %v2216, %v2200
    %v3529 = vpack.c.b16 %v2217, %v2201
    %v3530 = vpack.c.b16 %v2234, %v2218
    %v3531 = vpack.c.b16 %v2235, %v2219
    %v3532 = vpack.c.b16 %v2236, %v2220
    %v3533 = vpack.c.b16 %v2237, %v2221
    %v3534 = vpack.c.b16 %v2238, %v2222
    %v3535 = vpack.c.b16 %v2239, %v2223
    %v3536 = vpack.c.b16 %v2240, %v2224
    %v3537 = vpack.c.b16 %v2241, %v2225
    %v3538 = vpack.c.b16 %v2242, %v2226
    %v3539 = vpack.c.b16 %v2243, %v2227
    %v3540 = vpack.c.b16 %v2244, %v2228
    %v3541 = vpack.c.b16 %v2245, %v2229
    %v3542 = vpack.c.b16 %v2246, %v2230
    %v3543 = vpack.c.b16 %v2247, %v2231
    %v3544 = vpack.c.b16 %v2248, %v2232
    %v3545 = vpack.c.b16 %v2249, %v2233
    %v3546 = vpack.c.b16 %v2266, %v2250
    %v3547 = vpack.c.b16 %v2267, %v2251
    %v3548 = vpack.c.b16 %v2268, %v2252
    %v3549 = vpack.c.b16 %v2269, %v2253
    %v3550 = vpack.c.b16 %v2270, %v2254
    %v3551 = vpack.c.b16 %v2271, %v2255
    %v3552 = vpack.c.b16 %v2272, %v2256
    %v3553 = vpack.c.b16 %v2273, %v2257
    %v3554 = vpack.c.b16 %v2274, %v2258
    %v3555 = vpack.c.b16 %v2275, %v2259
    %v3556 = vpack.c.b16 %v2276, %v2260
    %v3557 = vpack.c.b16 %v2277, %v2261
    %v3558 = vpack.c.b16 %v2278, %v2262
    %v3559 = vpack.c.b16 %v2279, %v2263
    %v3560 = vpack.c.b16 %v2280, %v2264
    %v3561 = vpack.c.b16 %v2281, %v2265
    %v3562 = vpack.c.b16 %v2298, %v2282
    %v3563 = vpack.c.b16 %v2299, %v2283
    %v3564 = vpack.c.b16 %v2300, %v2284
    %v3565 = vpack.c.b16 %v2301, %v2285
    %v3566 = vpack.c.b16 %v2302, %v2286
    %v3567 = vpack.c.b16 %v2303, %v2287
    %v3568 = vpack.c.b16 %v2304, %v2288
    %v3569 = vpack.c.b16 %v2305, %v2289
    %v3570 = vpack.c.b16 %v2306, %v2290
    %v3571 = vpack.c.b16 %v2307, %v2291
    %v3572 = vpack.c.b16 %v2308, %v2292
    %v3573 = vpack.c.b16 %v2309, %v2293
    %v3574 = vpack.c.b16 %v2310, %v2294
    %v3575 = vpack.c.b16 %v2311, %v2295
    %v3576 = vpack.c.b16 %v2312, %v2296
    %v3577 = vpack.c.b16 %v2313, %v2297
    %v3578 = vpack.c.b16 %v2330, %v2314
    %v3579 = vpack.c.b16 %v2331, %v2315
    %v3580 = vpack.c.b16 %v2332, %v2316
    %v3581 = vpack.c.b16 %v2333, %v2317
    %v3582 = vpack.c.b16 %v2334, %v2318
    %v3583 = vpack.c.b16 %v2335, %v2319
    %v3584 = vpack.c.b16 %v2336, %v2320
    %v3585 = vpack.c.b16 %v2337, %v2321
    %v3586 = vpack.c.b16 %v2338, %v2322
    %v3587 = vpack.c.b16 %v2339, %v2323
    %v3588 = vpack.c.b16 %v2340, %v2324
    %v3589 = vpack.c.b16 %v2341, %v2325
    %v3590 = vpack.c.b16 %v2342, %v2326
    %v3591 = vpack.c.b16 %v2343, %v2327
    %v3592 = vpack.c.b16 %v2344, %v2328
    %v3593 = vpack.c.b16 %v2345, %v2329
    %v3594 = vpack.c.b16 %v2362, %v2346
    %v3595 = vpack.c.b16 %v2363, %v2347
    %v3596 = vpack.c.b16 %v2364, %v2348
    %v3597 = vpack.c.b16 %v2365, %v2349
    %v3598 = vpack.c.b16 %v2366, %v2350
    %v3599 = vpack.c.b16 %v2367, %v2351
    %v3600 = vpack.c.b16 %v2368, %v2352
    %v3601 = vpack.c.b16 %v2369, %v2353
    %v3602 = vpack.c.b16 %v2370, %v2354
    %v3603 = vpack.c.b16 %v2371, %v2355
    %v3604 = vpack.c.b16 %v2372, %v2356
    %v3605 = vpack.c.b16 %v2373, %v2357
    %v3606 = vpack.c.b16 %v2374, %v2358
    %v3607 = vpack.c.b16 %v2375, %v2359
    %v3608 = vpack.c.b16 %v2376, %v2360
    %v3609 = vpack.c.b16 %v2377, %v2361
    %v3610 = vpack.c.b16 %v2394, %v2378
    %v3611 = vpack.c.b16 %v2395, %v2379
    %v3612 = vpack.c.b16 %v2396, %v2380
    %v3613 = vpack.c.b16 %v2397, %v2381
    %v3614 = vpack.c.b16 %v2398, %v2382
    %v3615 = vpack.c.b16 %v2399, %v2383
    %v3616 = vpack.c.b16 %v2400, %v2384
    %v3617 = vpack.c.b16 %v2401, %v2385
    %v3618 = vpack.c.b16 %v2402, %v2386
    %v3619 = vpack.c.b16 %v2403, %v2387
    %v3620 = vpack.c.b16 %v2404, %v2388
    %v3621 = vpack.c.b16 %v2405, %v2389
    %v3622 = vpack.c.b16 %v2406, %v2390
    %v3623 = vpack.c.b16 %v2407, %v2391
    %v3624 = vpack.c.b16 %v2408, %v2392
    %v3625 = vpack.c.b16 %v2409, %v2393
    %v3626 = vpack.c.b16 %v2426, %v2410
    %v3627 = vpack.c.b16 %v2427, %v2411
    %v3628 = vpack.c.b16 %v2428, %v2412
    %v3629 = vpack.c.b16 %v2429, %v2413
    %v3630 = vpack.c.b16 %v2430, %v2414
    %v3631 = vpack.c.b16 %v2431, %v2415
    %v3632 = vpack.c.b16 %v2432, %v2416
    %v3633 = vpack.c.b16 %v2433, %v2417
    %v3634 = vpack.c.b16 %v2434, %v2418
    %v3635 = vpack.c.b16 %v2435, %v2419
    %v3636 = vpack.c.b16 %v2436, %v2420
    %v3637 = vpack.c.b16 %v2437, %v2421
    %v3638 = vpack.c.b16 %v2438, %v2422
    %v3639 = vpack.c.b16 %v2439, %v2423
    %v3640 = vpack.c.b16 %v2440, %v2424
    %v3641 = vpack.c.b16 %v2441, %v2425
    %v3642 = vpack.c.b16 %v2458, %v2442
    %v3643 = vpack.c.b16 %v2459, %v2443
    %v3644 = vpack.c.b16 %v2460, %v2444
    %v3645 = vpack.c.b16 %v2461, %v2445
    %v3646 = vpack.c.b16 %v2462, %v2446
    %v3647 = vpack.c.b16 %v2463, %v2447
    %v3648 = vpack.c.b16 %v2464, %v2448
    %v3649 = vpack.c.b16 %v2465, %v2449
    %v3650 = vpack.c.b16 %v2466, %v2450
    %v3651 = vpack.c.b16 %v2467, %v2451
    %v3652 = vpack.c.b16 %v2468, %v2452
    %v3653 = vpack.c.b16 %v2469, %v2453
    %v3654 = vpack.c.b16 %v2470, %v2454
    %v3655 = vpack.c.b16 %v2471, %v2455
    %v3656 = vpack.c.b16 %v2472, %v2456
    %v3657 = vpack.c.b16 %v2473, %v2457
    %v3658 = vpack.c.b16 %v2490, %v2474
    %v3659 = vpack.c.b16 %v2491, %v2475
    %v3660 = vpack.c.b16 %v2492, %v2476
    %v3661 = vpack.c.b16 %v2493, %v2477
    %v3662 = vpack.c.b16 %v2494, %v2478
    %v3663 = vpack.c.b16 %v2495, %v2479
    %v3664 = vpack.c.b16 %v2496, %v2480
    %v3665 = vpack.c.b16 %v2497, %v2481
    %v3666 = vpack.c.b16 %v2498, %v2482
    %v3667 = vpack.c.b16 %v2499, %v2483
    %v3668 = vpack.c.b16 %v2500, %v2484
    %v3669 = vpack.c.b16 %v2501, %v2485
    %v3670 = vpack.c.b16 %v2502, %v2486
    %v3671 = vpack.c.b16 %v2503, %v2487
    %v3672 = vpack.c.b16 %v2504, %v2488
    %v3673 = vpack.c.b16 %v2505, %v2489
    %v3674 = vpack.c.b16 %v2522, %v2506
    %v3675 = vpack.c.b16 %v2523, %v2507
    %v3676 = vpack.c.b16 %v2524, %v2508
    %v3677 = vpack.c.b16 %v2525, %v2509
    %v3678 = vpack.c.b16 %v2526, %v2510
    %v3679 = vpack.c.b16 %v2527, %v2511
    %v3680 = vpack.c.b16 %v2528, %v2512
    %v3681 = vpack.c.b16 %v2529, %v2513
    %v3682 = vpack.c.b16 %v2530, %v2514
    %v3683 = vpack.c.b16 %v2531, %v2515
    %v3684 = vpack.c.b16 %v2532, %v2516
    %v3685 = vpack.c.b16 %v2533, %v2517
    %v3686 = vpack.c.b16 %v2534, %v2518
    %v3687 = vpack.c.b16 %v2535, %v2519
    %v3688 = vpack.c.b16 %v2536, %v2520
    %v3689 = vpack.c.b16 %v2537, %v2521
    %v3690 = vpack.c.b16 %v2554, %v2538
    %v3691 = vpack.c.b16 %v2555, %v2539
    %v3692 = vpack.c.b16 %v2556, %v2540
    %v3693 = vpack.c.b16 %v2557, %v2541
    %v3694 = vpack.c.b16 %v2558, %v2542
    %v3695 = vpack.c.b16 %v2559, %v2543
    %v3696 = vpack.c.b16 %v2560, %v2544
    %v3697 = vpack.c.b16 %v2561, %v2545
    %v3698 = vpack.c.b16 %v2562, %v2546
    %v3699 = vpack.c.b16 %v2563, %v2547
    %v3700 = vpack.c.b16 %v2564, %v2548
    %v3701 = vpack.c.b16 %v2565, %v2549
    %v3702 = vpack.c.b16 %v2566, %v2550
    %v3703 = vpack.c.b16 %v2567, %v2551
    %v3704 = vpack.c.b16 %v2568, %v2552
    %v3705 = vpack.c.b16 %v2569, %v2553
    %v3706 = vpack.c.b16 %v2586, %v2570
    %v3707 = vpack.c.b16 %v2587, %v2571
    %v3708 = vpack.c.b16 %v2588, %v2572
    %v3709 = vpack.c.b16 %v2589, %v2573
    %v3710 = vpack.c.b16 %v2590, %v2574
    %v3711 = vpack.c.b16 %v2591, %v2575
    %v3712 = vpack.c.b16 %v2592, %v2576
    %v3713 = vpack.c.b16 %v2593, %v2577
    %v3714 = vpack.c.b16 %v2594, %v2578
    %v3715 = vpack.c.b16 %v2595, %v2579
    %v3716 = vpack.c.b16 %v2596, %v2580
    %v3717 = vpack.c.b16 %v2597, %v2581
    %v3718 = vpack.c.b16 %v2598, %v2582
    %v3719 = vpack.c.b16 %v2599, %v2583
    %v3720 = vpack.c.b16 %v2600, %v2584
    %v3721 = vpack.c.b16 %v2601, %v2585
    %v3722 = vpack.c.b16 %v2618, %v2602
    %v3723 = vpack.c.b16 %v2619, %v2603
    %v3724 = vpack.c.b16 %v2620, %v2604
    %v3725 = vpack.c.b16 %v2621, %v2605
    %v3726 = vpack.c.b16 %v2622, %v2606
    %v3727 = vpack.c.b16 %v2623, %v2607
    %v3728 = vpack.c.b16 %v2624, %v2608
    %v3729 = vpack.c.b16 %v2625, %v2609
    %v3730 = vpack.c.b16 %v2626, %v2610
    %v3731 = vpack.c.b16 %v2627, %v2611
    %v3732 = vpack.c.b16 %v2628, %v2612
    %v3733 = vpack.c.b16 %v2629, %v2613
    %v3734 = vpack.c.b16 %v2630, %v2614
    %v3735 = vpack.c.b16 %v2631, %v2615
    %v3736 = vpack.c.b16 %v2632, %v2616
    %v3737 = vpack.c.b16 %v2633, %v2617
    %v3738 = vpack.c.b16 %v2650, %v2634
    %v3739 = vpack.c.b16 %v2651, %v2635
    %v3740 = vpack.c.b16 %v2652, %v2636
    %v3741 = vpack.c.b16 %v2653, %v2637
    %v3742 = vpack.c.b16 %v2654, %v2638
    %v3743 = vpack.c.b16 %v2655, %v2639
    %v3744 = vpack.c.b16 %v2656, %v2640
    %v3745 = vpack.c.b16 %v2657, %v2641
    %v3746 = vpack.c.b16 %v2658, %v2642
    %v3747 = vpack.c.b16 %v2659, %v2643
    %v3748 = vpack.c.b16 %v2660, %v2644
    %v3749 = vpack.c.b16 %v2661, %v2645
    %v3750 = vpack.c.b16 %v2662, %v2646
    %v3751 = vpack.c.b16 %v2663, %v2647
    %v3752 = vpack.c.b16 %v2664, %v2648
    %v3753 = vpack.c.b16 %v2665, %v2649
    %v3754 = vpack.c.b16 %v2682, %v2666
    %v3755 = vpack.c.b16 %v2683, %v2667
    %v3756 = vpack.c.b16 %v2684, %v2668
    %v3757 = vpack.c.b16 %v2685, %v2669
    %v3758 = vpack.c.b16 %v2686, %v2670
    %v3759 = vpack.c.b16 %v2687, %v2671
    %v3760 = vpack.c.b16 %v2688, %v2672
    %v3761 = vpack.c.b16 %v2689, %v2673
    %v3762 = vpack.c.b16 %v2690, %v2674
    %v3763 = vpack.c.b16 %v2691, %v2675
    %v3764 = vpack.c.b16 %v2692, %v2676
    %v3765 = vpack.c.b16 %v2693, %v2677
    %v3766 = vpack.c.b16 %v2694, %v2678
    %v3767 = vpack.c.b16 %v2695, %v2679
    %v3768 = vpack.c.b16 %v2696, %v2680
    %v3769 = vpack.c.b16 %v2697, %v2681
    %v3770 = vpack.c.b16 %v2714, %v2698
    %v3771 = vpack.c.b16 %v2715, %v2699
    %v3772 = vpack.c.b16 %v2716, %v2700
    %v3773 = vpack.c.b16 %v2717, %v2701
    %v3774 = vpack.c.b16 %v2718, %v2702
    %v3775 = vpack.c.b16 %v2719, %v2703
    %v3776 = vpack.c.b16 %v2720, %v2704
    %v3777 = vpack.c.b16 %v2721, %v2705
    %v3778 = vpack.c.b16 %v2722, %v2706
    %v3779 = vpack.c.b16 %v2723, %v2707
    %v3780 = vpack.c.b16 %v2724, %v2708
    %v3781 = vpack.c.b16 %v2725, %v2709
    %v3782 = vpack.c.b16 %v2726, %v2710
    %v3783 = vpack.c.b16 %v2727, %v2711
    %v3784 = vpack.c.b16 %v2728, %v2712
    %v3785 = vpack.c.b16 %v2729, %v2713
    %v3786 = vpack.c.b16 %v2746, %v2730
    %v3787 = vpack.c.b16 %v2747, %v2731
    %v3788 = vpack.c.b16 %v2748, %v2732
    %v3789 = vpack.c.b16 %v2749, %v2733
    %v3790 = vpack.c.b16 %v2750, %v2734
    %v3791 = vpack.c.b16 %v2751, %v2735
    %v3792 = vpack.c.b16 %v2752, %v2736
    %v3793 = vpack.c.b16 %v2753, %v2737
    %v3794 = vpack.c.b16 %v2754, %v2738
    %v3795 = vpack.c.b16 %v2755, %v2739
    %v3796 = vpack.c.b16 %v2756, %v2740
    %v3797 = vpack.c.b16 %v2757, %v2741
    %v3798 = vpack.c.b16 %v2758, %v2742
    %v3799 = vpack.c.b16 %v2759, %v2743
    %v3800 = vpack.c.b16 %v2760, %v2744
    %v3801 = vpack.c.b16 %v2761, %v2745
    %v3802 = vpack.c.b16 %v2778, %v2762
    %v3803 = vpack.c.b16 %v2779, %v2763
    %v3804 = vpack.c.b16 %v2780, %v2764
    %v3805 = vpack.c.b16 %v2781, %v2765
    %v3806 = vpack.c.b16 %v2782, %v2766
    %v3807 = vpack.c.b16 %v2783, %v2767
    %v3808 = vpack.c.b16 %v2784, %v2768
    %v3809 = vpack.c.b16 %v2785, %v2769
    %v3810 = vpack.c.b16 %v2786, %v2770
    %v3811 = vpack.c.b16 %v2787, %v2771
    %v3812 = vpack.c.b16 %v2788, %v2772
    %v3813 = vpack.c.b16 %v2789, %v2773
    %v3814 = vpack.c.b16 %v2790, %v2774
    %v3815 = vpack.c.b16 %v2791, %v2775
    %v3816 = vpack.c.b16 %v2792, %v2776
    %v3817 = vpack.c.b16 %v2793, %v2777
    %v3818 = vpack.c.b16 %v2810, %v2794
    %v3819 = vpack.c.b16 %v2811, %v2795
    %v3820 = vpack.c.b16 %v2812, %v2796
    %v3821 = vpack.c.b16 %v2813, %v2797
    %v3822 = vpack.c.b16 %v2814, %v2798
    %v3823 = vpack.c.b16 %v2815, %v2799
    %v3824 = vpack.c.b16 %v2816, %v2800
    %v3825 = vpack.c.b16 %v2817, %v2801
    %v3826 = vpack.c.b16 %v2818, %v2802
    %v3827 = vpack.c.b16 %v2819, %v2803
    %v3828 = vpack.c.b16 %v2820, %v2804
    %v3829 = vpack.c.b16 %v2821, %v2805
    %v3830 = vpack.c.b16 %v2822, %v2806
    %v3831 = vpack.c.b16 %v2823, %v2807
    %v3832 = vpack.c.b16 %v2824, %v2808
    %v3833 = vpack.c.b16 %v2825, %v2809
    %v3834 = vpack.c.b16 %v2842, %v2826
    %v3835 = vpack.c.b16 %v2843, %v2827
    %v3836 = vpack.c.b16 %v2844, %v2828
    %v3837 = vpack.c.b16 %v2845, %v2829
    %v3838 = vpack.c.b16 %v2846, %v2830
    %v3839 = vpack.c.b16 %v2847, %v2831
    %v3840 = vpack.c.b16 %v2848, %v2832
    %v3841 = vpack.c.b16 %v2849, %v2833
    %v3842 = vpack.c.b16 %v2850, %v2834
    %v3843 = vpack.c.b16 %v2851, %v2835
    %v3844 = vpack.c.b16 %v2852, %v2836
    %v3845 = vpack.c.b16 %v2853, %v2837
    %v3846 = vpack.c.b16 %v2854, %v2838
    %v3847 = vpack.c.b16 %v2855, %v2839
    %v3848 = vpack.c.b16 %v2856, %v2840
    %v3849 = vpack.c.b16 %v2857, %v2841
    %v3850 = vpack.c.b16 %v2874, %v2858
    %v3851 = vpack.c.b16 %v2875, %v2859
    %v3852 = vpack.c.b16 %v2876, %v2860
    %v3853 = vpack.c.b16 %v2877, %v2861
    %v3854 = vpack.c.b16 %v2878, %v2862
    %v3855 = vpack.c.b16 %v2879, %v2863
    %v3856 = vpack.c.b16 %v2880, %v2864
    %v3857 = vpack.c.b16 %v2881, %v2865
    %v3858 = vpack.c.b16 %v2882, %v2866
    %v3859 = vpack.c.b16 %v2883, %v2867
    %v3860 = vpack.c.b16 %v2884, %v2868
    %v3861 = vpack.c.b16 %v2885, %v2869
    %v3862 = vpack.c.b16 %v2886, %v2870
    %v3863 = vpack.c.b16 %v2887, %v2871
    %v3864 = vpack.c.b16 %v2888, %v2872
    %v3865 = vpack.c.b16 %v2889, %v2873
    %v3866 = vpack.c.b16 %v2906, %v2890
    %v3867 = vpack.c.b16 %v2907, %v2891
    %v3868 = vpack.c.b16 %v2908, %v2892
    %v3869 = vpack.c.b16 %v2909, %v2893
    %v3870 = vpack.c.b16 %v2910, %v2894
    %v3871 = vpack.c.b16 %v2911, %v2895
    %v3872 = vpack.c.b16 %v2912, %v2896
    %v3873 = vpack.c.b16 %v2913, %v2897
    %v3874 = vpack.c.b16 %v2914, %v2898
    %v3875 = vpack.c.b16 %v2915, %v2899
    %v3876 = vpack.c.b16 %v2916, %v2900
    %v3877 = vpack.c.b16 %v2917, %v2901
    %v3878 = vpack.c.b16 %v2918, %v2902
    %v3879 = vpack.c.b16 %v2919, %v2903
    %v3880 = vpack.c.b16 %v2920, %v2904
    %v3881 = vpack.c.b16 %v2921, %v2905
    %v3882 = vpack.c.b16 %v2938, %v2922
    %v3883 = vpack.c.b16 %v2939, %v2923
    %v3884 = vpack.c.b16 %v2940, %v2924
    %v3885 = vpack.c.b16 %v2941, %v2925
    %v3886 = vpack.c.b16 %v2942, %v2926
    %v3887 = vpack.c.b16 %v2943, %v2927
    %v3888 = vpack.c.b16 %v2944, %v2928
    %v3889 = vpack.c.b16 %v2945, %v2929
    %v3890 = vpack.c.b16 %v2946, %v2930
    %v3891 = vpack.c.b16 %v2947, %v2931
    %v3892 = vpack.c.b16 %v2948, %v2932
    %v3893 = vpack.c.b16 %v2949, %v2933
    %v3894 = vpack.c.b16 %v2950, %v2934
    %v3895 = vpack.c.b16 %v2951, %v2935
    %v3896 = vpack.c.b16 %v2952, %v2936
    %v3897 = vpack.c.b16 %v2953, %v2937
    %v3898 = vpack.c.b16 %v2970, %v2954
    %v3899 = vpack.c.b16 %v2971, %v2955
    %v3900 = vpack.c.b16 %v2972, %v2956
    %v3901 = vpack.c.b16 %v2973, %v2957
    %v3902 = vpack.c.b16 %v2974, %v2958
    %v3903 = vpack.c.b16 %v2975, %v2959
    %v3904 = vpack.c.b16 %v2976, %v2960
    %v3905 = vpack.c.b16 %v2977, %v2961
    %v3906 = vpack.c.b16 %v2978, %v2962
    %v3907 = vpack.c.b16 %v2979, %v2963
    %v3908 = vpack.c.b16 %v2980, %v2964
    %v3909 = vpack.c.b16 %v2981, %v2965
    %v3910 = vpack.c.b16 %v2982, %v2966
    %v3911 = vpack.c.b16 %v2983, %v2967
    %v3912 = vpack.c.b16 %v2984, %v2968
    %v3913 = vpack.c.b16 %v2985, %v2969
    %v3914 = vpack.c.b16 %v3002, %v2986
    %v3915 = vpack.c.b16 %v3003, %v2987
    %v3916 = vpack.c.b16 %v3004, %v2988
    %v3917 = vpack.c.b16 %v3005, %v2989
    %v3918 = vpack.c.b16 %v3006, %v2990
    %v3919 = vpack.c.b16 %v3007, %v2991
    %v3920 = vpack.c.b16 %v3008, %v2992
    %v3921 = vpack.c.b16 %v3009, %v2993
    %v3922 = vpack.c.b16 %v3010, %v2994
    %v3923 = vpack.c.b16 %v3011, %v2995
    %v3924 = vpack.c.b16 %v3012, %v2996
    %v3925 = vpack.c.b16 %v3013, %v2997
    %v3926 = vpack.c.b16 %v3014, %v2998
    %v3927 = vpack.c.b16 %v3015, %v2999
    %v3928 = vpack.c.b16 %v3016, %v3000
    %v3929 = vpack.c.b16 %v3017, %v3001
    %v3930 = vpack.c.b16 %v3034, %v3018
    %v3931 = vpack.c.b16 %v3035, %v3019
    %v3932 = vpack.c.b16 %v3036, %v3020
    %v3933 = vpack.c.b16 %v3037, %v3021
    %v3934 = vpack.c.b16 %v3038, %v3022
    %v3935 = vpack.c.b16 %v3039, %v3023
    %v3936 = vpack.c.b16 %v3040, %v3024
    %v3937 = vpack.c.b16 %v3041, %v3025
    %v3938 = vpack.c.b16 %v3042, %v3026
    %v3939 = vpack.c.b16 %v3043, %v3027
    %v3940 = vpack.c.b16 %v3044, %v3028
    %v3941 = vpack.c.b16 %v3045, %v3029
    %v3942 = vpack.c.b16 %v3046, %v3030
    %v3943 = vpack.c.b16 %v3047, %v3031
    %v3944 = vpack.c.b16 %v3048, %v3032
    %v3945 = vpack.c.b16 %v3049, %v3033
    %v3946 = vpack.c.b16 %v3066, %v3050
    %v3947 = vpack.c.b16 %v3067, %v3051
    %v3948 = vpack.c.b16 %v3068, %v3052
    %v3949 = vpack.c.b16 %v3069, %v3053
    %v3950 = vpack.c.b16 %v3070, %v3054
    %v3951 = vpack.c.b16 %v3071, %v3055
    %v3952 = vpack.c.b16 %v3072, %v3056
    %v3953 = vpack.c.b16 %v3073, %v3057
    %v3954 = vpack.c.b16 %v3074, %v3058
    %v3955 = vpack.c.b16 %v3075, %v3059
    %v3956 = vpack.c.b16 %v3076, %v3060
    %v3957 = vpack.c.b16 %v3077, %v3061
    %v3958 = vpack.c.b16 %v3078, %v3062
    %v3959 = vpack.c.b16 %v3079, %v3063
    %v3960 = vpack.c.b16 %v3080, %v3064
    %v3961 = vpack.c.b16 %v3081, %v3065
    %v3962 = vpack.c.b16 %v3098, %v3082
    %v3963 = vpack.c.b16 %v3099, %v3083
    %v3964 = vpack.c.b16 %v3100, %v3084
    %v3965 = vpack.c.b16 %v3101, %v3085
    %v3966 = vpack.c.b16 %v3102, %v3086
    %v3967 = vpack.c.b16 %v3103, %v3087
    %v3968 = vpack.c.b16 %v3104, %v3088
    %v3969 = vpack.c.b16 %v3105, %v3089
    %v3970 = vpack.c.b16 %v3106, %v3090
    %v3971 = vpack.c.b16 %v3107, %v3091
    %v3972 = vpack.c.b16 %v3108, %v3092
    %v3973 = vpack.c.b16 %v3109, %v3093
    %v3974 = vpack.c.b16 %v3110, %v3094
    %v3975 = vpack.c.b16 %v3111, %v3095
    %v3976 = vpack.c.b16 %v3112, %v3096
    %v3977 = vpack.c.b16 %v3113, %v3097
    %v3978 = vpack.c.b16 %v3130, %v3114
    %v3979 = vpack.c.b16 %v3131, %v3115
    %v3980 = vpack.c.b16 %v3132, %v3116
    %v3981 = vpack.c.b16 %v3133, %v3117
    %v3982 = vpack.c.b16 %v3134, %v3118
    %v3983 = vpack.c.b16 %v3135, %v3119
    %v3984 = vpack.c.b16 %v3136, %v3120
    %v3985 = vpack.c.b16 %v3137, %v3121
    %v3986 = vpack.c.b16 %v3138, %v3122
    %v3987 = vpack.c.b16 %v3139, %v3123
    %v3988 = vpack.c.b16 %v3140, %v3124
    %v3989 = vpack.c.b16 %v3141, %v3125
    %v3990 = vpack.c.b16 %v3142, %v3126
    %v3991 = vpack.c.b16 %v3143, %v3127
    %v3992 = vpack.c.b16 %v3144, %v3128
    %v3993 = vpack.c.b16 %v3145, %v3129
    %v3994 = vpack.c.b16 %v3162, %v3146
    %v3995 = vpack.c.b16 %v3163, %v3147
    %v3996 = vpack.c.b16 %v3164, %v3148
    %v3997 = vpack.c.b16 %v3165, %v3149
    %v3998 = vpack.c.b16 %v3166, %v3150
    %v3999 = vpack.c.b16 %v3167, %v3151
    %v4000 = vpack.c.b16 %v3168, %v3152
    %v4001 = vpack.c.b16 %v3169, %v3153
    %v4002 = vpack.c.b16 %v3170, %v3154
    %v4003 = vpack.c.b16 %v3171, %v3155
    %v4004 = vpack.c.b16 %v3172, %v3156
    %v4005 = vpack.c.b16 %v3173, %v3157
    %v4006 = vpack.c.b16 %v3174, %v3158
    %v4007 = vpack.c.b16 %v3175, %v3159
    %v4008 = vpack.c.b16 %v3176, %v3160
    %v4009 = vpack.c.b16 %v3177, %v3161
    %v4010 = vpack.c.b16 %v3194, %v3178
    %v4011 = vpack.c.b16 %v3195, %v3179
    %v4012 = vpack.c.b16 %v3196, %v3180
    %v4013 = vpack.c.b16 %v3197, %v3181
    %v4014 = vpack.c.b16 %v3198, %v3182
    %v4015 = vpack.c.b16 %v3199, %v3183
    %v4016 = vpack.c.b16 %v3200, %v3184
    %v4017 = vpack.c.b16 %v3201, %v3185
    %v4018 = vpack.c.b16 %v3202, %v3186
    %v4019 = vpack.c.b16 %v3203, %v3187
    %v4020 = vpack.c.b16 %v3204, %v3188
    %v4021 = vpack.c.b16 %v3205, %v3189
    %v4022 = vpack.c.b16 %v3206, %v3190
    %v4023 = vpack.c.b16 %v3207, %v3191
    %v4024 = vpack.c.b16 %v3208, %v3192
    %v4025 = vpack.c.b16 %v3209, %v3193
    %v4026 = vpack.c.b16 %v3226, %v3210
    %v4027 = vpack.c.b16 %v3227, %v3211
    %v4028 = vpack.c.b16 %v3228, %v3212
    %v4029 = vpack.c.b16 %v3229, %v3213
    %v4030 = vpack.c.b16 %v3230, %v3214
    %v4031 = vpack.c.b16 %v3231, %v3215
    %v4032 = vpack.c.b16 %v3232, %v3216
    %v4033 = vpack.c.b16 %v3233, %v3217
    %v4034 = vpack.c.b16 %v3234, %v3218
    %v4035 = vpack.c.b16 %v3235, %v3219
    %v4036 = vpack.c.b16 %v3236, %v3220
    %v4037 = vpack.c.b16 %v3237, %v3221
    %v4038 = vpack.c.b16 %v3238, %v3222
    %v4039 = vpack.c.b16 %v3239, %v3223
    %v4040 = vpack.c.b16 %v3240, %v3224
    %v4041 = vpack.c.b16 %v3241, %v3225
    %v4042 = vpack.c.b16 %v3258, %v3242
    %v4043 = vpack.c.b16 %v3259, %v3243
    %v4044 = vpack.c.b16 %v3260, %v3244
    %v4045 = vpack.c.b16 %v3261, %v3245
    %v4046 = vpack.c.b16 %v3262, %v3246
    %v4047 = vpack.c.b16 %v3263, %v3247
    %v4048 = vpack.c.b16 %v3264, %v3248
    %v4049 = vpack.c.b16 %v3265, %v3249
    %v4050 = vpack.c.b16 %v3266, %v3250
    %v4051 = vpack.c.b16 %v3267, %v3251
    %v4052 = vpack.c.b16 %v3268, %v3252
    %v4053 = vpack.c.b16 %v3269, %v3253
    %v4054 = vpack.c.b16 %v3270, %v3254
    %v4055 = vpack.c.b16 %v3271, %v3255
    %v4056 = vpack.c.b16 %v3272, %v3256
    %v4057 = vpack.c.b16 %v3273, %v3257
    %v4058 = vpack.c.b16 %v3290, %v3274
    %v4059 = vpack.c.b16 %v3291, %v3275
    %v4060 = vpack.c.b16 %v3292, %v3276
    %v4061 = vpack.c.b16 %v3293, %v3277
    %v4062 = vpack.c.b16 %v3294, %v3278
    %v4063 = vpack.c.b16 %v3295, %v3279
    %v4064 = vpack.c.b16 %v3296, %v3280
    %v4065 = vpack.c.b16 %v3297, %v3281
    %v4066 = vpack.c.b16 %v3298, %v3282
    %v4067 = vpack.c.b16 %v3299, %v3283
    %v4068 = vpack.c.b16 %v3300, %v3284
    %v4069 = vpack.c.b16 %v3301, %v3285
    %v4070 = vpack.c.b16 %v3302, %v3286
    %v4071 = vpack.c.b16 %v3303, %v3287
    %v4072 = vpack.c.b16 %v3304, %v3288
    %v4073 = vpack.c.b16 %v3305, %v3289
    %4842 = vmatprep.subr.bf16.mxu0 %v3419
    %4843 = vmatpush1.bf16.msra.mxu0 %v3418
    %4844 = vmatprep.subr.bf16.mxu0 %v3403
    %4845 = vmatpush1.bf16.msra.mxu0 %v3402
    %4846 = vmatprep.subr.bf16.mxu0 %v3387
    %4847 = vmatpush1.bf16.msra.mxu0 %v3386
    %4848 = vmatprep.subr.bf16.mxu0 %v3371
    %4849 = vmatpush1.bf16.msra.mxu0 %v3370
    %4850 = vmatprep.subr.bf16.mxu0 %v3355
    %4851 = vmatpush1.bf16.msra.mxu0 %v3354
    %4852 = vmatprep.subr.bf16.mxu0 %v3339
    %4853 = vmatpush1.bf16.msra.mxu0 %v3338
    %4854 = vmatprep.subr.bf16.mxu0 %v3323
    %4855 = vmatpush1.bf16.msra.mxu0 %v3322
    %4856 = vmatprep.subr.bf16.mxu0 %v3307
    %4857 = vmatpush1.bf16.msra.mxu0 %v3306
    %4858 = vmatprep.subr.bf16.mxu0 %v3547
    %4859 = vmatpush2.bf16.msra.mxu0 %v3546
    %4860 = vmatprep.subr.bf16.mxu0 %v3531
    %4861 = vmatpush2.bf16.msra.mxu0 %v3530
    %4862 = vmatprep.subr.bf16.mxu0 %v3515
    %4863 = vmatpush2.bf16.msra.mxu0 %v3514
    %4864 = vmatprep.subr.bf16.mxu0 %v3499
    %4865 = vmatpush2.bf16.msra.mxu0 %v3498
    %4866 = vmatprep.subr.bf16.mxu0 %v3483
    %4867 = vmatpush2.bf16.msra.mxu0 %v3482
    %4868 = vmatprep.subr.bf16.mxu0 %v3467
    %4869 = vmatpush2.bf16.msra.mxu0 %v3466
    %4870 = vmatprep.subr.bf16.mxu0 %v3451
    %4871 = vmatpush2.bf16.msra.mxu0 %v3450
    %4872 = vmatprep.subr.bf16.mxu0 %v3435
    %4873 = vmatpush2.bf16.msra.mxu0 %v3434
    %4874 = vmatprep.mubr.bf16.mxu0 %v991
    %4875 = vmatmul.mubr.bf16.gmra.mxu0 %v990
    %v4876 = vpop.f32.mrf.mxu0
    %v4877 = vadd.f32 %v904, %v4876
    %v4878 = vpop.f32.mrf.mxu0
    %v4879 = vadd.f32 %v908, %v4878
    %v4880 = vpop.f32.mrf.mxu0
    %v4881 = vpop.f32.mrf.mxu0
    %4882 = vdwg.mxu0
    %4883 = vmatprep.subr.bf16.mxu0 %v3675
    %4884 = vmatpush1.bf16.msra.mxu0 %v3674
    %4885 = vmatprep.subr.bf16.mxu0 %v3659
    %4886 = vmatpush1.bf16.msra.mxu0 %v3658
    %4887 = vmatprep.subr.bf16.mxu0 %v3643
    %4888 = vmatpush1.bf16.msra.mxu0 %v3642
    %4889 = vmatprep.subr.bf16.mxu0 %v3627
    %4890 = vmatpush1.bf16.msra.mxu0 %v3626
    %4891 = vmatprep.subr.bf16.mxu0 %v3611
    %4892 = vmatpush1.bf16.msra.mxu0 %v3610
    %4893 = vmatprep.subr.bf16.mxu0 %v3595
    %4894 = vmatpush1.bf16.msra.mxu0 %v3594
    %4895 = vmatprep.subr.bf16.mxu0 %v3579
    %4896 = vmatpush1.bf16.msra.mxu0 %v3578
    %4897 = vmatprep.subr.bf16.mxu0 %v3563
    %4898 = vmatpush1.bf16.msra.mxu0 %v3562
    %4899 = vmatprep.subr.bf16.mxu0 %v3803
    %4900 = vmatpush2.bf16.msra.mxu0 %v3802
    %4901 = vmatprep.subr.bf16.mxu0 %v3787
    %4902 = vmatpush2.bf16.msra.mxu0 %v3786
    %4903 = vmatprep.subr.bf16.mxu0 %v3771
    %4904 = vmatpush2.bf16.msra.mxu0 %v3770
    %4905 = vmatprep.subr.bf16.mxu0 %v3755
    %4906 = vmatpush2.bf16.msra.mxu0 %v3754
    %4907 = vmatprep.subr.bf16.mxu0 %v3739
    %4908 = vmatpush2.bf16.msra.mxu0 %v3738
    %4909 = vmatprep.subr.bf16.mxu0 %v3723
    %4910 = vmatpush2.bf16.msra.mxu0 %v3722
    %4911 = vmatprep.subr.bf16.mxu0 %v3707
    %4912 = vmatpush2.bf16.msra.mxu0 %v3706
    %4913 = vmatprep.subr.bf16.mxu0 %v3691
    %4914 = vmatpush2.bf16.msra.mxu0 %v3690
    %4915 = vmatprep.mubr.bf16.mxu0 %v993
    %4916 = vmatmul.mubr.bf16.gmra.mxu0 %v992
    %v4917 = vpop.f32.mrf.mxu0
    %v4918 = vadd.f32 %v4877, %v4917
    %v4919 = vpop.f32.mrf.mxu0
    %v4920 = vadd.f32 %v4879, %v4919
    %v4921 = vpop.f32.mrf.mxu0
    %v4922 = vpop.f32.mrf.mxu0
    %4923 = vdwg.mxu0
    %4924 = vmatprep.subr.bf16.mxu0 %v3931
    %4925 = vmatpush1.bf16.msra.mxu0 %v3930
    %4926 = vmatprep.subr.bf16.mxu0 %v3915
    %4927 = vmatpush1.bf16.msra.mxu0 %v3914
    %4928 = vmatprep.subr.bf16.mxu0 %v3899
    %4929 = vmatpush1.bf16.msra.mxu0 %v3898
    %4930 = vmatprep.subr.bf16.mxu0 %v3883
    %4931 = vmatpush1.bf16.msra.mxu0 %v3882
    %4932 = vmatprep.subr.bf16.mxu0 %v3867
    %4933 = vmatpush1.bf16.msra.mxu0 %v3866
    %4934 = vmatprep.subr.bf16.mxu0 %v3851
    %4935 = vmatpush1.bf16.msra.mxu0 %v3850
    %4936 = vmatprep.subr.bf16.mxu0 %v3835
    %4937 = vmatpush1.bf16.msra.mxu0 %v3834
    %4938 = vmatprep.subr.bf16.mxu0 %v3819
    %4939 = vmatpush1.bf16.msra.mxu0 %v3818
    %4940 = vmatprep.subr.bf16.mxu0 %v4059
    %4941 = vmatpush2.bf16.msra.mxu0 %v4058
    %4942 = vmatprep.subr.bf16.mxu0 %v4043
    %4943 = vmatpush2.bf16.msra.mxu0 %v4042
    %4944 = vmatprep.subr.bf16.mxu0 %v4027
    %4945 = vmatpush2.bf16.msra.mxu0 %v4026
    %4946 = vmatprep.subr.bf16.mxu0 %v4011
    %4947 = vmatpush2.bf16.msra.mxu0 %v4010
    %4948 = vmatprep.subr.bf16.mxu0 %v3995
    %4949 = vmatpush2.bf16.msra.mxu0 %v3994
    %4950 = vmatprep.subr.bf16.mxu0 %v3979
    %4951 = vmatpush2.bf16.msra.mxu0 %v3978
    %4952 = vmatprep.subr.bf16.mxu0 %v3963
    %4953 = vmatpush2.bf16.msra.mxu0 %v3962
    %4954 = vmatprep.subr.bf16.mxu0 %v3947
    %4955 = vmatpush2.bf16.msra.mxu0 %v3946
    %4956 = vmatprep.mubr.bf16.mxu0 %v995
    %4957 = vmatmul.mubr.bf16.gmra.mxu0 %v994
    %v4958 = vpop.f32.mrf.mxu0
    %v4959 = vadd.f32 %v4918, %v4958
    %v4960 = vpop.f32.mrf.mxu0
    %v4961 = vadd.f32 %v4920, %v4960
    %v4962 = vpop.f32.mrf.mxu0
    %v4963 = vpop.f32.mrf.mxu0
    %4964 = vdwg.mxu0
    %4965 = vmatprep.subr.bf16.mxu0 %v3421
    %4966 = vmatpush1.bf16.msra.mxu0 %v3420
    %4967 = vmatprep.subr.bf16.mxu0 %v3405
    %4968 = vmatpush1.bf16.msra.mxu0 %v3404
    %4969 = vmatprep.subr.bf16.mxu0 %v3389
    %4970 = vmatpush1.bf16.msra.mxu0 %v3388
    %4971 = vmatprep.subr.bf16.mxu0 %v3373
    %4972 = vmatpush1.bf16.msra.mxu0 %v3372
    %4973 = vmatprep.subr.bf16.mxu0 %v3357
    %4974 = vmatpush1.bf16.msra.mxu0 %v3356
    %4975 = vmatprep.subr.bf16.mxu0 %v3341
    %4976 = vmatpush1.bf16.msra.mxu0 %v3340
    %4977 = vmatprep.subr.bf16.mxu0 %v3325
    %4978 = vmatpush1.bf16.msra.mxu0 %v3324
    %4979 = vmatprep.subr.bf16.mxu0 %v3309
    %4980 = vmatpush1.bf16.msra.mxu0 %v3308
    %4981 = vmatprep.subr.bf16.mxu0 %v3549
    %4982 = vmatpush2.bf16.msra.mxu0 %v3548
    %4983 = vmatprep.subr.bf16.mxu0 %v3533
    %4984 = vmatpush2.bf16.msra.mxu0 %v3532
    %4985 = vmatprep.subr.bf16.mxu0 %v3517
    %4986 = vmatpush2.bf16.msra.mxu0 %v3516
    %4987 = vmatprep.subr.bf16.mxu0 %v3501
    %4988 = vmatpush2.bf16.msra.mxu0 %v3500
    %4989 = vmatprep.subr.bf16.mxu0 %v3485
    %4990 = vmatpush2.bf16.msra.mxu0 %v3484
    %4991 = vmatprep.subr.bf16.mxu0 %v3469
    %4992 = vmatpush2.bf16.msra.mxu0 %v3468
    %4993 = vmatprep.subr.bf16.mxu0 %v3453
    %4994 = vmatpush2.bf16.msra.mxu0 %v3452
    %4995 = vmatprep.subr.bf16.mxu0 %v3437
    %4996 = vmatpush2.bf16.msra.mxu0 %v3436
    %4997 = vmatprep.mubr.bf16.mxu0 %v991
    %4998 = vmatmul.mubr.bf16.gmra.mxu0 %v990
    %v4999 = vpop.f32.mrf.mxu0
    %v5000 = vadd.f32 %v912, %v4999
    %v5001 = vpop.f32.mrf.mxu0
    %v5002 = vadd.f32 %v916, %v5001
    %v5003 = vpop.f32.mrf.mxu0
    %v5004 = vpop.f32.mrf.mxu0
    %5005 = vdwg.mxu0
    %5006 = vmatprep.subr.bf16.mxu0 %v3677
    %5007 = vmatpush1.bf16.msra.mxu0 %v3676
    %5008 = vmatprep.subr.bf16.mxu0 %v3661
    %5009 = vmatpush1.bf16.msra.mxu0 %v3660
    %5010 = vmatprep.subr.bf16.mxu0 %v3645
    %5011 = vmatpush1.bf16.msra.mxu0 %v3644
    %5012 = vmatprep.subr.bf16.mxu0 %v3629
    %5013 = vmatpush1.bf16.msra.mxu0 %v3628
    %5014 = vmatprep.subr.bf16.mxu0 %v3613
    %5015 = vmatpush1.bf16.msra.mxu0 %v3612
    %5016 = vmatprep.subr.bf16.mxu0 %v3597
    %5017 = vmatpush1.bf16.msra.mxu0 %v3596
    %5018 = vmatprep.subr.bf16.mxu0 %v3581
    %5019 = vmatpush1.bf16.msra.mxu0 %v3580
    %5020 = vmatprep.subr.bf16.mxu0 %v3565
    %5021 = vmatpush1.bf16.msra.mxu0 %v3564
    %5022 = vmatprep.subr.bf16.mxu0 %v3805
    %5023 = vmatpush2.bf16.msra.mxu0 %v3804
    %5024 = vmatprep.subr.bf16.mxu0 %v3789
    %5025 = vmatpush2.bf16.msra.mxu0 %v3788
    %5026 = vmatprep.subr.bf16.mxu0 %v3773
    %5027 = vmatpush2.bf16.msra.mxu0 %v3772
    %5028 = vmatprep.subr.bf16.mxu0 %v3757
    %5029 = vmatpush2.bf16.msra.mxu0 %v3756
    %5030 = vmatprep.subr.bf16.mxu0 %v3741
    %5031 = vmatpush2.bf16.msra.mxu0 %v3740
    %5032 = vmatprep.subr.bf16.mxu0 %v3725
    %5033 = vmatpush2.bf16.msra.mxu0 %v3724
    %5034 = vmatprep.subr.bf16.mxu0 %v3709
    %5035 = vmatpush2.bf16.msra.mxu0 %v3708
    %5036 = vmatprep.subr.bf16.mxu0 %v3693
    %5037 = vmatpush2.bf16.msra.mxu0 %v3692
    %5038 = vmatprep.mubr.bf16.mxu0 %v993
    %5039 = vmatmul.mubr.bf16.gmra.mxu0 %v992
    %v5040 = vpop.f32.mrf.mxu0
    %v5041 = vadd.f32 %v5000, %v5040
    %v5042 = vpop.f32.mrf.mxu0
    %v5043 = vadd.f32 %v5002, %v5042
    %v5044 = vpop.f32.mrf.mxu0
    %v5045 = vpop.f32.mrf.mxu0
    %5046 = vdwg.mxu0
    %5047 = vmatprep.subr.bf16.mxu0 %v3933
    %5048 = vmatpush1.bf16.msra.mxu0 %v3932
    %5049 = vmatprep.subr.bf16.mxu0 %v3917
    %5050 = vmatpush1.bf16.msra.mxu0 %v3916
    %5051 = vmatprep.subr.bf16.mxu0 %v3901
    %5052 = vmatpush1.bf16.msra.mxu0 %v3900
    %5053 = vmatprep.subr.bf16.mxu0 %v3885
    %5054 = vmatpush1.bf16.msra.mxu0 %v3884
    %5055 = vmatprep.subr.bf16.mxu0 %v3869
    %5056 = vmatpush1.bf16.msra.mxu0 %v3868
    %5057 = vmatprep.subr.bf16.mxu0 %v3853
    %5058 = vmatpush1.bf16.msra.mxu0 %v3852
    %5059 = vmatprep.subr.bf16.mxu0 %v3837
    %5060 = vmatpush1.bf16.msra.mxu0 %v3836
    %5061 = vmatprep.subr.bf16.mxu0 %v3821
    %5062 = vmatpush1.bf16.msra.mxu0 %v3820
    %5063 = vmatprep.subr.bf16.mxu0 %v4061
    %5064 = vmatpush2.bf16.msra.mxu0 %v4060
    %5065 = vmatprep.subr.bf16.mxu0 %v4045
    %5066 = vmatpush2.bf16.msra.mxu0 %v4044
    %5067 = vmatprep.subr.bf16.mxu0 %v4029
    %5068 = vmatpush2.bf16.msra.mxu0 %v4028
    %5069 = vmatprep.subr.bf16.mxu0 %v4013
    %5070 = vmatpush2.bf16.msra.mxu0 %v4012
    %5071 = vmatprep.subr.bf16.mxu0 %v3997
    %5072 = vmatpush2.bf16.msra.mxu0 %v3996
    %5073 = vmatprep.subr.bf16.mxu0 %v3981
    %5074 = vmatpush2.bf16.msra.mxu0 %v3980
    %5075 = vmatprep.subr.bf16.mxu0 %v3965
    %5076 = vmatpush2.bf16.msra.mxu0 %v3964
    %5077 = vmatprep.subr.bf16.mxu0 %v3949
    %5078 = vmatpush2.bf16.msra.mxu0 %v3948
    %5079 = vmatprep.mubr.bf16.mxu0 %v995
    %5080 = vmatmul.mubr.bf16.gmra.mxu0 %v994
    %v5081 = vpop.f32.mrf.mxu0
    %v5082 = vadd.f32 %v5041, %v5081
    %v5083 = vpop.f32.mrf.mxu0
    %v5084 = vadd.f32 %v5043, %v5083
    %v5085 = vpop.f32.mrf.mxu0
    %v5086 = vpop.f32.mrf.mxu0
    %5087 = vdwg.mxu0
    %5088 = vmatprep.subr.bf16.mxu0 %v3423
    %5089 = vmatpush1.bf16.msra.mxu0 %v3422
    %5090 = vmatprep.subr.bf16.mxu0 %v3407
    %5091 = vmatpush1.bf16.msra.mxu0 %v3406
    %5092 = vmatprep.subr.bf16.mxu0 %v3391
    %5093 = vmatpush1.bf16.msra.mxu0 %v3390
    %5094 = vmatprep.subr.bf16.mxu0 %v3375
    %5095 = vmatpush1.bf16.msra.mxu0 %v3374
    %5096 = vmatprep.subr.bf16.mxu0 %v3359
    %5097 = vmatpush1.bf16.msra.mxu0 %v3358
    %5098 = vmatprep.subr.bf16.mxu0 %v3343
    %5099 = vmatpush1.bf16.msra.mxu0 %v3342
    %5100 = vmatprep.subr.bf16.mxu0 %v3327
    %5101 = vmatpush1.bf16.msra.mxu0 %v3326
    %5102 = vmatprep.subr.bf16.mxu0 %v3311
    %5103 = vmatpush1.bf16.msra.mxu0 %v3310
    %5104 = vmatprep.subr.bf16.mxu0 %v3551
    %5105 = vmatpush2.bf16.msra.mxu0 %v3550
    %5106 = vmatprep.subr.bf16.mxu0 %v3535
    %5107 = vmatpush2.bf16.msra.mxu0 %v3534
    %5108 = vmatprep.subr.bf16.mxu0 %v3519
    %5109 = vmatpush2.bf16.msra.mxu0 %v3518
    %5110 = vmatprep.subr.bf16.mxu0 %v3503
    %5111 = vmatpush2.bf16.msra.mxu0 %v3502
    %5112 = vmatprep.subr.bf16.mxu0 %v3487
    %5113 = vmatpush2.bf16.msra.mxu0 %v3486
    %5114 = vmatprep.subr.bf16.mxu0 %v3471
    %5115 = vmatpush2.bf16.msra.mxu0 %v3470
    %5116 = vmatprep.subr.bf16.mxu0 %v3455
    %5117 = vmatpush2.bf16.msra.mxu0 %v3454
    %5118 = vmatprep.subr.bf16.mxu0 %v3439
    %5119 = vmatpush2.bf16.msra.mxu0 %v3438
    %5120 = vmatprep.mubr.bf16.mxu0 %v991
    %5121 = vmatmul.mubr.bf16.gmra.mxu0 %v990
    %v5122 = vpop.f32.mrf.mxu0
    %v5123 = vadd.f32 %v920, %v5122
    %v5124 = vpop.f32.mrf.mxu0
    %v5125 = vadd.f32 %v924, %v5124
    %v5126 = vpop.f32.mrf.mxu0
    %v5127 = vpop.f32.mrf.mxu0
    %5128 = vdwg.mxu0
    %5129 = vmatprep.subr.bf16.mxu0 %v3679
    %5130 = vmatpush1.bf16.msra.mxu0 %v3678
    %5131 = vmatprep.subr.bf16.mxu0 %v3663
    %5132 = vmatpush1.bf16.msra.mxu0 %v3662
    %5133 = vmatprep.subr.bf16.mxu0 %v3647
    %5134 = vmatpush1.bf16.msra.mxu0 %v3646
    %5135 = vmatprep.subr.bf16.mxu0 %v3631
    %5136 = vmatpush1.bf16.msra.mxu0 %v3630
    %5137 = vmatprep.subr.bf16.mxu0 %v3615
    %5138 = vmatpush1.bf16.msra.mxu0 %v3614
    %5139 = vmatprep.subr.bf16.mxu0 %v3599
    %5140 = vmatpush1.bf16.msra.mxu0 %v3598
    %5141 = vmatprep.subr.bf16.mxu0 %v3583
    %5142 = vmatpush1.bf16.msra.mxu0 %v3582
    %5143 = vmatprep.subr.bf16.mxu0 %v3567
    %5144 = vmatpush1.bf16.msra.mxu0 %v3566
    %5145 = vmatprep.subr.bf16.mxu0 %v3807
    %5146 = vmatpush2.bf16.msra.mxu0 %v3806
    %5147 = vmatprep.subr.bf16.mxu0 %v3791
    %5148 = vmatpush2.bf16.msra.mxu0 %v3790
    %5149 = vmatprep.subr.bf16.mxu0 %v3775
    %5150 = vmatpush2.bf16.msra.mxu0 %v3774
    %5151 = vmatprep.subr.bf16.mxu0 %v3759
    %5152 = vmatpush2.bf16.msra.mxu0 %v3758
    %5153 = vmatprep.subr.bf16.mxu0 %v3743
    %5154 = vmatpush2.bf16.msra.mxu0 %v3742
    %5155 = vmatprep.subr.bf16.mxu0 %v3727
    %5156 = vmatpush2.bf16.msra.mxu0 %v3726
    %5157 = vmatprep.subr.bf16.mxu0 %v3711
    %5158 = vmatpush2.bf16.msra.mxu0 %v3710
    %5159 = vmatprep.subr.bf16.mxu0 %v3695
    %5160 = vmatpush2.bf16.msra.mxu0 %v3694
    %5161 = vmatprep.mubr.bf16.mxu0 %v993
    %5162 = vmatmul.mubr.bf16.gmra.mxu0 %v992
    %v5163 = vpop.f32.mrf.mxu0
    %v5164 = vadd.f32 %v5123, %v5163
    %v5165 = vpop.f32.mrf.mxu0
    %v5166 = vadd.f32 %v5125, %v5165
    %v5167 = vpop.f32.mrf.mxu0
    %v5168 = vpop.f32.mrf.mxu0
    %5169 = vdwg.mxu0
    %5170 = vmatprep.subr.bf16.mxu0 %v3935
    %5171 = vmatpush1.bf16.msra.mxu0 %v3934
    %5172 = vmatprep.subr.bf16.mxu0 %v3919
    %5173 = vmatpush1.bf16.msra.mxu0 %v3918
    %5174 = vmatprep.subr.bf16.mxu0 %v3903
    %5175 = vmatpush1.bf16.msra.mxu0 %v3902
    %5176 = vmatprep.subr.bf16.mxu0 %v3887
    %5177 = vmatpush1.bf16.msra.mxu0 %v3886
    %5178 = vmatprep.subr.bf16.mxu0 %v3871
    %5179 = vmatpush1.bf16.msra.mxu0 %v3870
    %5180 = vmatprep.subr.bf16.mxu0 %v3855
    %5181 = vmatpush1.bf16.msra.mxu0 %v3854
    %5182 = vmatprep.subr.bf16.mxu0 %v3839
    %5183 = vmatpush1.bf16.msra.mxu0 %v3838
    %5184 = vmatprep.subr.bf16.mxu0 %v3823
    %5185 = vmatpush1.bf16.msra.mxu0 %v3822
    %5186 = vmatprep.subr.bf16.mxu0 %v4063
    %5187 = vmatpush2.bf16.msra.mxu0 %v4062
    %5188 = vmatprep.subr.bf16.mxu0 %v4047
    %5189 = vmatpush2.bf16.msra.mxu0 %v4046
    %5190 = vmatprep.subr.bf16.mxu0 %v4031
    %5191 = vmatpush2.bf16.msra.mxu0 %v4030
    %5192 = vmatprep.subr.bf16.mxu0 %v4015
    %5193 = vmatpush2.bf16.msra.mxu0 %v4014
    %5194 = vmatprep.subr.bf16.mxu0 %v3999
    %5195 = vmatpush2.bf16.msra.mxu0 %v3998
    %5196 = vmatprep.subr.bf16.mxu0 %v3983
    %5197 = vmatpush2.bf16.msra.mxu0 %v3982
    %5198 = vmatprep.subr.bf16.mxu0 %v3967
    %5199 = vmatpush2.bf16.msra.mxu0 %v3966
    %5200 = vmatprep.subr.bf16.mxu0 %v3951
    %5201 = vmatpush2.bf16.msra.mxu0 %v3950
    %5202 = vmatprep.mubr.bf16.mxu0 %v995
    %5203 = vmatmul.mubr.bf16.gmra.mxu0 %v994
    %v5204 = vpop.f32.mrf.mxu0
    %v5205 = vadd.f32 %v5164, %v5204
    %v5206 = vpop.f32.mrf.mxu0
    %v5207 = vadd.f32 %v5166, %v5206
    %v5208 = vpop.f32.mrf.mxu0
    %v5209 = vpop.f32.mrf.mxu0
    %5210 = vdwg.mxu0
    %5211 = vmatprep.subr.bf16.mxu0 %v3425
    %5212 = vmatpush1.bf16.msra.mxu0 %v3424
    %5213 = vmatprep.subr.bf16.mxu0 %v3409
    %5214 = vmatpush1.bf16.msra.mxu0 %v3408
    %5215 = vmatprep.subr.bf16.mxu0 %v3393
    %5216 = vmatpush1.bf16.msra.mxu0 %v3392
    %5217 = vmatprep.subr.bf16.mxu0 %v3377
    %5218 = vmatpush1.bf16.msra.mxu0 %v3376
    %5219 = vmatprep.subr.bf16.mxu0 %v3361
    %5220 = vmatpush1.bf16.msra.mxu0 %v3360
    %5221 = vmatprep.subr.bf16.mxu0 %v3345
    %5222 = vmatpush1.bf16.msra.mxu0 %v3344
    %5223 = vmatprep.subr.bf16.mxu0 %v3329
    %5224 = vmatpush1.bf16.msra.mxu0 %v3328
    %5225 = vmatprep.subr.bf16.mxu0 %v3313
    %5226 = vmatpush1.bf16.msra.mxu0 %v3312
    %5227 = vmatprep.subr.bf16.mxu0 %v3553
    %5228 = vmatpush2.bf16.msra.mxu0 %v3552
    %5229 = vmatprep.subr.bf16.mxu0 %v3537
    %5230 = vmatpush2.bf16.msra.mxu0 %v3536
    %5231 = vmatprep.subr.bf16.mxu0 %v3521
    %5232 = vmatpush2.bf16.msra.mxu0 %v3520
    %5233 = vmatprep.subr.bf16.mxu0 %v3505
    %5234 = vmatpush2.bf16.msra.mxu0 %v3504
    %5235 = vmatprep.subr.bf16.mxu0 %v3489
    %5236 = vmatpush2.bf16.msra.mxu0 %v3488
    %5237 = vmatprep.subr.bf16.mxu0 %v3473
    %5238 = vmatpush2.bf16.msra.mxu0 %v3472
    %5239 = vmatprep.subr.bf16.mxu0 %v3457
    %5240 = vmatpush2.bf16.msra.mxu0 %v3456
    %5241 = vmatprep.subr.bf16.mxu0 %v3441
    %5242 = vmatpush2.bf16.msra.mxu0 %v3440
    %5243 = vmatprep.mubr.bf16.mxu0 %v991
    %5244 = vmatmul.mubr.bf16.gmra.mxu0 %v990
    %v5245 = vpop.f32.mrf.mxu0
    %v5246 = vadd.f32 %v928, %v5245
    %v5247 = vpop.f32.mrf.mxu0
    %v5248 = vadd.f32 %v932, %v5247
    %v5249 = vpop.f32.mrf.mxu0
    %v5250 = vpop.f32.mrf.mxu0
    %5251 = vdwg.mxu0
    %5252 = vmatprep.subr.bf16.mxu0 %v3681
    %5253 = vmatpush1.bf16.msra.mxu0 %v3680
    %5254 = vmatprep.subr.bf16.mxu0 %v3665
    %5255 = vmatpush1.bf16.msra.mxu0 %v3664
    %5256 = vmatprep.subr.bf16.mxu0 %v3649
    %5257 = vmatpush1.bf16.msra.mxu0 %v3648
    %5258 = vmatprep.subr.bf16.mxu0 %v3633
    %5259 = vmatpush1.bf16.msra.mxu0 %v3632
    %5260 = vmatprep.subr.bf16.mxu0 %v3617
    %5261 = vmatpush1.bf16.msra.mxu0 %v3616
    %5262 = vmatprep.subr.bf16.mxu0 %v3601
    %5263 = vmatpush1.bf16.msra.mxu0 %v3600
    %5264 = vmatprep.subr.bf16.mxu0 %v3585
    %5265 = vmatpush1.bf16.msra.mxu0 %v3584
    %5266 = vmatprep.subr.bf16.mxu0 %v3569
    %5267 = vmatpush1.bf16.msra.mxu0 %v3568
    %5268 = vmatprep.subr.bf16.mxu0 %v3809
    %5269 = vmatpush2.bf16.msra.mxu0 %v3808
    %5270 = vmatprep.subr.bf16.mxu0 %v3793
    %5271 = vmatpush2.bf16.msra.mxu0 %v3792
    %5272 = vmatprep.subr.bf16.mxu0 %v3777
    %5273 = vmatpush2.bf16.msra.mxu0 %v3776
    %5274 = vmatprep.subr.bf16.mxu0 %v3761
    %5275 = vmatpush2.bf16.msra.mxu0 %v3760
    %5276 = vmatprep.subr.bf16.mxu0 %v3745
    %5277 = vmatpush2.bf16.msra.mxu0 %v3744
    %5278 = vmatprep.subr.bf16.mxu0 %v3729
    %5279 = vmatpush2.bf16.msra.mxu0 %v3728
    %5280 = vmatprep.subr.bf16.mxu0 %v3713
    %5281 = vmatpush2.bf16.msra.mxu0 %v3712
    %5282 = vmatprep.subr.bf16.mxu0 %v3697
    %5283 = vmatpush2.bf16.msra.mxu0 %v3696
    %5284 = vmatprep.mubr.bf16.mxu0 %v993
    %5285 = vmatmul.mubr.bf16.gmra.mxu0 %v992
    %v5286 = vpop.f32.mrf.mxu0
    %v5287 = vadd.f32 %v5246, %v5286
    %v5288 = vpop.f32.mrf.mxu0
    %v5289 = vadd.f32 %v5248, %v5288
    %v5290 = vpop.f32.mrf.mxu0
    %v5291 = vpop.f32.mrf.mxu0
    %5292 = vdwg.mxu0
    %5293 = vmatprep.subr.bf16.mxu0 %v3937
    %5294 = vmatpush1.bf16.msra.mxu0 %v3936
    %5295 = vmatprep.subr.bf16.mxu0 %v3921
    %5296 = vmatpush1.bf16.msra.mxu0 %v3920
    %5297 = vmatprep.subr.bf16.mxu0 %v3905
    %5298 = vmatpush1.bf16.msra.mxu0 %v3904
    %5299 = vmatprep.subr.bf16.mxu0 %v3889
    %5300 = vmatpush1.bf16.msra.mxu0 %v3888
    %5301 = vmatprep.subr.bf16.mxu0 %v3873
    %5302 = vmatpush1.bf16.msra.mxu0 %v3872
    %5303 = vmatprep.subr.bf16.mxu0 %v3857
    %5304 = vmatpush1.bf16.msra.mxu0 %v3856
    %5305 = vmatprep.subr.bf16.mxu0 %v3841
    %5306 = vmatpush1.bf16.msra.mxu0 %v3840
    %5307 = vmatprep.subr.bf16.mxu0 %v3825
    %5308 = vmatpush1.bf16.msra.mxu0 %v3824
    %5309 = vmatprep.subr.bf16.mxu0 %v4065
    %5310 = vmatpush2.bf16.msra.mxu0 %v4064
    %5311 = vmatprep.subr.bf16.mxu0 %v4049
    %5312 = vmatpush2.bf16.msra.mxu0 %v4048
    %5313 = vmatprep.subr.bf16.mxu0 %v4033
    %5314 = vmatpush2.bf16.msra.mxu0 %v4032
    %5315 = vmatprep.subr.bf16.mxu0 %v4017
    %5316 = vmatpush2.bf16.msra.mxu0 %v4016
    %5317 = vmatprep.subr.bf16.mxu0 %v4001
    %5318 = vmatpush2.bf16.msra.mxu0 %v4000
    %5319 = vmatprep.subr.bf16.mxu0 %v3985
    %5320 = vmatpush2.bf16.msra.mxu0 %v3984
    %5321 = vmatprep.subr.bf16.mxu0 %v3969
    %5322 = vmatpush2.bf16.msra.mxu0 %v3968
    %5323 = vmatprep.subr.bf16.mxu0 %v3953
    %5324 = vmatpush2.bf16.msra.mxu0 %v3952
    %5325 = vmatprep.mubr.bf16.mxu0 %v995
    %5326 = vmatmul.mubr.bf16.gmra.mxu0 %v994
    %v5327 = vpop.f32.mrf.mxu0
    %v5328 = vadd.f32 %v5287, %v5327
    %v5329 = vpop.f32.mrf.mxu0
    %v5330 = vadd.f32 %v5289, %v5329
    %v5331 = vpop.f32.mrf.mxu0
    %v5332 = vpop.f32.mrf.mxu0
    %5333 = vdwg.mxu0
    %5334 = vmatprep.subr.bf16.mxu0 %v3427
    %5335 = vmatpush1.bf16.msra.mxu0 %v3426
    %5336 = vmatprep.subr.bf16.mxu0 %v3411
    %5337 = vmatpush1.bf16.msra.mxu0 %v3410
    %5338 = vmatprep.subr.bf16.mxu0 %v3395
    %5339 = vmatpush1.bf16.msra.mxu0 %v3394
    %5340 = vmatprep.subr.bf16.mxu0 %v3379
    %5341 = vmatpush1.bf16.msra.mxu0 %v3378
    %5342 = vmatprep.subr.bf16.mxu0 %v3363
    %5343 = vmatpush1.bf16.msra.mxu0 %v3362
    %5344 = vmatprep.subr.bf16.mxu0 %v3347
    %5345 = vmatpush1.bf16.msra.mxu0 %v3346
    %5346 = vmatprep.subr.bf16.mxu0 %v3331
    %5347 = vmatpush1.bf16.msra.mxu0 %v3330
    %5348 = vmatprep.subr.bf16.mxu0 %v3315
    %5349 = vmatpush1.bf16.msra.mxu0 %v3314
    %5350 = vmatprep.subr.bf16.mxu0 %v3555
    %5351 = vmatpush2.bf16.msra.mxu0 %v3554
    %5352 = vmatprep.subr.bf16.mxu0 %v3539
    %5353 = vmatpush2.bf16.msra.mxu0 %v3538
    %5354 = vmatprep.subr.bf16.mxu0 %v3523
    %5355 = vmatpush2.bf16.msra.mxu0 %v3522
    %5356 = vmatprep.subr.bf16.mxu0 %v3507
    %5357 = vmatpush2.bf16.msra.mxu0 %v3506
    %5358 = vmatprep.subr.bf16.mxu0 %v3491
    %5359 = vmatpush2.bf16.msra.mxu0 %v3490
    %5360 = vmatprep.subr.bf16.mxu0 %v3475
    %5361 = vmatpush2.bf16.msra.mxu0 %v3474
    %5362 = vmatprep.subr.bf16.mxu0 %v3459
    %5363 = vmatpush2.bf16.msra.mxu0 %v3458
    %5364 = vmatprep.subr.bf16.mxu0 %v3443
    %5365 = vmatpush2.bf16.msra.mxu0 %v3442
    %5366 = vmatprep.mubr.bf16.mxu0 %v991
    %5367 = vmatmul.mubr.bf16.gmra.mxu0 %v990
    %v5368 = vpop.f32.mrf.mxu0
    %v5369 = vadd.f32 %v936, %v5368
    %v5370 = vpop.f32.mrf.mxu0
    %v5371 = vadd.f32 %v940, %v5370
    %v5372 = vpop.f32.mrf.mxu0
    %v5373 = vpop.f32.mrf.mxu0
    %5374 = vdwg.mxu0
    %5375 = vmatprep.subr.bf16.mxu0 %v3683
    %5376 = vmatpush1.bf16.msra.mxu0 %v3682
    %5377 = vmatprep.subr.bf16.mxu0 %v3667
    %5378 = vmatpush1.bf16.msra.mxu0 %v3666
    %5379 = vmatprep.subr.bf16.mxu0 %v3651
    %5380 = vmatpush1.bf16.msra.mxu0 %v3650
    %5381 = vmatprep.subr.bf16.mxu0 %v3635
    %5382 = vmatpush1.bf16.msra.mxu0 %v3634
    %5383 = vmatprep.subr.bf16.mxu0 %v3619
    %5384 = vmatpush1.bf16.msra.mxu0 %v3618
    %5385 = vmatprep.subr.bf16.mxu0 %v3603
    %5386 = vmatpush1.bf16.msra.mxu0 %v3602
    %5387 = vmatprep.subr.bf16.mxu0 %v3587
    %5388 = vmatpush1.bf16.msra.mxu0 %v3586
    %5389 = vmatprep.subr.bf16.mxu0 %v3571
    %5390 = vmatpush1.bf16.msra.mxu0 %v3570
    %5391 = vmatprep.subr.bf16.mxu0 %v3811
    %5392 = vmatpush2.bf16.msra.mxu0 %v3810
    %5393 = vmatprep.subr.bf16.mxu0 %v3795
    %5394 = vmatpush2.bf16.msra.mxu0 %v3794
    %5395 = vmatprep.subr.bf16.mxu0 %v3779
    %5396 = vmatpush2.bf16.msra.mxu0 %v3778
    %5397 = vmatprep.subr.bf16.mxu0 %v3763
    %5398 = vmatpush2.bf16.msra.mxu0 %v3762
    %5399 = vmatprep.subr.bf16.mxu0 %v3747
    %5400 = vmatpush2.bf16.msra.mxu0 %v3746
    %5401 = vmatprep.subr.bf16.mxu0 %v3731
    %5402 = vmatpush2.bf16.msra.mxu0 %v3730
    %5403 = vmatprep.subr.bf16.mxu0 %v3715
    %5404 = vmatpush2.bf16.msra.mxu0 %v3714
    %5405 = vmatprep.subr.bf16.mxu0 %v3699
    %5406 = vmatpush2.bf16.msra.mxu0 %v3698
    %5407 = vmatprep.mubr.bf16.mxu0 %v993
    %5408 = vmatmul.mubr.bf16.gmra.mxu0 %v992
    %v5409 = vpop.f32.mrf.mxu0
    %v5410 = vadd.f32 %v5369, %v5409
    %v5411 = vpop.f32.mrf.mxu0
    %v5412 = vadd.f32 %v5371, %v5411
    %v5413 = vpop.f32.mrf.mxu0
    %v5414 = vpop.f32.mrf.mxu0
    %5415 = vdwg.mxu0
    %5416 = vmatprep.subr.bf16.mxu0 %v3939
    %5417 = vmatpush1.bf16.msra.mxu0 %v3938
    %5418 = vmatprep.subr.bf16.mxu0 %v3923
    %5419 = vmatpush1.bf16.msra.mxu0 %v3922
    %5420 = vmatprep.subr.bf16.mxu0 %v3907
    %5421 = vmatpush1.bf16.msra.mxu0 %v3906
    %5422 = vmatprep.subr.bf16.mxu0 %v3891
    %5423 = vmatpush1.bf16.msra.mxu0 %v3890
    %5424 = vmatprep.subr.bf16.mxu0 %v3875
    %5425 = vmatpush1.bf16.msra.mxu0 %v3874
    %5426 = vmatprep.subr.bf16.mxu0 %v3859
    %5427 = vmatpush1.bf16.msra.mxu0 %v3858
    %5428 = vmatprep.subr.bf16.mxu0 %v3843
    %5429 = vmatpush1.bf16.msra.mxu0 %v3842
    %5430 = vmatprep.subr.bf16.mxu0 %v3827
    %5431 = vmatpush1.bf16.msra.mxu0 %v3826
    %5432 = vmatprep.subr.bf16.mxu0 %v4067
    %5433 = vmatpush2.bf16.msra.mxu0 %v4066
    %5434 = vmatprep.subr.bf16.mxu0 %v4051
    %5435 = vmatpush2.bf16.msra.mxu0 %v4050
    %5436 = vmatprep.subr.bf16.mxu0 %v4035
    %5437 = vmatpush2.bf16.msra.mxu0 %v4034
    %5438 = vmatprep.subr.bf16.mxu0 %v4019
    %5439 = vmatpush2.bf16.msra.mxu0 %v4018
    %5440 = vmatprep.subr.bf16.mxu0 %v4003
    %5441 = vmatpush2.bf16.msra.mxu0 %v4002
    %5442 = vmatprep.subr.bf16.mxu0 %v3987
    %5443 = vmatpush2.bf16.msra.mxu0 %v3986
    %5444 = vmatprep.subr.bf16.mxu0 %v3971
    %5445 = vmatpush2.bf16.msra.mxu0 %v3970
    %5446 = vmatprep.subr.bf16.mxu0 %v3955
    %5447 = vmatpush2.bf16.msra.mxu0 %v3954
    %5448 = vmatprep.mubr.bf16.mxu0 %v995
    %5449 = vmatmul.mubr.bf16.gmra.mxu0 %v994
    %v5450 = vpop.f32.mrf.mxu0
    %v5451 = vadd.f32 %v5410, %v5450
    %v5452 = vpop.f32.mrf.mxu0
    %v5453 = vadd.f32 %v5412, %v5452
    %v5454 = vpop.f32.mrf.mxu0
    %v5455 = vpop.f32.mrf.mxu0
    %5456 = vdwg.mxu0
    %5457 = vmatprep.subr.bf16.mxu0 %v3429
    %5458 = vmatpush1.bf16.msra.mxu0 %v3428
    %5459 = vmatprep.subr.bf16.mxu0 %v3413
    %5460 = vmatpush1.bf16.msra.mxu0 %v3412
    %5461 = vmatprep.subr.bf16.mxu0 %v3397
    %5462 = vmatpush1.bf16.msra.mxu0 %v3396
    %5463 = vmatprep.subr.bf16.mxu0 %v3381
    %5464 = vmatpush1.bf16.msra.mxu0 %v3380
    %5465 = vmatprep.subr.bf16.mxu0 %v3365
    %5466 = vmatpush1.bf16.msra.mxu0 %v3364
    %5467 = vmatprep.subr.bf16.mxu0 %v3349
    %5468 = vmatpush1.bf16.msra.mxu0 %v3348
    %5469 = vmatprep.subr.bf16.mxu0 %v3333
    %5470 = vmatpush1.bf16.msra.mxu0 %v3332
    %5471 = vmatprep.subr.bf16.mxu0 %v3317
    %5472 = vmatpush1.bf16.msra.mxu0 %v3316
    %5473 = vmatprep.subr.bf16.mxu0 %v3557
    %5474 = vmatpush2.bf16.msra.mxu0 %v3556
    %5475 = vmatprep.subr.bf16.mxu0 %v3541
    %5476 = vmatpush2.bf16.msra.mxu0 %v3540
    %5477 = vmatprep.subr.bf16.mxu0 %v3525
    %5478 = vmatpush2.bf16.msra.mxu0 %v3524
    %5479 = vmatprep.subr.bf16.mxu0 %v3509
    %5480 = vmatpush2.bf16.msra.mxu0 %v3508
    %5481 = vmatprep.subr.bf16.mxu0 %v3493
    %5482 = vmatpush2.bf16.msra.mxu0 %v3492
    %5483 = vmatprep.subr.bf16.mxu0 %v3477
    %5484 = vmatpush2.bf16.msra.mxu0 %v3476
    %5485 = vmatprep.subr.bf16.mxu0 %v3461
    %5486 = vmatpush2.bf16.msra.mxu0 %v3460
    %5487 = vmatprep.subr.bf16.mxu0 %v3445
    %5488 = vmatpush2.bf16.msra.mxu0 %v3444
    %5489 = vmatprep.mubr.bf16.mxu0 %v991
    %5490 = vmatmul.mubr.bf16.gmra.mxu0 %v990
    %v5491 = vpop.f32.mrf.mxu0
    %v5492 = vadd.f32 %v944, %v5491
    %v5493 = vpop.f32.mrf.mxu0
    %v5494 = vadd.f32 %v948, %v5493
    %v5495 = vpop.f32.mrf.mxu0
    %v5496 = vpop.f32.mrf.mxu0
    %5497 = vdwg.mxu0
    %5498 = vmatprep.subr.bf16.mxu0 %v3685
    %5499 = vmatpush1.bf16.msra.mxu0 %v3684
    %5500 = vmatprep.subr.bf16.mxu0 %v3669
    %5501 = vmatpush1.bf16.msra.mxu0 %v3668
    %5502 = vmatprep.subr.bf16.mxu0 %v3653
    %5503 = vmatpush1.bf16.msra.mxu0 %v3652
    %5504 = vmatprep.subr.bf16.mxu0 %v3637
    %5505 = vmatpush1.bf16.msra.mxu0 %v3636
    %5506 = vmatprep.subr.bf16.mxu0 %v3621
    %5507 = vmatpush1.bf16.msra.mxu0 %v3620
    %5508 = vmatprep.subr.bf16.mxu0 %v3605
    %5509 = vmatpush1.bf16.msra.mxu0 %v3604
    %5510 = vmatprep.subr.bf16.mxu0 %v3589
    %5511 = vmatpush1.bf16.msra.mxu0 %v3588
    %5512 = vmatprep.subr.bf16.mxu0 %v3573
    %5513 = vmatpush1.bf16.msra.mxu0 %v3572
    %5514 = vmatprep.subr.bf16.mxu0 %v3813
    %5515 = vmatpush2.bf16.msra.mxu0 %v3812
    %5516 = vmatprep.subr.bf16.mxu0 %v3797
    %5517 = vmatpush2.bf16.msra.mxu0 %v3796
    %5518 = vmatprep.subr.bf16.mxu0 %v3781
    %5519 = vmatpush2.bf16.msra.mxu0 %v3780
    %5520 = vmatprep.subr.bf16.mxu0 %v3765
    %5521 = vmatpush2.bf16.msra.mxu0 %v3764
    %5522 = vmatprep.subr.bf16.mxu0 %v3749
    %5523 = vmatpush2.bf16.msra.mxu0 %v3748
    %5524 = vmatprep.subr.bf16.mxu0 %v3733
    %5525 = vmatpush2.bf16.msra.mxu0 %v3732
    %5526 = vmatprep.subr.bf16.mxu0 %v3717
    %5527 = vmatpush2.bf16.msra.mxu0 %v3716
    %5528 = vmatprep.subr.bf16.mxu0 %v3701
    %5529 = vmatpush2.bf16.msra.mxu0 %v3700
    %5530 = vmatprep.mubr.bf16.mxu0 %v993
    %5531 = vmatmul.mubr.bf16.gmra.mxu0 %v992
    %v5532 = vpop.f32.mrf.mxu0
    %v5533 = vadd.f32 %v5492, %v5532
    %v5534 = vpop.f32.mrf.mxu0
    %v5535 = vadd.f32 %v5494, %v5534
    %v5536 = vpop.f32.mrf.mxu0
    %v5537 = vpop.f32.mrf.mxu0
    %5538 = vdwg.mxu0
    %5539 = vmatprep.subr.bf16.mxu0 %v3941
    %5540 = vmatpush1.bf16.msra.mxu0 %v3940
    %5541 = vmatprep.subr.bf16.mxu0 %v3925
    %5542 = vmatpush1.bf16.msra.mxu0 %v3924
    %5543 = vmatprep.subr.bf16.mxu0 %v3909
    %5544 = vmatpush1.bf16.msra.mxu0 %v3908
    %5545 = vmatprep.subr.bf16.mxu0 %v3893
    %5546 = vmatpush1.bf16.msra.mxu0 %v3892
    %5547 = vmatprep.subr.bf16.mxu0 %v3877
    %5548 = vmatpush1.bf16.msra.mxu0 %v3876
    %5549 = vmatprep.subr.bf16.mxu0 %v3861
    %5550 = vmatpush1.bf16.msra.mxu0 %v3860
    %5551 = vmatprep.subr.bf16.mxu0 %v3845
    %5552 = vmatpush1.bf16.msra.mxu0 %v3844
    %5553 = vmatprep.subr.bf16.mxu0 %v3829
    %5554 = vmatpush1.bf16.msra.mxu0 %v3828
    %5555 = vmatprep.subr.bf16.mxu0 %v4069
    %5556 = vmatpush2.bf16.msra.mxu0 %v4068
    %5557 = vmatprep.subr.bf16.mxu0 %v4053
    %5558 = vmatpush2.bf16.msra.mxu0 %v4052
    %5559 = vmatprep.subr.bf16.mxu0 %v4037
    %5560 = vmatpush2.bf16.msra.mxu0 %v4036
    %5561 = vmatprep.subr.bf16.mxu0 %v4021
    %5562 = vmatpush2.bf16.msra.mxu0 %v4020
    %5563 = vmatprep.subr.bf16.mxu0 %v4005
    %5564 = vmatpush2.bf16.msra.mxu0 %v4004
    %5565 = vmatprep.subr.bf16.mxu0 %v3989
    %5566 = vmatpush2.bf16.msra.mxu0 %v3988
    %5567 = vmatprep.subr.bf16.mxu0 %v3973
    %5568 = vmatpush2.bf16.msra.mxu0 %v3972
    %5569 = vmatprep.subr.bf16.mxu0 %v3957
    %5570 = vmatpush2.bf16.msra.mxu0 %v3956
    %5571 = vmatprep.mubr.bf16.mxu0 %v995
    %5572 = vmatmul.mubr.bf16.gmra.mxu0 %v994
    %v5573 = vpop.f32.mrf.mxu0
    %v5574 = vadd.f32 %v5533, %v5573
    %v5575 = vpop.f32.mrf.mxu0
    %v5576 = vadd.f32 %v5535, %v5575
    %v5577 = vpop.f32.mrf.mxu0
    %v5578 = vpop.f32.mrf.mxu0
    %5579 = vdwg.mxu0
    %5580 = vmatprep.subr.bf16.mxu0 %v3431
    %5581 = vmatpush1.bf16.msra.mxu0 %v3430
    %5582 = vmatprep.subr.bf16.mxu0 %v3415
    %5583 = vmatpush1.bf16.msra.mxu0 %v3414
    %5584 = vmatprep.subr.bf16.mxu0 %v3399
    %5585 = vmatpush1.bf16.msra.mxu0 %v3398
    %5586 = vmatprep.subr.bf16.mxu0 %v3383
    %5587 = vmatpush1.bf16.msra.mxu0 %v3382
    %5588 = vmatprep.subr.bf16.mxu0 %v3367
    %5589 = vmatpush1.bf16.msra.mxu0 %v3366
    %5590 = vmatprep.subr.bf16.mxu0 %v3351
    %5591 = vmatpush1.bf16.msra.mxu0 %v3350
    %5592 = vmatprep.subr.bf16.mxu0 %v3335
    %5593 = vmatpush1.bf16.msra.mxu0 %v3334
    %5594 = vmatprep.subr.bf16.mxu0 %v3319
    %5595 = vmatpush1.bf16.msra.mxu0 %v3318
    %5596 = vmatprep.subr.bf16.mxu0 %v3559
    %5597 = vmatpush2.bf16.msra.mxu0 %v3558
    %5598 = vmatprep.subr.bf16.mxu0 %v3543
    %5599 = vmatpush2.bf16.msra.mxu0 %v3542
    %5600 = vmatprep.subr.bf16.mxu0 %v3527
    %5601 = vmatpush2.bf16.msra.mxu0 %v3526
    %5602 = vmatprep.subr.bf16.mxu0 %v3511
    %5603 = vmatpush2.bf16.msra.mxu0 %v3510
    %5604 = vmatprep.subr.bf16.mxu0 %v3495
    %5605 = vmatpush2.bf16.msra.mxu0 %v3494
    %5606 = vmatprep.subr.bf16.mxu0 %v3479
    %5607 = vmatpush2.bf16.msra.mxu0 %v3478
    %5608 = vmatprep.subr.bf16.mxu0 %v3463
    %5609 = vmatpush2.bf16.msra.mxu0 %v3462
    %5610 = vmatprep.subr.bf16.mxu0 %v3447
    %5611 = vmatpush2.bf16.msra.mxu0 %v3446
    %5612 = vmatprep.mubr.bf16.mxu0 %v991
    %5613 = vmatmul.mubr.bf16.gmra.mxu0 %v990
    %v5614 = vpop.f32.mrf.mxu0
    %v5615 = vadd.f32 %v952, %v5614
    %v5616 = vpop.f32.mrf.mxu0
    %v5617 = vadd.f32 %v956, %v5616
    %v5618 = vpop.f32.mrf.mxu0
    %v5619 = vpop.f32.mrf.mxu0
    %5620 = vdwg.mxu0
    %5621 = vmatprep.subr.bf16.mxu0 %v3687
    %5622 = vmatpush1.bf16.msra.mxu0 %v3686
    %5623 = vmatprep.subr.bf16.mxu0 %v3671
    %5624 = vmatpush1.bf16.msra.mxu0 %v3670
    %5625 = vmatprep.subr.bf16.mxu0 %v3655
    %5626 = vmatpush1.bf16.msra.mxu0 %v3654
    %5627 = vmatprep.subr.bf16.mxu0 %v3639
    %5628 = vmatpush1.bf16.msra.mxu0 %v3638
    %5629 = vmatprep.subr.bf16.mxu0 %v3623
    %5630 = vmatpush1.bf16.msra.mxu0 %v3622
    %5631 = vmatprep.subr.bf16.mxu0 %v3607
    %5632 = vmatpush1.bf16.msra.mxu0 %v3606
    %5633 = vmatprep.subr.bf16.mxu0 %v3591
    %5634 = vmatpush1.bf16.msra.mxu0 %v3590
    %5635 = vmatprep.subr.bf16.mxu0 %v3575
    %5636 = vmatpush1.bf16.msra.mxu0 %v3574
    %5637 = vmatprep.subr.bf16.mxu0 %v3815
    %5638 = vmatpush2.bf16.msra.mxu0 %v3814
    %5639 = vmatprep.subr.bf16.mxu0 %v3799
    %5640 = vmatpush2.bf16.msra.mxu0 %v3798
    %5641 = vmatprep.subr.bf16.mxu0 %v3783
    %5642 = vmatpush2.bf16.msra.mxu0 %v3782
    %5643 = vmatprep.subr.bf16.mxu0 %v3767
    %5644 = vmatpush2.bf16.msra.mxu0 %v3766
    %5645 = vmatprep.subr.bf16.mxu0 %v3751
    %5646 = vmatpush2.bf16.msra.mxu0 %v3750
    %5647 = vmatprep.subr.bf16.mxu0 %v3735
    %5648 = vmatpush2.bf16.msra.mxu0 %v3734
    %5649 = vmatprep.subr.bf16.mxu0 %v3719
    %5650 = vmatpush2.bf16.msra.mxu0 %v3718
    %5651 = vmatprep.subr.bf16.mxu0 %v3703
    %5652 = vmatpush2.bf16.msra.mxu0 %v3702
    %5653 = vmatprep.mubr.bf16.mxu0 %v993
    %5654 = vmatmul.mubr.bf16.gmra.mxu0 %v992
    %v5655 = vpop.f32.mrf.mxu0
    %v5656 = vadd.f32 %v5615, %v5655
    %v5657 = vpop.f32.mrf.mxu0
    %v5658 = vadd.f32 %v5617, %v5657
    %v5659 = vpop.f32.mrf.mxu0
    %v5660 = vpop.f32.mrf.mxu0
    %5661 = vdwg.mxu0
    %5662 = vmatprep.subr.bf16.mxu0 %v3943
    %5663 = vmatpush1.bf16.msra.mxu0 %v3942
    %5664 = vmatprep.subr.bf16.mxu0 %v3927
    %5665 = vmatpush1.bf16.msra.mxu0 %v3926
    %5666 = vmatprep.subr.bf16.mxu0 %v3911
    %5667 = vmatpush1.bf16.msra.mxu0 %v3910
    %5668 = vmatprep.subr.bf16.mxu0 %v3895
    %5669 = vmatpush1.bf16.msra.mxu0 %v3894
    %5670 = vmatprep.subr.bf16.mxu0 %v3879
    %5671 = vmatpush1.bf16.msra.mxu0 %v3878
    %5672 = vmatprep.subr.bf16.mxu0 %v3863
    %5673 = vmatpush1.bf16.msra.mxu0 %v3862
    %5674 = vmatprep.subr.bf16.mxu0 %v3847
    %5675 = vmatpush1.bf16.msra.mxu0 %v3846
    %5676 = vmatprep.subr.bf16.mxu0 %v3831
    %5677 = vmatpush1.bf16.msra.mxu0 %v3830
    %5678 = vmatprep.subr.bf16.mxu0 %v4071
    %5679 = vmatpush2.bf16.msra.mxu0 %v4070
    %5680 = vmatprep.subr.bf16.mxu0 %v4055
    %5681 = vmatpush2.bf16.msra.mxu0 %v4054
    %5682 = vmatprep.subr.bf16.mxu0 %v4039
    %5683 = vmatpush2.bf16.msra.mxu0 %v4038
    %5684 = vmatprep.subr.bf16.mxu0 %v4023
    %5685 = vmatpush2.bf16.msra.mxu0 %v4022
    %5686 = vmatprep.subr.bf16.mxu0 %v4007
    %5687 = vmatpush2.bf16.msra.mxu0 %v4006
    %5688 = vmatprep.subr.bf16.mxu0 %v3991
    %5689 = vmatpush2.bf16.msra.mxu0 %v3990
    %5690 = vmatprep.subr.bf16.mxu0 %v3975
    %5691 = vmatpush2.bf16.msra.mxu0 %v3974
    %5692 = vmatprep.subr.bf16.mxu0 %v3959
    %5693 = vmatpush2.bf16.msra.mxu0 %v3958
    %5694 = vmatprep.mubr.bf16.mxu0 %v995
    %5695 = vmatmul.mubr.bf16.gmra.mxu0 %v994
    %v5696 = vpop.f32.mrf.mxu0
    %v5697 = vadd.f32 %v5656, %v5696
    %v5698 = vpop.f32.mrf.mxu0
    %v5699 = vadd.f32 %v5658, %v5698
    %v5700 = vpop.f32.mrf.mxu0
    %v5701 = vpop.f32.mrf.mxu0
    %5702 = vdwg.mxu0
    %5703 = vmatprep.subr.bf16.mxu0 %v3433
    %5704 = vmatpush1.bf16.msra.mxu0 %v3432
    %5705 = vmatprep.subr.bf16.mxu0 %v3417
    %5706 = vmatpush1.bf16.msra.mxu0 %v3416
    %5707 = vmatprep.subr.bf16.mxu0 %v3401
    %5708 = vmatpush1.bf16.msra.mxu0 %v3400
    %5709 = vmatprep.subr.bf16.mxu0 %v3385
    %5710 = vmatpush1.bf16.msra.mxu0 %v3384
    %5711 = vmatprep.subr.bf16.mxu0 %v3369
    %5712 = vmatpush1.bf16.msra.mxu0 %v3368
    %5713 = vmatprep.subr.bf16.mxu0 %v3353
    %5714 = vmatpush1.bf16.msra.mxu0 %v3352
    %5715 = vmatprep.subr.bf16.mxu0 %v3337
    %5716 = vmatpush1.bf16.msra.mxu0 %v3336
    %5717 = vmatprep.subr.bf16.mxu0 %v3321
    %5718 = vmatpush1.bf16.msra.mxu0 %v3320
    %5719 = vmatprep.subr.bf16.mxu0 %v3561
    %5720 = vmatpush2.bf16.msra.mxu0 %v3560
    %5721 = vmatprep.subr.bf16.mxu0 %v3545
    %5722 = vmatpush2.bf16.msra.mxu0 %v3544
    %5723 = vmatprep.subr.bf16.mxu0 %v3529
    %5724 = vmatpush2.bf16.msra.mxu0 %v3528
    %5725 = vmatprep.subr.bf16.mxu0 %v3513
    %5726 = vmatpush2.bf16.msra.mxu0 %v3512
    %5727 = vmatprep.subr.bf16.mxu0 %v3497
    %5728 = vmatpush2.bf16.msra.mxu0 %v3496
    %5729 = vmatprep.subr.bf16.mxu0 %v3481
    %5730 = vmatpush2.bf16.msra.mxu0 %v3480
    %5731 = vmatprep.subr.bf16.mxu0 %v3465
    %5732 = vmatpush2.bf16.msra.mxu0 %v3464
    %5733 = vmatprep.subr.bf16.mxu0 %v3449
    %5734 = vmatpush2.bf16.msra.mxu0 %v3448
    %5735 = vmatprep.mubr.bf16.mxu0 %v991
    %5736 = vmatmul.mubr.bf16.gmra.mxu0 %v990
    %v5737 = vpop.f32.mrf.mxu0
    %v5738 = vadd.f32 %v960, %v5737
    %v5739 = vpop.f32.mrf.mxu0
    %v5740 = vadd.f32 %v964, %v5739
    %v5741 = vpop.f32.mrf.mxu0
    %v5742 = vpop.f32.mrf.mxu0
    %5743 = vdwg.mxu0
    %5744 = vmatprep.subr.bf16.mxu0 %v3689
    %5745 = vmatpush1.bf16.msra.mxu0 %v3688
    %5746 = vmatprep.subr.bf16.mxu0 %v3673
    %5747 = vmatpush1.bf16.msra.mxu0 %v3672
    %5748 = vmatprep.subr.bf16.mxu0 %v3657
    %5749 = vmatpush1.bf16.msra.mxu0 %v3656
    %5750 = vmatprep.subr.bf16.mxu0 %v3641
    %5751 = vmatpush1.bf16.msra.mxu0 %v3640
    %5752 = vmatprep.subr.bf16.mxu0 %v3625
    %5753 = vmatpush1.bf16.msra.mxu0 %v3624
    %5754 = vmatprep.subr.bf16.mxu0 %v3609
    %5755 = vmatpush1.bf16.msra.mxu0 %v3608
    %5756 = vmatprep.subr.bf16.mxu0 %v3593
    %5757 = vmatpush1.bf16.msra.mxu0 %v3592
    %5758 = vmatprep.subr.bf16.mxu0 %v3577
    %5759 = vmatpush1.bf16.msra.mxu0 %v3576
    %5760 = vmatprep.subr.bf16.mxu0 %v3817
    %5761 = vmatpush2.bf16.msra.mxu0 %v3816
    %5762 = vmatprep.subr.bf16.mxu0 %v3801
    %5763 = vmatpush2.bf16.msra.mxu0 %v3800
    %5764 = vmatprep.subr.bf16.mxu0 %v3785
    %5765 = vmatpush2.bf16.msra.mxu0 %v3784
    %5766 = vmatprep.subr.bf16.mxu0 %v3769
    %5767 = vmatpush2.bf16.msra.mxu0 %v3768
    %5768 = vmatprep.subr.bf16.mxu0 %v3753
    %5769 = vmatpush2.bf16.msra.mxu0 %v3752
    %5770 = vmatprep.subr.bf16.mxu0 %v3737
    %5771 = vmatpush2.bf16.msra.mxu0 %v3736
    %5772 = vmatprep.subr.bf16.mxu0 %v3721
    %5773 = vmatpush2.bf16.msra.mxu0 %v3720
    %5774 = vmatprep.subr.bf16.mxu0 %v3705
    %5775 = vmatpush2.bf16.msra.mxu0 %v3704
    %5776 = vmatprep.mubr.bf16.mxu0 %v993
    %5777 = vmatmul.mubr.bf16.gmra.mxu0 %v992
    %v5778 = vpop.f32.mrf.mxu0
    %v5779 = vadd.f32 %v5738, %v5778
    %v5780 = vpop.f32.mrf.mxu0
    %v5781 = vadd.f32 %v5740, %v5780
    %v5782 = vpop.f32.mrf.mxu0
    %v5783 = vpop.f32.mrf.mxu0
    %5784 = vdwg.mxu0
    %5785 = vmatprep.subr.bf16.mxu0 %v3945
    %5786 = vmatpush1.bf16.msra.mxu0 %v3944
    %5787 = vmatprep.subr.bf16.mxu0 %v3929
    %5788 = vmatpush1.bf16.msra.mxu0 %v3928
    %5789 = vmatprep.subr.bf16.mxu0 %v3913
    %5790 = vmatpush1.bf16.msra.mxu0 %v3912
    %5791 = vmatprep.subr.bf16.mxu0 %v3897
    %5792 = vmatpush1.bf16.msra.mxu0 %v3896
    %5793 = vmatprep.subr.bf16.mxu0 %v3881
    %5794 = vmatpush1.bf16.msra.mxu0 %v3880
    %5795 = vmatprep.subr.bf16.mxu0 %v3865
    %5796 = vmatpush1.bf16.msra.mxu0 %v3864
    %5797 = vmatprep.subr.bf16.mxu0 %v3849
    %5798 = vmatpush1.bf16.msra.mxu0 %v3848
    %5799 = vmatprep.subr.bf16.mxu0 %v3833
    %5800 = vmatpush1.bf16.msra.mxu0 %v3832
    %5801 = vmatprep.subr.bf16.mxu0 %v4073
    %5802 = vmatpush2.bf16.msra.mxu0 %v4072
    %5803 = vmatprep.subr.bf16.mxu0 %v4057
    %5804 = vmatpush2.bf16.msra.mxu0 %v4056
    %5805 = vmatprep.subr.bf16.mxu0 %v4041
    %5806 = vmatpush2.bf16.msra.mxu0 %v4040
    %5807 = vmatprep.subr.bf16.mxu0 %v4025
    %5808 = vmatpush2.bf16.msra.mxu0 %v4024
    %5809 = vmatprep.subr.bf16.mxu0 %v4009
    %5810 = vmatpush2.bf16.msra.mxu0 %v4008
    %5811 = vmatprep.subr.bf16.mxu0 %v3993
    %5812 = vmatpush2.bf16.msra.mxu0 %v3992
    %5813 = vmatprep.subr.bf16.mxu0 %v3977
    %5814 = vmatpush2.bf16.msra.mxu0 %v3976
    %5815 = vmatprep.subr.bf16.mxu0 %v3961
    %5816 = vmatpush2.bf16.msra.mxu0 %v3960
    %5817 = vmatprep.mubr.bf16.mxu0 %v995
    %5818 = vmatmul.mubr.bf16.gmra.mxu0 %v994
    %v5819 = vpop.f32.mrf.mxu0
    %v5820 = vadd.f32 %v5779, %v5819
    %v5821 = vpop.f32.mrf.mxu0
    %v5822 = vadd.f32 %v5781, %v5821
    %v5823 = vpop.f32.mrf.mxu0
    %v5824 = vpop.f32.mrf.mxu0
    %5825 = vdwg.mxu0
    %v5826 = vmax.f32 %v4959, 0.0
    %v5827 = vmax.f32 %v4961, 0.0
    %v5828 = vmax.f32 %v5082, 0.0
    %v5829 = vmax.f32 %v5084, 0.0
    %v5830 = vmax.f32 %v5205, 0.0
    %v5831 = vmax.f32 %v5207, 0.0
    %v5832 = vmax.f32 %v5328, 0.0
    %v5833 = vmax.f32 %v5330, 0.0
    %v5834 = vmax.f32 %v5451, 0.0
    %v5835 = vmax.f32 %v5453, 0.0
    %v5836 = vmax.f32 %v5574, 0.0
    %v5837 = vmax.f32 %v5576, 0.0
    %v5838 = vmax.f32 %v5697, 0.0
    %v5839 = vmax.f32 %v5699, 0.0
    %v5840 = vmax.f32 %v5820, 0.0
    %v5841 = vmax.f32 %v5822, 0.0
    %v5842 = vpack.c.bf16 %v5826, %v5826
    %v5843 = vpack.c.bf16 %v5827, %v5827
    %v5844 = vpack.c.bf16 %v5828, %v5828
    %v5845 = vpack.c.bf16 %v5829, %v5829
    %v5846 = vpack.c.bf16 %v5830, %v5830
    %v5847 = vpack.c.bf16 %v5831, %v5831
    %v5848 = vpack.c.bf16 %v5832, %v5832
    %v5849 = vpack.c.bf16 %v5833, %v5833
    %v5850 = vpack.c.bf16 %v5834, %v5834
    %v5851 = vpack.c.bf16 %v5835, %v5835
    %v5852 = vpack.c.bf16 %v5836, %v5836
    %v5853 = vpack.c.bf16 %v5837, %v5837
    %v5854 = vpack.c.bf16 %v5838, %v5838
    %v5855 = vpack.c.bf16 %v5839, %v5839
    %v5856 = vpack.c.bf16 %v5840, %v5840
    %v5857 = vpack.c.bf16 %v5841, %v5841
    %v5858 = vld [vmem:[%s4] sm:$0xf]
    %v5859 = vld [vmem:[%s4 + $0x4] sm:$0xf]
    %v5860 = vld [vmem:[%s4 + $0x8] sm:$0xf]
    %v5861 = vld [vmem:[%s4 + $0xc] sm:$0xf]
    %v5862 = vld [vmem:[%s4 + $0x10] sm:$0xf]
    %v5863 = vld [vmem:[%s4 + $0x14] sm:$0xf]
    %v5864 = vld [vmem:[%s4 + $0x18] sm:$0xf]
    %v5865 = vld [vmem:[%s4 + $0x1c] sm:$0xf]
    %v5866 = vld [vmem:[%s4 + $0x20] sm:$0xf]
    %v5867 = vld [vmem:[%s4 + $0x24] sm:$0xf]
    %v5868 = vld [vmem:[%s4 + $0x28] sm:$0xf]
    %v5869 = vld [vmem:[%s4 + $0x2c] sm:$0xf]
    %v5870 = vld [vmem:[%s4 + $0x30] sm:$0xf]
    %v5871 = vld [vmem:[%s4 + $0x34] sm:$0xf]
    %v5872 = vld [vmem:[%s4 + $0x38] sm:$0xf]
    %v5873 = vld [vmem:[%s4 + $0x3c] sm:$0xf]
    %v5874 = vld [vmem:[%s4 + $0x40] sm:$0xf]
    %v5875 = vld [vmem:[%s4 + $0x44] sm:$0xf]
    %v5876 = vld [vmem:[%s4 + $0x48] sm:$0xf]
    %v5877 = vld [vmem:[%s4 + $0x4c] sm:$0xf]
    %v5878 = vld [vmem:[%s4 + $0x50] sm:$0xf]
    %v5879 = vld [vmem:[%s4 + $0x54] sm:$0xf]
    %v5880 = vld [vmem:[%s4 + $0x58] sm:$0xf]
    %v5881 = vld [vmem:[%s4 + $0x5c] sm:$0xf]
    %v5882 = vld [vmem:[%s4 + $0x60] sm:$0xf]
    %v5883 = vld [vmem:[%s4 + $0x64] sm:$0xf]
    %v5884 = vld [vmem:[%s4 + $0x68] sm:$0xf]
    %v5885 = vld [vmem:[%s4 + $0x6c] sm:$0xf]
    %v5886 = vld [vmem:[%s4 + $0x70] sm:$0xf]
    %v5887 = vld [vmem:[%s4 + $0x74] sm:$0xf]
    %v5888 = vld [vmem:[%s4 + $0x78] sm:$0xf]
    %v5889 = vld [vmem:[%s4 + $0x7c] sm:$0xf]
    %v5890 = vld [vmem:[%s4 + $0x80] sm:$0xf]
    %v5891 = vld [vmem:[%s4 + $0x84] sm:$0xf]
    %v5892 = vld [vmem:[%s4 + $0x88] sm:$0xf]
    %v5893 = vld [vmem:[%s4 + $0x8c] sm:$0xf]
    %v5894 = vld [vmem:[%s4 + $0x90] sm:$0xf]
    %v5895 = vld [vmem:[%s4 + $0x94] sm:$0xf]
    %v5896 = vld [vmem:[%s4 + $0x98] sm:$0xf]
    %v5897 = vld [vmem:[%s4 + $0x9c] sm:$0xf]
    %v5898 = vld [vmem:[%s4 + $0xa0] sm:$0xf]
    %v5899 = vld [vmem:[%s4 + $0xa4] sm:$0xf]
    %v5900 = vld [vmem:[%s4 + $0xa8] sm:$0xf]
    %v5901 = vld [vmem:[%s4 + $0xac] sm:$0xf]
    %v5902 = vld [vmem:[%s4 + $0xb0] sm:$0xf]
    %v5903 = vld [vmem:[%s4 + $0xb4] sm:$0xf]
    %v5904 = vld [vmem:[%s4 + $0xb8] sm:$0xf]
    %v5905 = vld [vmem:[%s4 + $0xbc] sm:$0xf]
    %v5906 = vld [vmem:[%s4 + $0xc0] sm:$0xf]
    %v5907 = vld [vmem:[%s4 + $0xc4] sm:$0xf]
    %v5908 = vld [vmem:[%s4 + $0xc8] sm:$0xf]
    %v5909 = vld [vmem:[%s4 + $0xcc] sm:$0xf]
    %v5910 = vld [vmem:[%s4 + $0xd0] sm:$0xf]
    %v5911 = vld [vmem:[%s4 + $0xd4] sm:$0xf]
    %v5912 = vld [vmem:[%s4 + $0xd8] sm:$0xf]
    %v5913 = vld [vmem:[%s4 + $0xdc] sm:$0xf]
    %v5914 = vld [vmem:[%s4 + $0xe0] sm:$0xf]
    %v5915 = vld [vmem:[%s4 + $0xe4] sm:$0xf]
    %v5916 = vld [vmem:[%s4 + $0xe8] sm:$0xf]
    %v5917 = vld [vmem:[%s4 + $0xec] sm:$0xf]
    %v5918 = vld [vmem:[%s4 + $0xf0] sm:$0xf]
    %v5919 = vld [vmem:[%s4 + $0xf4] sm:$0xf]
    %v5920 = vld [vmem:[%s4 + $0xf8] sm:$0xf]
    %v5921 = vld [vmem:[%s4 + $0xfc] sm:$0xf]
    %v5922 = vld [vmem:[%s4 + $0x100] sm:$0xf]
    %v5923 = vld [vmem:[%s4 + $0x104] sm:$0xf]
    %v5924 = vld [vmem:[%s4 + $0x108] sm:$0xf]
    %v5925 = vld [vmem:[%s4 + $0x10c] sm:$0xf]
    %v5926 = vld [vmem:[%s4 + $0x110] sm:$0xf]
    %v5927 = vld [vmem:[%s4 + $0x114] sm:$0xf]
    %v5928 = vld [vmem:[%s4 + $0x118] sm:$0xf]
    %v5929 = vld [vmem:[%s4 + $0x11c] sm:$0xf]
    %v5930 = vld [vmem:[%s4 + $0x120] sm:$0xf]
    %v5931 = vld [vmem:[%s4 + $0x124] sm:$0xf]
    %v5932 = vld [vmem:[%s4 + $0x128] sm:$0xf]
    %v5933 = vld [vmem:[%s4 + $0x12c] sm:$0xf]
    %v5934 = vld [vmem:[%s4 + $0x130] sm:$0xf]
    %v5935 = vld [vmem:[%s4 + $0x134] sm:$0xf]
    %v5936 = vld [vmem:[%s4 + $0x138] sm:$0xf]
    %v5937 = vld [vmem:[%s4 + $0x13c] sm:$0xf]
    %v5938 = vld [vmem:[%s4 + $0x140] sm:$0xf]
    %v5939 = vld [vmem:[%s4 + $0x144] sm:$0xf]
    %v5940 = vld [vmem:[%s4 + $0x148] sm:$0xf]
    %v5941 = vld [vmem:[%s4 + $0x14c] sm:$0xf]
    %v5942 = vld [vmem:[%s4 + $0x150] sm:$0xf]
    %v5943 = vld [vmem:[%s4 + $0x154] sm:$0xf]
    %v5944 = vld [vmem:[%s4 + $0x158] sm:$0xf]
    %v5945 = vld [vmem:[%s4 + $0x15c] sm:$0xf]
    %v5946 = vld [vmem:[%s4 + $0x160] sm:$0xf]
    %v5947 = vld [vmem:[%s4 + $0x164] sm:$0xf]
    %v5948 = vld [vmem:[%s4 + $0x168] sm:$0xf]
    %v5949 = vld [vmem:[%s4 + $0x16c] sm:$0xf]
    %v5950 = vld [vmem:[%s4 + $0x170] sm:$0xf]
    %v5951 = vld [vmem:[%s4 + $0x174] sm:$0xf]
    %v5952 = vld [vmem:[%s4 + $0x178] sm:$0xf]
    %v5953 = vld [vmem:[%s4 + $0x17c] sm:$0xf]
    %v5954 = vld [vmem:[%s4 + $0x180] sm:$0xf]
    %v5955 = vld [vmem:[%s4 + $0x184] sm:$0xf]
    %v5956 = vld [vmem:[%s4 + $0x188] sm:$0xf]
    %v5957 = vld [vmem:[%s4 + $0x18c] sm:$0xf]
    %v5958 = vld [vmem:[%s4 + $0x190] sm:$0xf]
    %v5959 = vld [vmem:[%s4 + $0x194] sm:$0xf]
    %v5960 = vld [vmem:[%s4 + $0x198] sm:$0xf]
    %v5961 = vld [vmem:[%s4 + $0x19c] sm:$0xf]
    %v5962 = vld [vmem:[%s4 + $0x1a0] sm:$0xf]
    %v5963 = vld [vmem:[%s4 + $0x1a4] sm:$0xf]
    %v5964 = vld [vmem:[%s4 + $0x1a8] sm:$0xf]
    %v5965 = vld [vmem:[%s4 + $0x1ac] sm:$0xf]
    %v5966 = vld [vmem:[%s4 + $0x1b0] sm:$0xf]
    %v5967 = vld [vmem:[%s4 + $0x1b4] sm:$0xf]
    %v5968 = vld [vmem:[%s4 + $0x1b8] sm:$0xf]
    %v5969 = vld [vmem:[%s4 + $0x1bc] sm:$0xf]
    %v5970 = vld [vmem:[%s4 + $0x1c0] sm:$0xf]
    %v5971 = vld [vmem:[%s4 + $0x1c4] sm:$0xf]
    %v5972 = vld [vmem:[%s4 + $0x1c8] sm:$0xf]
    %v5973 = vld [vmem:[%s4 + $0x1cc] sm:$0xf]
    %v5974 = vld [vmem:[%s4 + $0x1d0] sm:$0xf]
    %v5975 = vld [vmem:[%s4 + $0x1d4] sm:$0xf]
    %v5976 = vld [vmem:[%s4 + $0x1d8] sm:$0xf]
    %v5977 = vld [vmem:[%s4 + $0x1dc] sm:$0xf]
    %v5978 = vld [vmem:[%s4 + $0x1e0] sm:$0xf]
    %v5979 = vld [vmem:[%s4 + $0x1e4] sm:$0xf]
    %v5980 = vld [vmem:[%s4 + $0x1e8] sm:$0xf]
    %v5981 = vld [vmem:[%s4 + $0x1ec] sm:$0xf]
    %v5982 = vld [vmem:[%s4 + $0x1f0] sm:$0xf]
    %v5983 = vld [vmem:[%s4 + $0x1f4] sm:$0xf]
    %v5984 = vld [vmem:[%s4 + $0x1f8] sm:$0xf]
    %v5985 = vld [vmem:[%s4 + $0x1fc] sm:$0xf]
    %v5986 = vld [vmem:[%s4 + $0x200] sm:$0xf]
    %v5987 = vld [vmem:[%s4 + $0x204] sm:$0xf]
    %v5988 = vld [vmem:[%s4 + $0x208] sm:$0xf]
    %v5989 = vld [vmem:[%s4 + $0x20c] sm:$0xf]
    %v5990 = vld [vmem:[%s4 + $0x210] sm:$0xf]
    %v5991 = vld [vmem:[%s4 + $0x214] sm:$0xf]
    %v5992 = vld [vmem:[%s4 + $0x218] sm:$0xf]
    %v5993 = vld [vmem:[%s4 + $0x21c] sm:$0xf]
    %v5994 = vld [vmem:[%s4 + $0x220] sm:$0xf]
    %v5995 = vld [vmem:[%s4 + $0x224] sm:$0xf]
    %v5996 = vld [vmem:[%s4 + $0x228] sm:$0xf]
    %v5997 = vld [vmem:[%s4 + $0x22c] sm:$0xf]
    %v5998 = vld [vmem:[%s4 + $0x230] sm:$0xf]
    %v5999 = vld [vmem:[%s4 + $0x234] sm:$0xf]
    %v6000 = vld [vmem:[%s4 + $0x238] sm:$0xf]
    %v6001 = vld [vmem:[%s4 + $0x23c] sm:$0xf]
    %v6002 = vld [vmem:[%s4 + $0x240] sm:$0xf]
    %v6003 = vld [vmem:[%s4 + $0x244] sm:$0xf]
    %v6004 = vld [vmem:[%s4 + $0x248] sm:$0xf]
    %v6005 = vld [vmem:[%s4 + $0x24c] sm:$0xf]
    %v6006 = vld [vmem:[%s4 + $0x250] sm:$0xf]
    %v6007 = vld [vmem:[%s4 + $0x254] sm:$0xf]
    %v6008 = vld [vmem:[%s4 + $0x258] sm:$0xf]
    %v6009 = vld [vmem:[%s4 + $0x25c] sm:$0xf]
    %v6010 = vld [vmem:[%s4 + $0x260] sm:$0xf]
    %v6011 = vld [vmem:[%s4 + $0x264] sm:$0xf]
    %v6012 = vld [vmem:[%s4 + $0x268] sm:$0xf]
    %v6013 = vld [vmem:[%s4 + $0x26c] sm:$0xf]
    %v6014 = vld [vmem:[%s4 + $0x270] sm:$0xf]
    %v6015 = vld [vmem:[%s4 + $0x274] sm:$0xf]
    %v6016 = vld [vmem:[%s4 + $0x278] sm:$0xf]
    %v6017 = vld [vmem:[%s4 + $0x27c] sm:$0xf]
    %v6018 = vld [vmem:[%s4 + $0x280] sm:$0xf]
    %v6019 = vld [vmem:[%s4 + $0x284] sm:$0xf]
    %v6020 = vld [vmem:[%s4 + $0x288] sm:$0xf]
    %v6021 = vld [vmem:[%s4 + $0x28c] sm:$0xf]
    %v6022 = vld [vmem:[%s4 + $0x290] sm:$0xf]
    %v6023 = vld [vmem:[%s4 + $0x294] sm:$0xf]
    %v6024 = vld [vmem:[%s4 + $0x298] sm:$0xf]
    %v6025 = vld [vmem:[%s4 + $0x29c] sm:$0xf]
    %v6026 = vld [vmem:[%s4 + $0x2a0] sm:$0xf]
    %v6027 = vld [vmem:[%s4 + $0x2a4] sm:$0xf]
    %v6028 = vld [vmem:[%s4 + $0x2a8] sm:$0xf]
    %v6029 = vld [vmem:[%s4 + $0x2ac] sm:$0xf]
    %v6030 = vld [vmem:[%s4 + $0x2b0] sm:$0xf]
    %v6031 = vld [vmem:[%s4 + $0x2b4] sm:$0xf]
    %v6032 = vld [vmem:[%s4 + $0x2b8] sm:$0xf]
    %v6033 = vld [vmem:[%s4 + $0x2bc] sm:$0xf]
    %v6034 = vld [vmem:[%s4 + $0x2c0] sm:$0xf]
    %v6035 = vld [vmem:[%s4 + $0x2c4] sm:$0xf]
    %v6036 = vld [vmem:[%s4 + $0x2c8] sm:$0xf]
    %v6037 = vld [vmem:[%s4 + $0x2cc] sm:$0xf]
    %v6038 = vld [vmem:[%s4 + $0x2d0] sm:$0xf]
    %v6039 = vld [vmem:[%s4 + $0x2d4] sm:$0xf]
    %v6040 = vld [vmem:[%s4 + $0x2d8] sm:$0xf]
    %v6041 = vld [vmem:[%s4 + $0x2dc] sm:$0xf]
    %v6042 = vld [vmem:[%s4 + $0x2e0] sm:$0xf]
    %v6043 = vld [vmem:[%s4 + $0x2e4] sm:$0xf]
    %v6044 = vld [vmem:[%s4 + $0x2e8] sm:$0xf]
    %v6045 = vld [vmem:[%s4 + $0x2ec] sm:$0xf]
    %v6046 = vld [vmem:[%s4 + $0x2f0] sm:$0xf]
    %v6047 = vld [vmem:[%s4 + $0x2f4] sm:$0xf]
    %v6048 = vld [vmem:[%s4 + $0x2f8] sm:$0xf]
    %v6049 = vld [vmem:[%s4 + $0x2fc] sm:$0xf]
    %v6050 = vld [vmem:[%s4 + $0x300] sm:$0xf]
    %v6051 = vld [vmem:[%s4 + $0x304] sm:$0xf]
    %v6052 = vld [vmem:[%s4 + $0x308] sm:$0xf]
    %v6053 = vld [vmem:[%s4 + $0x30c] sm:$0xf]
    %v6054 = vld [vmem:[%s4 + $0x310] sm:$0xf]
    %v6055 = vld [vmem:[%s4 + $0x314] sm:$0xf]
    %v6056 = vld [vmem:[%s4 + $0x318] sm:$0xf]
    %v6057 = vld [vmem:[%s4 + $0x31c] sm:$0xf]
    %v6058 = vld [vmem:[%s4 + $0x320] sm:$0xf]
    %v6059 = vld [vmem:[%s4 + $0x324] sm:$0xf]
    %v6060 = vld [vmem:[%s4 + $0x328] sm:$0xf]
    %v6061 = vld [vmem:[%s4 + $0x32c] sm:$0xf]
    %v6062 = vld [vmem:[%s4 + $0x330] sm:$0xf]
    %v6063 = vld [vmem:[%s4 + $0x334] sm:$0xf]
    %v6064 = vld [vmem:[%s4 + $0x338] sm:$0xf]
    %v6065 = vld [vmem:[%s4 + $0x33c] sm:$0xf]
    %v6066 = vld [vmem:[%s4 + $0x340] sm:$0xf]
    %v6067 = vld [vmem:[%s4 + $0x344] sm:$0xf]
    %v6068 = vld [vmem:[%s4 + $0x348] sm:$0xf]
    %v6069 = vld [vmem:[%s4 + $0x34c] sm:$0xf]
    %v6070 = vld [vmem:[%s4 + $0x350] sm:$0xf]
    %v6071 = vld [vmem:[%s4 + $0x354] sm:$0xf]
    %v6072 = vld [vmem:[%s4 + $0x358] sm:$0xf]
    %v6073 = vld [vmem:[%s4 + $0x35c] sm:$0xf]
    %v6074 = vld [vmem:[%s4 + $0x360] sm:$0xf]
    %v6075 = vld [vmem:[%s4 + $0x364] sm:$0xf]
    %v6076 = vld [vmem:[%s4 + $0x368] sm:$0xf]
    %v6077 = vld [vmem:[%s4 + $0x36c] sm:$0xf]
    %v6078 = vld [vmem:[%s4 + $0x370] sm:$0xf]
    %v6079 = vld [vmem:[%s4 + $0x374] sm:$0xf]
    %v6080 = vld [vmem:[%s4 + $0x378] sm:$0xf]
    %v6081 = vld [vmem:[%s4 + $0x37c] sm:$0xf]
    %v6082 = vld [vmem:[%s4 + $0x380] sm:$0xf]
    %v6083 = vld [vmem:[%s4 + $0x384] sm:$0xf]
    %v6084 = vld [vmem:[%s4 + $0x388] sm:$0xf]
    %v6085 = vld [vmem:[%s4 + $0x38c] sm:$0xf]
    %v6086 = vld [vmem:[%s4 + $0x390] sm:$0xf]
    %v6087 = vld [vmem:[%s4 + $0x394] sm:$0xf]
    %v6088 = vld [vmem:[%s4 + $0x398] sm:$0xf]
    %v6089 = vld [vmem:[%s4 + $0x39c] sm:$0xf]
    %v6090 = vld [vmem:[%s4 + $0x3a0] sm:$0xf]
    %v6091 = vld [vmem:[%s4 + $0x3a4] sm:$0xf]
    %v6092 = vld [vmem:[%s4 + $0x3a8] sm:$0xf]
    %v6093 = vld [vmem:[%s4 + $0x3ac] sm:$0xf]
    %v6094 = vld [vmem:[%s4 + $0x3b0] sm:$0xf]
    %v6095 = vld [vmem:[%s4 + $0x3b4] sm:$0xf]
    %v6096 = vld [vmem:[%s4 + $0x3b8] sm:$0xf]
    %v6097 = vld [vmem:[%s4 + $0x3bc] sm:$0xf]
    %v6098 = vld [vmem:[%s4 + $0x3c0] sm:$0xf]
    %v6099 = vld [vmem:[%s4 + $0x3c4] sm:$0xf]
    %v6100 = vld [vmem:[%s4 + $0x3c8] sm:$0xf]
    %v6101 = vld [vmem:[%s4 + $0x3cc] sm:$0xf]
    %v6102 = vld [vmem:[%s4 + $0x3d0] sm:$0xf]
    %v6103 = vld [vmem:[%s4 + $0x3d4] sm:$0xf]
    %v6104 = vld [vmem:[%s4 + $0x3d8] sm:$0xf]
    %v6105 = vld [vmem:[%s4 + $0x3dc] sm:$0xf]
    %v6106 = vld [vmem:[%s4 + $0x3e0] sm:$0xf]
    %v6107 = vld [vmem:[%s4 + $0x3e4] sm:$0xf]
    %v6108 = vld [vmem:[%s4 + $0x3e8] sm:$0xf]
    %v6109 = vld [vmem:[%s4 + $0x3ec] sm:$0xf]
    %v6110 = vld [vmem:[%s4 + $0x3f0] sm:$0xf]
    %v6111 = vld [vmem:[%s4 + $0x3f4] sm:$0xf]
    %v6112 = vld [vmem:[%s4 + $0x3f8] sm:$0xf]
    %v6113 = vld [vmem:[%s4 + $0x3fc] sm:$0xf]
    %v6114 = vld [vmem:[#allocation6] sm:$0x1]
    %v6116 = vlaneseq
    %v6117 = vshrl.u32 %v6116, 7
    %v6118 = vsub.s32 0, %v6117
    %v6119 = vrot.slane %v6114, %v6118
    %v6377 = vunpack.c.l.b16 %v5858
    %v6378 = vunpack.c.l.b16 %v5859
    %v6379 = vunpack.c.l.b16 %v5860
    %v6380 = vunpack.c.l.b16 %v5861
    %v6381 = vunpack.c.l.b16 %v5862
    %v6382 = vunpack.c.l.b16 %v5863
    %v6383 = vunpack.c.l.b16 %v5864
    %v6384 = vunpack.c.l.b16 %v5865
    %v6385 = vunpack.c.l.b16 %v5866
    %v6386 = vunpack.c.l.b16 %v5867
    %v6387 = vunpack.c.l.b16 %v5868
    %v6388 = vunpack.c.l.b16 %v5869
    %v6389 = vunpack.c.l.b16 %v5870
    %v6390 = vunpack.c.l.b16 %v5871
    %v6391 = vunpack.c.l.b16 %v5872
    %v6392 = vunpack.c.l.b16 %v5873
    %v6393 = vunpack.c.l.b16 %v5874
    %v6394 = vunpack.c.l.b16 %v5875
    %v6395 = vunpack.c.l.b16 %v5876
    %v6396 = vunpack.c.l.b16 %v5877
    %v6397 = vunpack.c.l.b16 %v5878
    %v6398 = vunpack.c.l.b16 %v5879
    %v6399 = vunpack.c.l.b16 %v5880
    %v6400 = vunpack.c.l.b16 %v5881
    %v6401 = vunpack.c.l.b16 %v5882
    %v6402 = vunpack.c.l.b16 %v5883
    %v6403 = vunpack.c.l.b16 %v5884
    %v6404 = vunpack.c.l.b16 %v5885
    %v6405 = vunpack.c.l.b16 %v5886
    %v6406 = vunpack.c.l.b16 %v5887
    %v6407 = vunpack.c.l.b16 %v5888
    %v6408 = vunpack.c.l.b16 %v5889
    %v6409 = vunpack.c.l.b16 %v5890
    %v6410 = vunpack.c.l.b16 %v5891
    %v6411 = vunpack.c.l.b16 %v5892
    %v6412 = vunpack.c.l.b16 %v5893
    %v6413 = vunpack.c.l.b16 %v5894
    %v6414 = vunpack.c.l.b16 %v5895
    %v6415 = vunpack.c.l.b16 %v5896
    %v6416 = vunpack.c.l.b16 %v5897
    %v6417 = vunpack.c.l.b16 %v5898
    %v6418 = vunpack.c.l.b16 %v5899
    %v6419 = vunpack.c.l.b16 %v5900
    %v6420 = vunpack.c.l.b16 %v5901
    %v6421 = vunpack.c.l.b16 %v5902
    %v6422 = vunpack.c.l.b16 %v5903
    %v6423 = vunpack.c.l.b16 %v5904
    %v6424 = vunpack.c.l.b16 %v5905
    %v6425 = vunpack.c.l.b16 %v5906
    %v6426 = vunpack.c.l.b16 %v5907
    %v6427 = vunpack.c.l.b16 %v5908
    %v6428 = vunpack.c.l.b16 %v5909
    %v6429 = vunpack.c.l.b16 %v5910
    %v6430 = vunpack.c.l.b16 %v5911
    %v6431 = vunpack.c.l.b16 %v5912
    %v6432 = vunpack.c.l.b16 %v5913
    %v6433 = vunpack.c.l.b16 %v5914
    %v6434 = vunpack.c.l.b16 %v5915
    %v6435 = vunpack.c.l.b16 %v5916
    %v6436 = vunpack.c.l.b16 %v5917
    %v6437 = vunpack.c.l.b16 %v5918
    %v6438 = vunpack.c.l.b16 %v5919
    %v6439 = vunpack.c.l.b16 %v5920
    %v6440 = vunpack.c.l.b16 %v5921
    %v6441 = vunpack.c.l.b16 %v5922
    %v6442 = vunpack.c.l.b16 %v5923
    %v6443 = vunpack.c.l.b16 %v5924
    %v6444 = vunpack.c.l.b16 %v5925
    %v6445 = vunpack.c.l.b16 %v5926
    %v6446 = vunpack.c.l.b16 %v5927
    %v6447 = vunpack.c.l.b16 %v5928
    %v6448 = vunpack.c.l.b16 %v5929
    %v6449 = vunpack.c.l.b16 %v5930
    %v6450 = vunpack.c.l.b16 %v5931
    %v6451 = vunpack.c.l.b16 %v5932
    %v6452 = vunpack.c.l.b16 %v5933
    %v6453 = vunpack.c.l.b16 %v5934
    %v6454 = vunpack.c.l.b16 %v5935
    %v6455 = vunpack.c.l.b16 %v5936
    %v6456 = vunpack.c.l.b16 %v5937
    %v6457 = vunpack.c.l.b16 %v5938
    %v6458 = vunpack.c.l.b16 %v5939
    %v6459 = vunpack.c.l.b16 %v5940
    %v6460 = vunpack.c.l.b16 %v5941
    %v6461 = vunpack.c.l.b16 %v5942
    %v6462 = vunpack.c.l.b16 %v5943
    %v6463 = vunpack.c.l.b16 %v5944
    %v6464 = vunpack.c.l.b16 %v5945
    %v6465 = vunpack.c.l.b16 %v5946
    %v6466 = vunpack.c.l.b16 %v5947
    %v6467 = vunpack.c.l.b16 %v5948
    %v6468 = vunpack.c.l.b16 %v5949
    %v6469 = vunpack.c.l.b16 %v5950
    %v6470 = vunpack.c.l.b16 %v5951
    %v6471 = vunpack.c.l.b16 %v5952
    %v6472 = vunpack.c.l.b16 %v5953
    %v6473 = vunpack.c.l.b16 %v5954
    %v6474 = vunpack.c.l.b16 %v5955
    %v6475 = vunpack.c.l.b16 %v5956
    %v6476 = vunpack.c.l.b16 %v5957
    %v6477 = vunpack.c.l.b16 %v5958
    %v6478 = vunpack.c.l.b16 %v5959
    %v6479 = vunpack.c.l.b16 %v5960
    %v6480 = vunpack.c.l.b16 %v5961
    %v6481 = vunpack.c.l.b16 %v5962
    %v6482 = vunpack.c.l.b16 %v5963
    %v6483 = vunpack.c.l.b16 %v5964
    %v6484 = vunpack.c.l.b16 %v5965
    %v6485 = vunpack.c.l.b16 %v5966
    %v6486 = vunpack.c.l.b16 %v5967
    %v6487 = vunpack.c.l.b16 %v5968
    %v6488 = vunpack.c.l.b16 %v5969
    %v6489 = vunpack.c.l.b16 %v5970
    %v6490 = vunpack.c.l.b16 %v5971
    %v6491 = vunpack.c.l.b16 %v5972
    %v6492 = vunpack.c.l.b16 %v5973
    %v6493 = vunpack.c.l.b16 %v5974
    %v6494 = vunpack.c.l.b16 %v5975
    %v6495 = vunpack.c.l.b16 %v5976
    %v6496 = vunpack.c.l.b16 %v5977
    %v6497 = vunpack.c.l.b16 %v5978
    %v6498 = vunpack.c.l.b16 %v5979
    %v6499 = vunpack.c.l.b16 %v5980
    %v6500 = vunpack.c.l.b16 %v5981
    %v6501 = vunpack.c.l.b16 %v5982
    %v6502 = vunpack.c.l.b16 %v5983
    %v6503 = vunpack.c.l.b16 %v5984
    %v6504 = vunpack.c.l.b16 %v5985
    %v6505 = vunpack.c.l.b16 %v5986
    %v6506 = vunpack.c.l.b16 %v5987
    %v6507 = vunpack.c.l.b16 %v5988
    %v6508 = vunpack.c.l.b16 %v5989
    %v6509 = vunpack.c.l.b16 %v5990
    %v6510 = vunpack.c.l.b16 %v5991
    %v6511 = vunpack.c.l.b16 %v5992
    %v6512 = vunpack.c.l.b16 %v5993
    %v6513 = vunpack.c.l.b16 %v5994
    %v6514 = vunpack.c.l.b16 %v5995
    %v6515 = vunpack.c.l.b16 %v5996
    %v6516 = vunpack.c.l.b16 %v5997
    %v6517 = vunpack.c.l.b16 %v5998
    %v6518 = vunpack.c.l.b16 %v5999
    %v6519 = vunpack.c.l.b16 %v6000
    %v6520 = vunpack.c.l.b16 %v6001
    %v6521 = vunpack.c.l.b16 %v6002
    %v6522 = vunpack.c.l.b16 %v6003
    %v6523 = vunpack.c.l.b16 %v6004
    %v6524 = vunpack.c.l.b16 %v6005
    %v6525 = vunpack.c.l.b16 %v6006
    %v6526 = vunpack.c.l.b16 %v6007
    %v6527 = vunpack.c.l.b16 %v6008
    %v6528 = vunpack.c.l.b16 %v6009
    %v6529 = vunpack.c.l.b16 %v6010
    %v6530 = vunpack.c.l.b16 %v6011
    %v6531 = vunpack.c.l.b16 %v6012
    %v6532 = vunpack.c.l.b16 %v6013
    %v6533 = vunpack.c.l.b16 %v6014
    %v6534 = vunpack.c.l.b16 %v6015
    %v6535 = vunpack.c.l.b16 %v6016
    %v6536 = vunpack.c.l.b16 %v6017
    %v6537 = vunpack.c.l.b16 %v6018
    %v6538 = vunpack.c.l.b16 %v6019
    %v6539 = vunpack.c.l.b16 %v6020
    %v6540 = vunpack.c.l.b16 %v6021
    %v6541 = vunpack.c.l.b16 %v6022
    %v6542 = vunpack.c.l.b16 %v6023
    %v6543 = vunpack.c.l.b16 %v6024
    %v6544 = vunpack.c.l.b16 %v6025
    %v6545 = vunpack.c.l.b16 %v6026
    %v6546 = vunpack.c.l.b16 %v6027
    %v6547 = vunpack.c.l.b16 %v6028
    %v6548 = vunpack.c.l.b16 %v6029
    %v6549 = vunpack.c.l.b16 %v6030
    %v6550 = vunpack.c.l.b16 %v6031
    %v6551 = vunpack.c.l.b16 %v6032
    %v6552 = vunpack.c.l.b16 %v6033
    %v6553 = vunpack.c.l.b16 %v6034
    %v6554 = vunpack.c.l.b16 %v6035
    %v6555 = vunpack.c.l.b16 %v6036
    %v6556 = vunpack.c.l.b16 %v6037
    %v6557 = vunpack.c.l.b16 %v6038
    %v6558 = vunpack.c.l.b16 %v6039
    %v6559 = vunpack.c.l.b16 %v6040
    %v6560 = vunpack.c.l.b16 %v6041
    %v6561 = vunpack.c.l.b16 %v6042
    %v6562 = vunpack.c.l.b16 %v6043
    %v6563 = vunpack.c.l.b16 %v6044
    %v6564 = vunpack.c.l.b16 %v6045
    %v6565 = vunpack.c.l.b16 %v6046
    %v6566 = vunpack.c.l.b16 %v6047
    %v6567 = vunpack.c.l.b16 %v6048
    %v6568 = vunpack.c.l.b16 %v6049
    %v6569 = vunpack.c.l.b16 %v6050
    %v6570 = vunpack.c.l.b16 %v6051
    %v6571 = vunpack.c.l.b16 %v6052
    %v6572 = vunpack.c.l.b16 %v6053
    %v6573 = vunpack.c.l.b16 %v6054
    %v6574 = vunpack.c.l.b16 %v6055
    %v6575 = vunpack.c.l.b16 %v6056
    %v6576 = vunpack.c.l.b16 %v6057
    %v6577 = vunpack.c.l.b16 %v6058
    %v6578 = vunpack.c.l.b16 %v6059
    %v6579 = vunpack.c.l.b16 %v6060
    %v6580 = vunpack.c.l.b16 %v6061
    %v6581 = vunpack.c.l.b16 %v6062
    %v6582 = vunpack.c.l.b16 %v6063
    %v6583 = vunpack.c.l.b16 %v6064
    %v6584 = vunpack.c.l.b16 %v6065
    %v6585 = vunpack.c.l.b16 %v6066
    %v6586 = vunpack.c.l.b16 %v6067
    %v6587 = vunpack.c.l.b16 %v6068
    %v6588 = vunpack.c.l.b16 %v6069
    %v6589 = vunpack.c.l.b16 %v6070
    %v6590 = vunpack.c.l.b16 %v6071
    %v6591 = vunpack.c.l.b16 %v6072
    %v6592 = vunpack.c.l.b16 %v6073
    %v6593 = vunpack.c.l.b16 %v6074
    %v6594 = vunpack.c.l.b16 %v6075
    %v6595 = vunpack.c.l.b16 %v6076
    %v6596 = vunpack.c.l.b16 %v6077
    %v6597 = vunpack.c.l.b16 %v6078
    %v6598 = vunpack.c.l.b16 %v6079
    %v6599 = vunpack.c.l.b16 %v6080
    %v6600 = vunpack.c.l.b16 %v6081
    %v6601 = vunpack.c.l.b16 %v6082
    %v6602 = vunpack.c.l.b16 %v6083
    %v6603 = vunpack.c.l.b16 %v6084
    %v6604 = vunpack.c.l.b16 %v6085
    %v6605 = vunpack.c.l.b16 %v6086
    %v6606 = vunpack.c.l.b16 %v6087
    %v6607 = vunpack.c.l.b16 %v6088
    %v6608 = vunpack.c.l.b16 %v6089
    %v6609 = vunpack.c.l.b16 %v6090
    %v6610 = vunpack.c.l.b16 %v6091
    %v6611 = vunpack.c.l.b16 %v6092
    %v6612 = vunpack.c.l.b16 %v6093
    %v6613 = vunpack.c.l.b16 %v6094
    %v6614 = vunpack.c.l.b16 %v6095
    %v6615 = vunpack.c.l.b16 %v6096
    %v6616 = vunpack.c.l.b16 %v6097
    %v6617 = vunpack.c.l.b16 %v6098
    %v6618 = vunpack.c.l.b16 %v6099
    %v6619 = vunpack.c.l.b16 %v6100
    %v6620 = vunpack.c.l.b16 %v6101
    %v6621 = vunpack.c.l.b16 %v6102
    %v6622 = vunpack.c.l.b16 %v6103
    %v6623 = vunpack.c.l.b16 %v6104
    %v6624 = vunpack.c.l.b16 %v6105
    %v6625 = vunpack.c.l.b16 %v6106
    %v6626 = vunpack.c.l.b16 %v6107
    %v6627 = vunpack.c.l.b16 %v6108
    %v6628 = vunpack.c.l.b16 %v6109
    %v6629 = vunpack.c.l.b16 %v6110
    %v6630 = vunpack.c.l.b16 %v6111
    %v6631 = vunpack.c.l.b16 %v6112
    %v6632 = vunpack.c.l.b16 %v6113
    %v6633 = vpack.c.b16 %v6378, %v6377
    %v6634 = vpack.c.b16 %v6380, %v6379
    %v6635 = vpack.c.b16 %v6382, %v6381
    %v6636 = vpack.c.b16 %v6384, %v6383
    %v6637 = vpack.c.b16 %v6386, %v6385
    %v6638 = vpack.c.b16 %v6388, %v6387
    %v6639 = vpack.c.b16 %v6390, %v6389
    %v6640 = vpack.c.b16 %v6392, %v6391
    %v6641 = vpack.c.b16 %v6394, %v6393
    %v6642 = vpack.c.b16 %v6396, %v6395
    %v6643 = vpack.c.b16 %v6398, %v6397
    %v6644 = vpack.c.b16 %v6400, %v6399
    %v6645 = vpack.c.b16 %v6402, %v6401
    %v6646 = vpack.c.b16 %v6404, %v6403
    %v6647 = vpack.c.b16 %v6406, %v6405
    %v6648 = vpack.c.b16 %v6408, %v6407
    %v6649 = vpack.c.b16 %v6410, %v6409
    %v6650 = vpack.c.b16 %v6412, %v6411
    %v6651 = vpack.c.b16 %v6414, %v6413
    %v6652 = vpack.c.b16 %v6416, %v6415
    %v6653 = vpack.c.b16 %v6418, %v6417
    %v6654 = vpack.c.b16 %v6420, %v6419
    %v6655 = vpack.c.b16 %v6422, %v6421
    %v6656 = vpack.c.b16 %v6424, %v6423
    %v6657 = vpack.c.b16 %v6426, %v6425
    %v6658 = vpack.c.b16 %v6428, %v6427
    %v6659 = vpack.c.b16 %v6430, %v6429
    %v6660 = vpack.c.b16 %v6432, %v6431
    %v6661 = vpack.c.b16 %v6434, %v6433
    %v6662 = vpack.c.b16 %v6436, %v6435
    %v6663 = vpack.c.b16 %v6438, %v6437
    %v6664 = vpack.c.b16 %v6440, %v6439
    %v6665 = vpack.c.b16 %v6442, %v6441
    %v6666 = vpack.c.b16 %v6444, %v6443
    %v6667 = vpack.c.b16 %v6446, %v6445
    %v6668 = vpack.c.b16 %v6448, %v6447
    %v6669 = vpack.c.b16 %v6450, %v6449
    %v6670 = vpack.c.b16 %v6452, %v6451
    %v6671 = vpack.c.b16 %v6454, %v6453
    %v6672 = vpack.c.b16 %v6456, %v6455
    %v6673 = vpack.c.b16 %v6458, %v6457
    %v6674 = vpack.c.b16 %v6460, %v6459
    %v6675 = vpack.c.b16 %v6462, %v6461
    %v6676 = vpack.c.b16 %v6464, %v6463
    %v6677 = vpack.c.b16 %v6466, %v6465
    %v6678 = vpack.c.b16 %v6468, %v6467
    %v6679 = vpack.c.b16 %v6470, %v6469
    %v6680 = vpack.c.b16 %v6472, %v6471
    %v6681 = vpack.c.b16 %v6474, %v6473
    %v6682 = vpack.c.b16 %v6476, %v6475
    %v6683 = vpack.c.b16 %v6478, %v6477
    %v6684 = vpack.c.b16 %v6480, %v6479
    %v6685 = vpack.c.b16 %v6482, %v6481
    %v6686 = vpack.c.b16 %v6484, %v6483
    %v6687 = vpack.c.b16 %v6486, %v6485
    %v6688 = vpack.c.b16 %v6488, %v6487
    %v6689 = vpack.c.b16 %v6490, %v6489
    %v6690 = vpack.c.b16 %v6492, %v6491
    %v6691 = vpack.c.b16 %v6494, %v6493
    %v6692 = vpack.c.b16 %v6496, %v6495
    %v6693 = vpack.c.b16 %v6498, %v6497
    %v6694 = vpack.c.b16 %v6500, %v6499
    %v6695 = vpack.c.b16 %v6502, %v6501
    %v6696 = vpack.c.b16 %v6504, %v6503
    %v6697 = vpack.c.b16 %v6506, %v6505
    %v6698 = vpack.c.b16 %v6508, %v6507
    %v6699 = vpack.c.b16 %v6510, %v6509
    %v6700 = vpack.c.b16 %v6512, %v6511
    %v6701 = vpack.c.b16 %v6514, %v6513
    %v6702 = vpack.c.b16 %v6516, %v6515
    %v6703 = vpack.c.b16 %v6518, %v6517
    %v6704 = vpack.c.b16 %v6520, %v6519
    %v6705 = vpack.c.b16 %v6522, %v6521
    %v6706 = vpack.c.b16 %v6524, %v6523
    %v6707 = vpack.c.b16 %v6526, %v6525
    %v6708 = vpack.c.b16 %v6528, %v6527
    %v6709 = vpack.c.b16 %v6530, %v6529
    %v6710 = vpack.c.b16 %v6532, %v6531
    %v6711 = vpack.c.b16 %v6534, %v6533
    %v6712 = vpack.c.b16 %v6536, %v6535
    %v6713 = vpack.c.b16 %v6538, %v6537
    %v6714 = vpack.c.b16 %v6540, %v6539
    %v6715 = vpack.c.b16 %v6542, %v6541
    %v6716 = vpack.c.b16 %v6544, %v6543
    %v6717 = vpack.c.b16 %v6546, %v6545
    %v6718 = vpack.c.b16 %v6548, %v6547
    %v6719 = vpack.c.b16 %v6550, %v6549
    %v6720 = vpack.c.b16 %v6552, %v6551
    %v6721 = vpack.c.b16 %v6554, %v6553
    %v6722 = vpack.c.b16 %v6556, %v6555
    %v6723 = vpack.c.b16 %v6558, %v6557
    %v6724 = vpack.c.b16 %v6560, %v6559
    %v6725 = vpack.c.b16 %v6562, %v6561
    %v6726 = vpack.c.b16 %v6564, %v6563
    %v6727 = vpack.c.b16 %v6566, %v6565
    %v6728 = vpack.c.b16 %v6568, %v6567
    %v6729 = vpack.c.b16 %v6570, %v6569
    %v6730 = vpack.c.b16 %v6572, %v6571
    %v6731 = vpack.c.b16 %v6574, %v6573
    %v6732 = vpack.c.b16 %v6576, %v6575
    %v6733 = vpack.c.b16 %v6578, %v6577
    %v6734 = vpack.c.b16 %v6580, %v6579
    %v6735 = vpack.c.b16 %v6582, %v6581
    %v6736 = vpack.c.b16 %v6584, %v6583
    %v6737 = vpack.c.b16 %v6586, %v6585
    %v6738 = vpack.c.b16 %v6588, %v6587
    %v6739 = vpack.c.b16 %v6590, %v6589
    %v6740 = vpack.c.b16 %v6592, %v6591
    %v6741 = vpack.c.b16 %v6594, %v6593
    %v6742 = vpack.c.b16 %v6596, %v6595
    %v6743 = vpack.c.b16 %v6598, %v6597
    %v6744 = vpack.c.b16 %v6600, %v6599
    %v6745 = vpack.c.b16 %v6602, %v6601
    %v6746 = vpack.c.b16 %v6604, %v6603
    %v6747 = vpack.c.b16 %v6606, %v6605
    %v6748 = vpack.c.b16 %v6608, %v6607
    %v6749 = vpack.c.b16 %v6610, %v6609
    %v6750 = vpack.c.b16 %v6612, %v6611
    %v6751 = vpack.c.b16 %v6614, %v6613
    %v6752 = vpack.c.b16 %v6616, %v6615
    %v6753 = vpack.c.b16 %v6618, %v6617
    %v6754 = vpack.c.b16 %v6620, %v6619
    %v6755 = vpack.c.b16 %v6622, %v6621
    %v6756 = vpack.c.b16 %v6624, %v6623
    %v6757 = vpack.c.b16 %v6626, %v6625
    %v6758 = vpack.c.b16 %v6628, %v6627
    %v6759 = vpack.c.b16 %v6630, %v6629
    %v6760 = vpack.c.b16 %v6632, %v6631
    %6889 = vmatprep.subr.bf16.mxu0 0
    %6890 = vmatpush1.bf16.msra.mxu0 %v6640
    %6891 = vmatprep.subr.bf16.mxu0 0
    %6892 = vmatpush1.bf16.msra.mxu0 %v6639
    %6893 = vmatprep.subr.bf16.mxu0 0
    %6894 = vmatpush1.bf16.msra.mxu0 %v6638
    %6895 = vmatprep.subr.bf16.mxu0 0
    %6896 = vmatpush1.bf16.msra.mxu0 %v6637
    %6897 = vmatprep.subr.bf16.mxu0 0
    %6898 = vmatpush1.bf16.msra.mxu0 %v6636
    %6899 = vmatprep.subr.bf16.mxu0 0
    %6900 = vmatpush1.bf16.msra.mxu0 %v6635
    %6901 = vmatprep.subr.bf16.mxu0 0
    %6902 = vmatpush1.bf16.msra.mxu0 %v6634
    %6903 = vmatprep.subr.bf16.mxu0 0
    %6904 = vmatpush1.bf16.msra.mxu0 %v6633
    %6905 = vmatprep.subr.bf16.mxu0 0
    %6906 = vmatpush2.bf16.msra.mxu0 %v6648
    %6907 = vmatprep.subr.bf16.mxu0 0
    %6908 = vmatpush2.bf16.msra.mxu0 %v6647
    %6909 = vmatprep.subr.bf16.mxu0 0
    %6910 = vmatpush2.bf16.msra.mxu0 %v6646
    %6911 = vmatprep.subr.bf16.mxu0 0
    %6912 = vmatpush2.bf16.msra.mxu0 %v6645
    %6913 = vmatprep.subr.bf16.mxu0 0
    %6914 = vmatpush2.bf16.msra.mxu0 %v6644
    %6915 = vmatprep.subr.bf16.mxu0 0
    %6916 = vmatpush2.bf16.msra.mxu0 %v6643
    %6917 = vmatprep.subr.bf16.mxu0 0
    %6918 = vmatpush2.bf16.msra.mxu0 %v6642
    %6919 = vmatprep.subr.bf16.mxu0 0
    %6920 = vmatpush2.bf16.msra.mxu0 %v6641
    %6921 = vmatprep.mubr.bf16.mxu0 %v5843
    %6922 = vmatmul.mubr.bf16.gmra.mxu0 %v5842
    %v6923 = vpop.f32.mrf.mxu0
    %v6924 = vadd.f32 %v6119, %v6923
    %v6925 = vpop.f32.mrf.mxu0
    %v6926 = vpop.f32.mrf.mxu0
    %v6927 = vpop.f32.mrf.mxu0
    %6928 = vdwg.mxu0
    %6929 = vmatprep.subr.bf16.mxu0 0
    %6930 = vmatpush1.bf16.msra.mxu0 %v6656
    %6931 = vmatprep.subr.bf16.mxu0 0
    %6932 = vmatpush1.bf16.msra.mxu0 %v6655
    %6933 = vmatprep.subr.bf16.mxu0 0
    %6934 = vmatpush1.bf16.msra.mxu0 %v6654
    %6935 = vmatprep.subr.bf16.mxu0 0
    %6936 = vmatpush1.bf16.msra.mxu0 %v6653
    %6937 = vmatprep.subr.bf16.mxu0 0
    %6938 = vmatpush1.bf16.msra.mxu0 %v6652
    %6939 = vmatprep.subr.bf16.mxu0 0
    %6940 = vmatpush1.bf16.msra.mxu0 %v6651
    %6941 = vmatprep.subr.bf16.mxu0 0
    %6942 = vmatpush1.bf16.msra.mxu0 %v6650
    %6943 = vmatprep.subr.bf16.mxu0 0
    %6944 = vmatpush1.bf16.msra.mxu0 %v6649
    %6945 = vmatprep.subr.bf16.mxu0 0
    %6946 = vmatpush2.bf16.msra.mxu0 %v6664
    %6947 = vmatprep.subr.bf16.mxu0 0
    %6948 = vmatpush2.bf16.msra.mxu0 %v6663
    %6949 = vmatprep.subr.bf16.mxu0 0
    %6950 = vmatpush2.bf16.msra.mxu0 %v6662
    %6951 = vmatprep.subr.bf16.mxu0 0
    %6952 = vmatpush2.bf16.msra.mxu0 %v6661
    %6953 = vmatprep.subr.bf16.mxu0 0
    %6954 = vmatpush2.bf16.msra.mxu0 %v6660
    %6955 = vmatprep.subr.bf16.mxu0 0
    %6956 = vmatpush2.bf16.msra.mxu0 %v6659
    %6957 = vmatprep.subr.bf16.mxu0 0
    %6958 = vmatpush2.bf16.msra.mxu0 %v6658
    %6959 = vmatprep.subr.bf16.mxu0 0
    %6960 = vmatpush2.bf16.msra.mxu0 %v6657
    %6961 = vmatprep.mubr.bf16.mxu0 %v5845
    %6962 = vmatmul.mubr.bf16.gmra.mxu0 %v5844
    %v6963 = vpop.f32.mrf.mxu0
    %v6964 = vadd.f32 %v6924, %v6963
    %v6965 = vpop.f32.mrf.mxu0
    %v6966 = vpop.f32.mrf.mxu0
    %v6967 = vpop.f32.mrf.mxu0
    %6968 = vdwg.mxu0
    %6969 = vmatprep.subr.bf16.mxu0 0
    %6970 = vmatpush1.bf16.msra.mxu0 %v6672
    %6971 = vmatprep.subr.bf16.mxu0 0
    %6972 = vmatpush1.bf16.msra.mxu0 %v6671
    %6973 = vmatprep.subr.bf16.mxu0 0
    %6974 = vmatpush1.bf16.msra.mxu0 %v6670
    %6975 = vmatprep.subr.bf16.mxu0 0
    %6976 = vmatpush1.bf16.msra.mxu0 %v6669
    %6977 = vmatprep.subr.bf16.mxu0 0
    %6978 = vmatpush1.bf16.msra.mxu0 %v6668
    %6979 = vmatprep.subr.bf16.mxu0 0
    %6980 = vmatpush1.bf16.msra.mxu0 %v6667
    %6981 = vmatprep.subr.bf16.mxu0 0
    %6982 = vmatpush1.bf16.msra.mxu0 %v6666
    %6983 = vmatprep.subr.bf16.mxu0 0
    %6984 = vmatpush1.bf16.msra.mxu0 %v6665
    %6985 = vmatprep.subr.bf16.mxu0 0
    %6986 = vmatpush2.bf16.msra.mxu0 %v6680
    %6987 = vmatprep.subr.bf16.mxu0 0
    %6988 = vmatpush2.bf16.msra.mxu0 %v6679
    %6989 = vmatprep.subr.bf16.mxu0 0
    %6990 = vmatpush2.bf16.msra.mxu0 %v6678
    %6991 = vmatprep.subr.bf16.mxu0 0
    %6992 = vmatpush2.bf16.msra.mxu0 %v6677
    %6993 = vmatprep.subr.bf16.mxu0 0
    %6994 = vmatpush2.bf16.msra.mxu0 %v6676
    %6995 = vmatprep.subr.bf16.mxu0 0
    %6996 = vmatpush2.bf16.msra.mxu0 %v6675
    %6997 = vmatprep.subr.bf16.mxu0 0
    %6998 = vmatpush2.bf16.msra.mxu0 %v6674
    %6999 = vmatprep.subr.bf16.mxu0 0
    %7000 = vmatpush2.bf16.msra.mxu0 %v6673
    %7001 = vmatprep.mubr.bf16.mxu0 %v5847
    %7002 = vmatmul.mubr.bf16.gmra.mxu0 %v5846
    %v7003 = vpop.f32.mrf.mxu0
    %v7004 = vadd.f32 %v6964, %v7003
    %v7005 = vpop.f32.mrf.mxu0
    %v7006 = vpop.f32.mrf.mxu0
    %v7007 = vpop.f32.mrf.mxu0
    %7008 = vdwg.mxu0
    %7009 = vmatprep.subr.bf16.mxu0 0
    %7010 = vmatpush1.bf16.msra.mxu0 %v6688
    %7011 = vmatprep.subr.bf16.mxu0 0
    %7012 = vmatpush1.bf16.msra.mxu0 %v6687
    %7013 = vmatprep.subr.bf16.mxu0 0
    %7014 = vmatpush1.bf16.msra.mxu0 %v6686
    %7015 = vmatprep.subr.bf16.mxu0 0
    %7016 = vmatpush1.bf16.msra.mxu0 %v6685
    %7017 = vmatprep.subr.bf16.mxu0 0
    %7018 = vmatpush1.bf16.msra.mxu0 %v6684
    %7019 = vmatprep.subr.bf16.mxu0 0
    %7020 = vmatpush1.bf16.msra.mxu0 %v6683
    %7021 = vmatprep.subr.bf16.mxu0 0
    %7022 = vmatpush1.bf16.msra.mxu0 %v6682
    %7023 = vmatprep.subr.bf16.mxu0 0
    %7024 = vmatpush1.bf16.msra.mxu0 %v6681
    %7025 = vmatprep.subr.bf16.mxu0 0
    %7026 = vmatpush2.bf16.msra.mxu0 %v6696
    %7027 = vmatprep.subr.bf16.mxu0 0
    %7028 = vmatpush2.bf16.msra.mxu0 %v6695
    %7029 = vmatprep.subr.bf16.mxu0 0
    %7030 = vmatpush2.bf16.msra.mxu0 %v6694
    %7031 = vmatprep.subr.bf16.mxu0 0
    %7032 = vmatpush2.bf16.msra.mxu0 %v6693
    %7033 = vmatprep.subr.bf16.mxu0 0
    %7034 = vmatpush2.bf16.msra.mxu0 %v6692
    %7035 = vmatprep.subr.bf16.mxu0 0
    %7036 = vmatpush2.bf16.msra.mxu0 %v6691
    %7037 = vmatprep.subr.bf16.mxu0 0
    %7038 = vmatpush2.bf16.msra.mxu0 %v6690
    %7039 = vmatprep.subr.bf16.mxu0 0
    %7040 = vmatpush2.bf16.msra.mxu0 %v6689
    %7041 = vmatprep.mubr.bf16.mxu0 %v5849
    %7042 = vmatmul.mubr.bf16.gmra.mxu0 %v5848
    %v7043 = vpop.f32.mrf.mxu0
    %v7044 = vadd.f32 %v7004, %v7043
    %v7045 = vpop.f32.mrf.mxu0
    %v7046 = vpop.f32.mrf.mxu0
    %v7047 = vpop.f32.mrf.mxu0
    %7048 = vdwg.mxu0
    %7049 = vmatprep.subr.bf16.mxu0 0
    %7050 = vmatpush1.bf16.msra.mxu0 %v6704
    %7051 = vmatprep.subr.bf16.mxu0 0
    %7052 = vmatpush1.bf16.msra.mxu0 %v6703
    %7053 = vmatprep.subr.bf16.mxu0 0
    %7054 = vmatpush1.bf16.msra.mxu0 %v6702
    %7055 = vmatprep.subr.bf16.mxu0 0
    %7056 = vmatpush1.bf16.msra.mxu0 %v6701
    %7057 = vmatprep.subr.bf16.mxu0 0
    %7058 = vmatpush1.bf16.msra.mxu0 %v6700
    %7059 = vmatprep.subr.bf16.mxu0 0
    %7060 = vmatpush1.bf16.msra.mxu0 %v6699
    %7061 = vmatprep.subr.bf16.mxu0 0
    %7062 = vmatpush1.bf16.msra.mxu0 %v6698
    %7063 = vmatprep.subr.bf16.mxu0 0
    %7064 = vmatpush1.bf16.msra.mxu0 %v6697
    %7065 = vmatprep.subr.bf16.mxu0 0
    %7066 = vmatpush2.bf16.msra.mxu0 %v6712
    %7067 = vmatprep.subr.bf16.mxu0 0
    %7068 = vmatpush2.bf16.msra.mxu0 %v6711
    %7069 = vmatprep.subr.bf16.mxu0 0
    %7070 = vmatpush2.bf16.msra.mxu0 %v6710
    %7071 = vmatprep.subr.bf16.mxu0 0
    %7072 = vmatpush2.bf16.msra.mxu0 %v6709
    %7073 = vmatprep.subr.bf16.mxu0 0
    %7074 = vmatpush2.bf16.msra.mxu0 %v6708
    %7075 = vmatprep.subr.bf16.mxu0 0
    %7076 = vmatpush2.bf16.msra.mxu0 %v6707
    %7077 = vmatprep.subr.bf16.mxu0 0
    %7078 = vmatpush2.bf16.msra.mxu0 %v6706
    %7079 = vmatprep.subr.bf16.mxu0 0
    %7080 = vmatpush2.bf16.msra.mxu0 %v6705
    %7081 = vmatprep.mubr.bf16.mxu0 %v5851
    %7082 = vmatmul.mubr.bf16.gmra.mxu0 %v5850
    %v7083 = vpop.f32.mrf.mxu0
    %v7084 = vadd.f32 %v7044, %v7083
    %v7085 = vpop.f32.mrf.mxu0
    %v7086 = vpop.f32.mrf.mxu0
    %v7087 = vpop.f32.mrf.mxu0
    %7088 = vdwg.mxu0
    %7089 = vmatprep.subr.bf16.mxu0 0
    %7090 = vmatpush1.bf16.msra.mxu0 %v6720
    %7091 = vmatprep.subr.bf16.mxu0 0
    %7092 = vmatpush1.bf16.msra.mxu0 %v6719
    %7093 = vmatprep.subr.bf16.mxu0 0
    %7094 = vmatpush1.bf16.msra.mxu0 %v6718
    %7095 = vmatprep.subr.bf16.mxu0 0
    %7096 = vmatpush1.bf16.msra.mxu0 %v6717
    %7097 = vmatprep.subr.bf16.mxu0 0
    %7098 = vmatpush1.bf16.msra.mxu0 %v6716
    %7099 = vmatprep.subr.bf16.mxu0 0
    %7100 = vmatpush1.bf16.msra.mxu0 %v6715
    %7101 = vmatprep.subr.bf16.mxu0 0
    %7102 = vmatpush1.bf16.msra.mxu0 %v6714
    %7103 = vmatprep.subr.bf16.mxu0 0
    %7104 = vmatpush1.bf16.msra.mxu0 %v6713
    %7105 = vmatprep.subr.bf16.mxu0 0
    %7106 = vmatpush2.bf16.msra.mxu0 %v6728
    %7107 = vmatprep.subr.bf16.mxu0 0
    %7108 = vmatpush2.bf16.msra.mxu0 %v6727
    %7109 = vmatprep.subr.bf16.mxu0 0
    %7110 = vmatpush2.bf16.msra.mxu0 %v6726
    %7111 = vmatprep.subr.bf16.mxu0 0
    %7112 = vmatpush2.bf16.msra.mxu0 %v6725
    %7113 = vmatprep.subr.bf16.mxu0 0
    %7114 = vmatpush2.bf16.msra.mxu0 %v6724
    %7115 = vmatprep.subr.bf16.mxu0 0
    %7116 = vmatpush2.bf16.msra.mxu0 %v6723
    %7117 = vmatprep.subr.bf16.mxu0 0
    %7118 = vmatpush2.bf16.msra.mxu0 %v6722
    %7119 = vmatprep.subr.bf16.mxu0 0
    %7120 = vmatpush2.bf16.msra.mxu0 %v6721
    %7121 = vmatprep.mubr.bf16.mxu0 %v5853
    %7122 = vmatmul.mubr.bf16.gmra.mxu0 %v5852
    %v7123 = vpop.f32.mrf.mxu0
    %v7124 = vadd.f32 %v7084, %v7123
    %v7125 = vpop.f32.mrf.mxu0
    %v7126 = vpop.f32.mrf.mxu0
    %v7127 = vpop.f32.mrf.mxu0
    %7128 = vdwg.mxu0
    %7129 = vmatprep.subr.bf16.mxu0 0
    %7130 = vmatpush1.bf16.msra.mxu0 %v6736
    %7131 = vmatprep.subr.bf16.mxu0 0
    %7132 = vmatpush1.bf16.msra.mxu0 %v6735
    %7133 = vmatprep.subr.bf16.mxu0 0
    %7134 = vmatpush1.bf16.msra.mxu0 %v6734
    %7135 = vmatprep.subr.bf16.mxu0 0
    %7136 = vmatpush1.bf16.msra.mxu0 %v6733
    %7137 = vmatprep.subr.bf16.mxu0 0
    %7138 = vmatpush1.bf16.msra.mxu0 %v6732
    %7139 = vmatprep.subr.bf16.mxu0 0
    %7140 = vmatpush1.bf16.msra.mxu0 %v6731
    %7141 = vmatprep.subr.bf16.mxu0 0
    %7142 = vmatpush1.bf16.msra.mxu0 %v6730
    %7143 = vmatprep.subr.bf16.mxu0 0
    %7144 = vmatpush1.bf16.msra.mxu0 %v6729
    %7145 = vmatprep.subr.bf16.mxu0 0
    %7146 = vmatpush2.bf16.msra.mxu0 %v6744
    %7147 = vmatprep.subr.bf16.mxu0 0
    %7148 = vmatpush2.bf16.msra.mxu0 %v6743
    %7149 = vmatprep.subr.bf16.mxu0 0
    %7150 = vmatpush2.bf16.msra.mxu0 %v6742
    %7151 = vmatprep.subr.bf16.mxu0 0
    %7152 = vmatpush2.bf16.msra.mxu0 %v6741
    %7153 = vmatprep.subr.bf16.mxu0 0
    %7154 = vmatpush2.bf16.msra.mxu0 %v6740
    %7155 = vmatprep.subr.bf16.mxu0 0
    %7156 = vmatpush2.bf16.msra.mxu0 %v6739
    %7157 = vmatprep.subr.bf16.mxu0 0
    %7158 = vmatpush2.bf16.msra.mxu0 %v6738
    %7159 = vmatprep.subr.bf16.mxu0 0
    %7160 = vmatpush2.bf16.msra.mxu0 %v6737
    %7161 = vmatprep.mubr.bf16.mxu0 %v5855
    %7162 = vmatmul.mubr.bf16.gmra.mxu0 %v5854
    %v7163 = vpop.f32.mrf.mxu0
    %v7164 = vadd.f32 %v7124, %v7163
    %v7165 = vpop.f32.mrf.mxu0
    %v7166 = vpop.f32.mrf.mxu0
    %v7167 = vpop.f32.mrf.mxu0
    %7168 = vdwg.mxu0
    %7169 = vmatprep.subr.bf16.mxu0 0
    %7170 = vmatpush1.bf16.msra.mxu0 %v6752
    %7171 = vmatprep.subr.bf16.mxu0 0
    %7172 = vmatpush1.bf16.msra.mxu0 %v6751
    %7173 = vmatprep.subr.bf16.mxu0 0
    %7174 = vmatpush1.bf16.msra.mxu0 %v6750
    %7175 = vmatprep.subr.bf16.mxu0 0
    %7176 = vmatpush1.bf16.msra.mxu0 %v6749
    %7177 = vmatprep.subr.bf16.mxu0 0
    %7178 = vmatpush1.bf16.msra.mxu0 %v6748
    %7179 = vmatprep.subr.bf16.mxu0 0
    %7180 = vmatpush1.bf16.msra.mxu0 %v6747
    %7181 = vmatprep.subr.bf16.mxu0 0
    %7182 = vmatpush1.bf16.msra.mxu0 %v6746
    %7183 = vmatprep.subr.bf16.mxu0 0
    %7184 = vmatpush1.bf16.msra.mxu0 %v6745
    %7185 = vmatprep.subr.bf16.mxu0 0
    %7186 = vmatpush2.bf16.msra.mxu0 %v6760
    %7187 = vmatprep.subr.bf16.mxu0 0
    %7188 = vmatpush2.bf16.msra.mxu0 %v6759
    %7189 = vmatprep.subr.bf16.mxu0 0
    %7190 = vmatpush2.bf16.msra.mxu0 %v6758
    %7191 = vmatprep.subr.bf16.mxu0 0
    %7192 = vmatpush2.bf16.msra.mxu0 %v6757
    %7193 = vmatprep.subr.bf16.mxu0 0
    %7194 = vmatpush2.bf16.msra.mxu0 %v6756
    %7195 = vmatprep.subr.bf16.mxu0 0
    %7196 = vmatpush2.bf16.msra.mxu0 %v6755
    %7197 = vmatprep.subr.bf16.mxu0 0
    %7198 = vmatpush2.bf16.msra.mxu0 %v6754
    %7199 = vmatprep.subr.bf16.mxu0 0
    %7200 = vmatpush2.bf16.msra.mxu0 %v6753
    %7201 = vmatprep.mubr.bf16.mxu0 %v5857
    %7202 = vmatmul.mubr.bf16.gmra.mxu0 %v5856
    %v7203 = vpop.f32.mrf.mxu0
    %v7204 = vadd.f32 %v7164, %v7203
    %v7205 = vpop.f32.mrf.mxu0
    %v7206 = vpop.f32.mrf.mxu0
    %v7207 = vpop.f32.mrf.mxu0
    %7208 = vdwg.mxu0
    %v7209 = vld [vmem:[%s1] sm:$0xff]
    %v7210 = vld [vmem:[%s1 + $0x8] sm:$0xff]
    %v7211 = vld [vmem:[%s1 + $0x10] sm:$0xff]
    %v7212 = vld [vmem:[%s1 + $0x18] sm:$0xff]
    %v7213 = vld [vmem:[%s1 + $0x20] sm:$0xff]
    %v7214 = vld [vmem:[%s1 + $0x28] sm:$0xff]
    %v7215 = vld [vmem:[%s1 + $0x30] sm:$0xff]
    %v7216 = vld [vmem:[%s1 + $0x38] sm:$0xff]
    %v7217 = vlaneseq
    %v7218 = vand.u32 %v7217, 127
    %7219 = vset.pattern.permute.xlu0 0
    %7220 = vperm.xlu0 %7219, %v7209
    %v7221 = vpop.permute.xlu0 %7220
    %7222 = vset.pattern.permute.xlu0 0
    %7223 = vperm.xlu0 %7222, %v7210
    %v7224 = vpop.permute.xlu0 %7223
    %7225 = vset.pattern.permute.xlu0 0
    %7226 = vperm.xlu0 %7225, %v7211
    %v7227 = vpop.permute.xlu0 %7226
    %7228 = vset.pattern.permute.xlu0 0
    %7229 = vperm.xlu0 %7228, %v7212
    %v7230 = vpop.permute.xlu0 %7229
    %7231 = vset.pattern.permute.xlu0 0
    %7232 = vperm.xlu0 %7231, %v7213
    %v7233 = vpop.permute.xlu0 %7232
    %7234 = vset.pattern.permute.xlu0 0
    %7235 = vperm.xlu0 %7234, %v7214
    %v7236 = vpop.permute.xlu0 %7235
    %7237 = vset.pattern.permute.xlu0 0
    %7238 = vperm.xlu0 %7237, %v7215
    %v7239 = vpop.permute.xlu0 %7238
    %7240 = vset.pattern.permute.xlu0 0
    %7241 = vperm.xlu0 %7240, %v7216
    %v7242 = vpop.permute.xlu0 %7241
    %vm7243 = vcmp.eq.s32.totalorder %v7221, %v7218
    %vm7244 = vcmp.eq.s32.totalorder %v7224, %v7218
    %vm7245 = vcmp.eq.s32.totalorder %v7227, %v7218
    %vm7246 = vcmp.eq.s32.totalorder %v7230, %v7218
    %vm7247 = vcmp.eq.s32.totalorder %v7233, %v7218
    %vm7248 = vcmp.eq.s32.totalorder %v7236, %v7218
    %vm7249 = vcmp.eq.s32.totalorder %v7239, %v7218
    %vm7250 = vcmp.eq.s32.totalorder %v7242, %v7218
    %v7251 = vsel %vm7243, 1, 0
    %v7252 = vsel %vm7244, 1, 0
    %v7253 = vsel %vm7245, 1, 0
    %v7254 = vsel %vm7246, 1, 0
    %v7255 = vsel %vm7247, 1, 0
    %v7256 = vsel %vm7248, 1, 0
    %v7257 = vsel %vm7249, 1, 0
    %v7258 = vsel %vm7250, 1, 0
    %v7259 = vcvt.s32.f32 %v7251
    %v7260 = vcvt.s32.f32 %v7252
    %v7261 = vcvt.s32.f32 %v7253
    %v7262 = vcvt.s32.f32 %v7254
    %v7263 = vcvt.s32.f32 %v7255
    %v7264 = vcvt.s32.f32 %v7256
    %v7265 = vcvt.s32.f32 %v7257
    %v7266 = vcvt.s32.f32 %v7258
    %v7267 = vpack.c.bf16 %v7260, %v7259
    %v7268 = vpack.c.bf16 %v7262, %v7261
    %v7269 = vpack.c.bf16 %v7264, %v7263
    %v7270 = vpack.c.bf16 %v7266, %v7265
    %v7271 = vld [vmem:[%s6] sm:$0xf]
    %v7272 = vld [vmem:[%s6 + $0x4] sm:$0xf]
    %v7273 = vld [vmem:[%s6 + $0x8] sm:$0xf]
    %v7274 = vld [vmem:[%s6 + $0xc] sm:$0xf]
    %v7275 = vld [vmem:[%s6 + $0x10] sm:$0xf]
    %v7276 = vld [vmem:[%s6 + $0x14] sm:$0xf]
    %v7277 = vld [vmem:[%s6 + $0x18] sm:$0xf]
    %v7278 = vld [vmem:[%s6 + $0x1c] sm:$0xf]
    %v7287 = vunpack.c.l.b16 %v7271
    %v7288 = vunpack.c.l.b16 %v7272
    %v7289 = vunpack.c.l.b16 %v7273
    %v7290 = vunpack.c.l.b16 %v7274
    %v7291 = vunpack.c.l.b16 %v7275
    %v7292 = vunpack.c.l.b16 %v7276
    %v7293 = vunpack.c.l.b16 %v7277
    %v7294 = vunpack.c.l.b16 %v7278
    %v7295 = vpack.c.b16 %v7288, %v7287
    %v7296 = vpack.c.b16 %v7290, %v7289
    %v7297 = vpack.c.b16 %v7292, %v7291
    %v7298 = vpack.c.b16 %v7294, %v7293
    %vm7303 = vcmask 523264
    %v7305 = vsel %vm7303, %v7267, 0
    %v7308 = vsel %vm7303, %v7268, 0
    %v7311 = vsel %vm7303, %v7269, 0
    %v7314 = vsel %vm7303, %v7270, 0
    %7316 = vmatprep.subr.bf16.mxu0 0
    %7317 = vmatpush1.bf16.msra.mxu0 0
    %7318 = vmatprep.subr.bf16.mxu0 0
    %7319 = vmatpush1.bf16.msra.mxu0 0
    %7320 = vmatprep.subr.bf16.mxu0 0
    %7321 = vmatpush1.bf16.msra.mxu0 0
    %7322 = vmatprep.subr.bf16.mxu0 0
    %7323 = vmatpush1.bf16.msra.mxu0 0
    %7324 = vmatprep.subr.bf16.mxu0 0
    %7325 = vmatpush1.bf16.msra.mxu0 %v7298
    %7326 = vmatprep.subr.bf16.mxu0 0
    %7327 = vmatpush1.bf16.msra.mxu0 %v7297
    %7328 = vmatprep.subr.bf16.mxu0 0
    %7329 = vmatpush1.bf16.msra.mxu0 %v7296
    %7330 = vmatprep.subr.bf16.mxu0 0
    %7331 = vmatpush1.bf16.msra.mxu0 %v7295
    %7332 = vmatprep.subr.bf16.mxu0 0
    %7333 = vmatpush2.bf16.msra.mxu0 0
    %7334 = vmatprep.subr.bf16.mxu0 0
    %7335 = vmatpush2.bf16.msra.mxu0 0
    %7336 = vmatprep.subr.bf16.mxu0 0
    %7337 = vmatpush2.bf16.msra.mxu0 0
    %7338 = vmatprep.subr.bf16.mxu0 0
    %7339 = vmatpush2.bf16.msra.mxu0 0
    %7340 = vmatprep.subr.bf16.mxu0 0
    %7341 = vmatpush2.bf16.msra.mxu0 0
    %7342 = vmatprep.subr.bf16.mxu0 0
    %7343 = vmatpush2.bf16.msra.mxu0 0
    %7344 = vmatprep.subr.bf16.mxu0 0
    %7345 = vmatpush2.bf16.msra.mxu0 0
    %7346 = vmatprep.subr.bf16.mxu0 0
    %7347 = vmatpush2.bf16.msra.mxu0 0
    %7348 = vmatprep.mubr.bf16.mxu0 0
    %7349 = vmatmul.mubr.bf16.gmra.mxu0 %v7305
    %v7350 = vpop.f32.mrf.mxu0
    %v7351 = vadd.f32 0.0, %v7350
    %v7352 = vpop.f32.mrf.mxu0
    %v7353 = vpop.f32.mrf.mxu0
    %v7354 = vadd.f32 0.0, %v7353
    %v7355 = vpop.f32.mrf.mxu0
    %7356 = vmatprep.mubr.bf16.mxu0 0
    %7357 = vmatmul.mubr.bf16.gmra.mxu0 %v7308
    %v7358 = vpop.f32.mrf.mxu0
    %v7359 = vadd.f32 0.0, %v7358
    %v7360 = vpop.f32.mrf.mxu0
    %v7361 = vpop.f32.mrf.mxu0
    %v7362 = vadd.f32 0.0, %v7361
    %v7363 = vpop.f32.mrf.mxu0
    %7364 = vmatprep.mubr.bf16.mxu0 0
    %7365 = vmatmul.mubr.bf16.gmra.mxu0 %v7311
    %v7366 = vpop.f32.mrf.mxu0
    %v7367 = vadd.f32 0.0, %v7366
    %v7368 = vpop.f32.mrf.mxu0
    %v7369 = vpop.f32.mrf.mxu0
    %v7370 = vadd.f32 0.0, %v7369
    %v7371 = vpop.f32.mrf.mxu0
    %7372 = vmatprep.mubr.bf16.mxu0 0
    %7373 = vmatmul.mubr.bf16.gmra.mxu0 %v7314
    %v7374 = vpop.f32.mrf.mxu0
    %v7375 = vadd.f32 0.0, %v7374
    %v7376 = vpop.f32.mrf.mxu0
    %v7377 = vpop.f32.mrf.mxu0
    %v7378 = vadd.f32 0.0, %v7377
    %v7379 = vpop.f32.mrf.mxu0
    %7380 = vdwg.mxu0
    %v7381 = vpack.c.bf16 %v7351, %v7204
    %v7382 = vpack.c.bf16 %v7359, %v7354
    %v7383 = vpack.c.bf16 %v7367, %v7362
    %v7384 = vpack.c.bf16 %v7375, %v7370
    %v7385 = vpack.c.bf16 %v7378, %v7378
    %v7386 = vld [vmem:[#allocation7] sm:$0xf]
    %v7387 = vld [vmem:[#allocation7 + $0x4] sm:$0xf]
    %v7388 = vld [vmem:[#allocation7 + $0x8] sm:$0xf]
    %v7389 = vld [vmem:[#allocation7 + $0xc] sm:$0xf]
    %v7390 = vld [vmem:[#allocation9] sm:$0x1]
    %v7392 = vlaneseq
    %v7393 = vshrl.u32 %v7392, 7
    %v7394 = vsub.s32 0, %v7393
    %v7395 = vrot.slane %v7390, %v7394
    %v7401 = vunpack.c.l.b16 %v7386
    %v7402 = vunpack.c.l.b16 %v7387
    %v7403 = vunpack.c.l.b16 %v7388
    %v7404 = vunpack.c.l.b16 %v7389
    %v7405 = vpack.c.b16 %v7402, %v7401
    %v7406 = vpack.c.b16 %v7404, %v7403
    %vm7409 = vcmask 261120
    %v7411 = vsel %vm7409, %v7381, 0
    %v7414 = vsel %vm7409, %v7382, 0
    %v7417 = vsel %vm7409, %v7383, 0
    %v7420 = vsel %vm7409, %v7384, 0
    %v7423 = vsel %vm7409, %v7385, 0
    %7425 = vmatprep.subr.bf16.mxu0 0
    %7426 = vmatpush1.bf16.msra.mxu0 0
    %7427 = vmatprep.subr.bf16.mxu0 0
    %7428 = vmatpush1.bf16.msra.mxu0 0
    %7429 = vmatprep.subr.bf16.mxu0 0
    %7430 = vmatpush1.bf16.msra.mxu0 0
    %7431 = vmatprep.subr.bf16.mxu0 0
    %7432 = vmatpush1.bf16.msra.mxu0 0
    %7433 = vmatprep.subr.bf16.mxu0 0
    %7434 = vmatpush1.bf16.msra.mxu0 0
    %7435 = vmatprep.subr.bf16.mxu0 0
    %7436 = vmatpush1.bf16.msra.mxu0 0
    %7437 = vmatprep.subr.bf16.mxu0 0
    %7438 = vmatpush1.bf16.msra.mxu0 %v7406
    %7439 = vmatprep.subr.bf16.mxu0 0
    %7440 = vmatpush1.bf16.msra.mxu0 %v7405
    %7441 = vmatprep.subr.bf16.mxu0 0
    %7442 = vmatpush2.bf16.msra.mxu0 0
    %7443 = vmatprep.subr.bf16.mxu0 0
    %7444 = vmatpush2.bf16.msra.mxu0 0
    %7445 = vmatprep.subr.bf16.mxu0 0
    %7446 = vmatpush2.bf16.msra.mxu0 0
    %7447 = vmatprep.subr.bf16.mxu0 0
    %7448 = vmatpush2.bf16.msra.mxu0 0
    %7449 = vmatprep.subr.bf16.mxu0 0
    %7450 = vmatpush2.bf16.msra.mxu0 0
    %7451 = vmatprep.subr.bf16.mxu0 0
    %7452 = vmatpush2.bf16.msra.mxu0 0
    %7453 = vmatprep.subr.bf16.mxu0 0
    %7454 = vmatpush2.bf16.msra.mxu0 0
    %7455 = vmatprep.subr.bf16.mxu0 0
    %7456 = vmatpush2.bf16.msra.mxu0 0
    %7457 = vmatprep.mubr.bf16.mxu0 0
    %7458 = vmatmul.mubr.bf16.gmra.mxu0 %v7411
    %v7459 = vpop.f32.mrf.mxu0
    %v7460 = vadd.f32 %v7395, %v7459
    %v7461 = vpop.f32.mrf.mxu0
    %v7462 = vpop.f32.mrf.mxu0
    %v7463 = vadd.f32 %v7395, %v7462
    %v7464 = vpop.f32.mrf.mxu0
    %7465 = vmatprep.mubr.bf16.mxu0 0
    %7466 = vmatmul.mubr.bf16.gmra.mxu0 %v7414
    %v7467 = vpop.f32.mrf.mxu0
    %v7468 = vadd.f32 %v7395, %v7467
    %v7469 = vpop.f32.mrf.mxu0
    %v7470 = vpop.f32.mrf.mxu0
    %v7471 = vadd.f32 %v7395, %v7470
    %v7472 = vpop.f32.mrf.mxu0
    %7473 = vmatprep.mubr.bf16.mxu0 0
    %7474 = vmatmul.mubr.bf16.gmra.mxu0 %v7417
    %v7475 = vpop.f32.mrf.mxu0
    %v7476 = vadd.f32 %v7395, %v7475
    %v7477 = vpop.f32.mrf.mxu0
    %v7478 = vpop.f32.mrf.mxu0
    %v7479 = vadd.f32 %v7395, %v7478
    %v7480 = vpop.f32.mrf.mxu0
    %7481 = vmatprep.mubr.bf16.mxu0 0
    %7482 = vmatmul.mubr.bf16.gmra.mxu0 %v7420
    %v7483 = vpop.f32.mrf.mxu0
    %v7484 = vadd.f32 %v7395, %v7483
    %v7485 = vpop.f32.mrf.mxu0
    %v7486 = vpop.f32.mrf.mxu0
    %v7487 = vadd.f32 %v7395, %v7486
    %v7488 = vpop.f32.mrf.mxu0
    %7489 = vmatprep.mubr.bf16.mxu0 0
    %7490 = vmatmul.mubr.bf16.gmra.mxu0 %v7423
    %v7491 = vpop.f32.mrf.mxu0
    %v7492 = vadd.f32 %v7395, %v7491
    %v7493 = vpop.f32.mrf.mxu0
    %v7494 = vpop.f32.mrf.mxu0
    %v7495 = vpop.f32.mrf.mxu0
    %7496 = vdwg.mxu0
    %v7497 = vpack.c.bf16 %v7463, %v7460
    %v7498 = vpack.c.bf16 %v7471, %v7468
    %v7499 = vpack.c.bf16 %v7479, %v7476
    %v7500 = vpack.c.bf16 %v7487, %v7484
    %v7501 = vpack.c.bf16 %v7492, %v7492
    %v7502 = vld [vmem:[#allocation10] sm:$0xf]
    %v7503 = vld [vmem:[#allocation10 + $0x4] sm:$0xf]
    %v7504 = vld [vmem:[#allocation10 + $0x8] sm:$0xf]
    %v7505 = vld [vmem:[#allocation10 + $0xc] sm:$0xf]
    %v7506 = vld [vmem:[#allocation12] sm:$0x1]
    %v7508 = vlaneseq
    %v7509 = vshrl.u32 %v7508, 7
    %v7510 = vsub.s32 0, %v7509
    %v7511 = vrot.slane %v7506, %v7510
    %v7517 = vunpack.c.l.b16 %v7502
    %v7518 = vunpack.c.l.b16 %v7503
    %v7519 = vunpack.c.l.b16 %v7504
    %v7520 = vunpack.c.l.b16 %v7505
    %v7521 = vpack.c.b16 %v7518, %v7517
    %v7522 = vpack.c.b16 %v7520, %v7519
    %v7526 = vsel %vm7409, %v7497, 0
    %v7529 = vsel %vm7409, %v7498, 0
    %v7532 = vsel %vm7409, %v7499, 0
    %v7535 = vsel %vm7409, %v7500, 0
    %v7538 = vsel %vm7409, %v7501, 0
    %7540 = vmatprep.subr.bf16.mxu0 0
    %7541 = vmatpush1.bf16.msra.mxu0 0
    %7542 = vmatprep.subr.bf16.mxu0 0
    %7543 = vmatpush1.bf16.msra.mxu0 0
    %7544 = vmatprep.subr.bf16.mxu0 0
    %7545 = vmatpush1.bf16.msra.mxu0 0
    %7546 = vmatprep.subr.bf16.mxu0 0
    %7547 = vmatpush1.bf16.msra.mxu0 0
    %7548 = vmatprep.subr.bf16.mxu0 0
    %7549 = vmatpush1.bf16.msra.mxu0 0
    %7550 = vmatprep.subr.bf16.mxu0 0
    %7551 = vmatpush1.bf16.msra.mxu0 0
    %7552 = vmatprep.subr.bf16.mxu0 0
    %7553 = vmatpush1.bf16.msra.mxu0 %v7522
    %7554 = vmatprep.subr.bf16.mxu0 0
    %7555 = vmatpush1.bf16.msra.mxu0 %v7521
    %7556 = vmatprep.subr.bf16.mxu0 0
    %7557 = vmatpush2.bf16.msra.mxu0 0
    %7558 = vmatprep.subr.bf16.mxu0 0
    %7559 = vmatpush2.bf16.msra.mxu0 0
    %7560 = vmatprep.subr.bf16.mxu0 0
    %7561 = vmatpush2.bf16.msra.mxu0 0
    %7562 = vmatprep.subr.bf16.mxu0 0
    %7563 = vmatpush2.bf16.msra.mxu0 0
    %7564 = vmatprep.subr.bf16.mxu0 0
    %7565 = vmatpush2.bf16.msra.mxu0 0
    %7566 = vmatprep.subr.bf16.mxu0 0
    %7567 = vmatpush2.bf16.msra.mxu0 0
    %7568 = vmatprep.subr.bf16.mxu0 0
    %7569 = vmatpush2.bf16.msra.mxu0 0
    %7570 = vmatprep.subr.bf16.mxu0 0
    %7571 = vmatpush2.bf16.msra.mxu0 0
    %7572 = vmatprep.mubr.bf16.mxu0 0
    %7573 = vmatmul.mubr.bf16.gmra.mxu0 %v7526
    %v7574 = vpop.f32.mrf.mxu0
    %v7575 = vadd.f32 %v7511, %v7574
    %v7576 = vpop.f32.mrf.mxu0
    %v7577 = vpop.f32.mrf.mxu0
    %v7578 = vadd.f32 %v7511, %v7577
    %v7579 = vpop.f32.mrf.mxu0
    %7580 = vmatprep.mubr.bf16.mxu0 0
    %7581 = vmatmul.mubr.bf16.gmra.mxu0 %v7529
    %v7582 = vpop.f32.mrf.mxu0
    %v7583 = vadd.f32 %v7511, %v7582
    %v7584 = vpop.f32.mrf.mxu0
    %v7585 = vpop.f32.mrf.mxu0
    %v7586 = vadd.f32 %v7511, %v7585
    %v7587 = vpop.f32.mrf.mxu0
    %7588 = vmatprep.mubr.bf16.mxu0 0
    %7589 = vmatmul.mubr.bf16.gmra.mxu0 %v7532
    %v7590 = vpop.f32.mrf.mxu0
    %v7591 = vadd.f32 %v7511, %v7590
    %v7592 = vpop.f32.mrf.mxu0
    %v7593 = vpop.f32.mrf.mxu0
    %v7594 = vadd.f32 %v7511, %v7593
    %v7595 = vpop.f32.mrf.mxu0
    %7596 = vmatprep.mubr.bf16.mxu0 0
    %7597 = vmatmul.mubr.bf16.gmra.mxu0 %v7535
    %v7598 = vpop.f32.mrf.mxu0
    %v7599 = vadd.f32 %v7511, %v7598
    %v7600 = vpop.f32.mrf.mxu0
    %v7601 = vpop.f32.mrf.mxu0
    %v7602 = vadd.f32 %v7511, %v7601
    %v7603 = vpop.f32.mrf.mxu0
    %7604 = vmatprep.mubr.bf16.mxu0 0
    %7605 = vmatmul.mubr.bf16.gmra.mxu0 %v7538
    %v7606 = vpop.f32.mrf.mxu0
    %v7607 = vadd.f32 %v7511, %v7606
    %v7608 = vpop.f32.mrf.mxu0
    %v7609 = vpop.f32.mrf.mxu0
    %v7610 = vpop.f32.mrf.mxu0
    %7611 = vdwg.mxu0
    %7612 = vst [vmem:[%s11] sm:$0xff] %v7575
    %7613 = vst [vmem:[%s11 + $0x8] sm:$0xff] %v7578
    %7614 = vst [vmem:[%s11 + $0x10] sm:$0xff] %v7583
    %7615 = vst [vmem:[%s11 + $0x18] sm:$0xff] %v7586
    %7616 = vst [vmem:[%s11 + $0x20] sm:$0xff] %v7591
    %7617 = vst [vmem:[%s11 + $0x28] sm:$0xff] %v7594
    %7618 = vst [vmem:[%s11 + $0x30] sm:$0xff] %v7599
    %7619 = vst [vmem:[%s11 + $0x38] sm:$0xff] %v7602
    %7620 = vst [vmem:[%s11 + $0x40] sm:$0xff] %v7607
    // Predicated region
    $region74: #{image_captioning_forward.1} parent=1 // pred_check
      _
    $region75: #{image_captioning_forward.1} parent=1 // pred_check_branch
      %7622 = sbr.rel (0) target = $region77
    $region76: #{image_captioning_forward.1} parent=1 // pred_region
      _
    $region77: #{image_captioning_forward.1} parent=1 // pred_fallthru
      _
    // Predicated region
    $region78: #{image_captioning_forward.1} parent=1 // pred_check
      _
    $region79: #{image_captioning_forward.1} parent=1 // pred_check_branch
      %7624 = sbr.rel (0) target = $region81
    $region80: #{image_captioning_forward.1} parent=1 // pred_region
      _
    $region81: #{image_captioning_forward.1} parent=1 // pred_fallthru
      _
    %7625 = vsyncpa [#allocation3], 1
    %7626 = vsyncpa [#allocation5], 1
    %7627 = vsyncpa [#allocation8], 1
    %7628 = vsyncpa [#allocation11], 1

</llo_original>
